<compile_context>
chip_gen: v7x
topology: tpu7x:2x2x1
jax: 0.10.0
libtpu: 0.0.40
codegen_flags: <defaults>
</compile_context>

<pallas_src>
import jax
import jax.numpy as jnp
from jax import lax
from jax.experimental import pallas as pl
from jax.experimental.pallas import tpu as pltpu

NEG_SLOPE = 0.2
BN_EPS = 1e-5
INT32_MIN = -(2 ** 31)


def _leaky_relu(h):
    # One vmax instead of compare + select (negative_slope in (0,1)).
    return jnp.maximum(h, NEG_SLOPE * h)


def _make_kernel(k: int, n: int):
    """Build the per-batch-element DGCNN kernel (k = knn neighbors, n = points)."""
    idx_bits = max((n - 1).bit_length(), 1)
    clear_low = ~((1 << idx_bits) - 1)          # python int, e.g. -16 for n=16
    unroll = k if k <= 8 else 2                 # short fixed trip-count -> full unroll

    def edge_conv(fb, wa, wd, bias):
        # fb: (N, C) bf16.  wa = W[:C]*scale, wd = (W[C:] - W[:C])*scale  (bf16).
        # Fused: knn in feature space + 1x1 edge conv + folded eval BN +
        # LeakyReLU + max over the k neighbors.  Returns (N, Cout) bf16.
        f32b = fb.astype(jnp.float32)

        # Negative squared pairwise distances (f32 accumulation on the MXU).
        xx = jnp.sum(f32b * f32b, axis=1, keepdims=True)                       # (N,1)
        inner = lax.dot_general(fb, fb, (((1,), (1,)), ((), ())),
                                preferred_element_type=jnp.float32)            # (N,N)
        pd = 2.0 * inner - xx - xx.T

        # Loop-invariant projections (BN scale already folded into wa/wd).
        ga = jnp.dot(fb, wa, preferred_element_type=jnp.float32)               # (N,Cout)
        const = jnp.dot(fb, wd, preferred_element_type=jnp.float32) + bias     # (N,Cout)
        ga_bf = ga.astype(jnp.bfloat16)

        # Pack (distance, reverse column) into one sortable int32 key so a single
        # max reduction yields both the max value and the first-occurrence index.
        # (Distances agreeing in all but the low idx_bits mantissa bits tie-break
        #  by column index — negligible deviation from torch.topk ordering.)
        pdi = pltpu.bitcast(pd, jnp.int32)
        key = jnp.where(pdi < 0, pdi ^ jnp.int32(0x7FFFFFFF), pdi)             # order-preserving
        col = lax.broadcasted_iota(jnp.int32, (n, n), 1)
        key = (key & jnp.int32(clear_low)) | (jnp.int32(n - 1) - col)

        def body(_, carry):
            key_c, run = carry
            mk = jnp.max(key_c, axis=-1, keepdims=True)                        # one XLU reduce
            sel = key_c == mk                                                  # exactly 1/row
            gathered = jnp.dot(sel.astype(jnp.bfloat16), ga_bf,
                               preferred_element_type=jnp.float32)             # (N,Cout)
            run = jnp.maximum(run, gathered)
            key_c = jnp.where(sel, jnp.int32(INT32_MIN), key_c)                # drop picked
            return key_c, run

        run0 = jnp.full(ga.shape, -jnp.inf, jnp.float32)
        _, run = lax.fori_loop(0, k, body, (key, run0), unroll=unroll)
        return _leaky_relu(run + const).astype(jnp.bfloat16)

    def kernel(x_ref,
               wa1, wd1, b1, wa2, wd2, b2, wa3, wd3, b3, wa4, wd4, b4,
               w5a, w5b, w5c, w5d, b5, out_ref):
        x0 = x_ref[0].astype(jnp.bfloat16)                                     # (N, 3)
        x1 = edge_conv(x0, wa1[...], wd1[...], b1[...])                        # (N, 64)
        x2 = edge_conv(x1, wa2[...], wd2[...], b2[...])                        # (N, 64)
        x3 = edge_conv(x2, wa3[...], wd3[...], b3[...])                        # (N, 128)
        x4 = edge_conv(x3, wa4[...], wd4[...], b4[...])                        # (N, 256)
        # conv5 over concat(x1..x4) == sum of four matmuls (no (N,512) concat copy).
        h5 = (jnp.dot(x1, w5a[...], preferred_element_type=jnp.float32)
              + jnp.dot(x2, w5b[...], preferred_element_type=jnp.float32)
              + jnp.dot(x3, w5c[...], preferred_element_type=jnp.float32)
              + jnp.dot(x4, w5d[...], preferred_element_type=jnp.float32))
        h5 = _leaky_relu(h5 + b5[...])                                         # (N, emb)
        mxp = jnp.max(h5, axis=0, keepdims=True)                               # (1, emb)
        avp = jnp.mean(h5, axis=0, keepdims=True)                              # (1, emb)
        out_ref[0] = jnp.concatenate([mxp, avp], axis=1)                       # (1, 2*emb)

    return kernel


def init_params(key, emb_dims: int):
    """Deterministic synthetic conv weights + eval-mode BN statistics."""
    layer_dims = [(6, 64), (128, 64), (128, 128), (256, 256), (512, emb_dims)]
    params = []
    for i, (cin, cout) in enumerate(layer_dims):
        kw, kg, kb, km, kv = jax.random.split(jax.random.fold_in(key, i), 5)
        w = jax.random.normal(kw, (cin, cout), jnp.float32) / jnp.sqrt(float(cin))
        gamma = 1.0 + 0.1 * jax.random.normal(kg, (cout,), jnp.float32)
        beta = 0.1 * jax.random.normal(kb, (cout,), jnp.float32)
        run_mean = 0.1 * jax.random.normal(km, (cout,), jnp.float32)
        run_var = 1.0 + 0.5 * jax.random.uniform(kv, (cout,), jnp.float32)
        params.append((w, gamma, beta, run_mean, run_var))
    return params


def fold_params(params):
    """Fold eval-mode BN (selected bn_label) into the conv weights and split
    into the exact operands the kernel consumes (bf16 weights, f32 biases)."""
    folded = []
    for li, (w, gamma, beta, mean, var) in enumerate(params):
        scale = gamma / jnp.sqrt(var + BN_EPS)
        bias = (beta - mean * scale).reshape(1, -1).astype(jnp.float32)
        ws = w * scale[None, :]                       # BN scale folded into columns
        if li < 4:                                    # edge-conv layers
            cin = w.shape[0] // 2
            wa = ws[:cin]                             # multiplies (neighbor - x)
            wd = ws[cin:] - wa                        # multiplies x (after hoist identity)
            folded += [wa.astype(jnp.bfloat16), wd.astype(jnp.bfloat16), bias]
        else:                                         # conv5: split rows for x1..x4
            prev = 0
            for stop in (64, 128, 256, 512):
                folded.append(ws[prev:stop].astype(jnp.bfloat16))
                prev = stop
            folded.append(bias)
    return folded


def dgcnn_abn_forward(x, folded, *, k: int, emb_dims: int):
    b, n, c = x.shape
    assert c == 3, "expected BNC shape as input"
    assert 1 <= k <= n

    in_specs = [pl.BlockSpec((1, n, 3), lambda bi: (bi, 0, 0))]
    for arr in folded:
        # All params are 2D and passed whole (block == full array shape).
        in_specs.append(pl.BlockSpec(arr.shape, lambda bi: (0, 0)))

    # Advisory cost estimate: rough flops + bytes for the XLA scheduler.
    layer_dims = [(3, 64), (64, 64), (64, 128), (128, 256)]
    flops = 0
    for cin, cout in layer_dims:
        flops += 2 * n * n * cin                 # pairwise distances
        flops += 2 * (2 * n * cin * cout)        # two hoisted projections
        flops += k * 2 * n * n * cout            # per-neighbor gather matmuls
    flops += 2 * n * 512 * emb_dims              # conv5
    flops *= b
    bytes_accessed = int(x.size * 4
                         + sum(a.size * a.dtype.itemsize for a in folded)
                         + b * 2 * emb_dims * 4)
    cost = pl.CostEstimate(flops=flops, transcendentals=0,
                           bytes_accessed=bytes_accessed)

    kernel = _make_kernel(k, n)
    out = pl.pallas_call(
        kernel,
        out_shape=jax.ShapeDtypeStruct((b, 1, 2 * emb_dims), jnp.float32),
        grid_spec=pltpu.PrefetchScalarGridSpec(
            num_scalar_prefetch=0,
            grid=(b,),
            in_specs=in_specs,
            out_specs=pl.BlockSpec((1, 1, 2 * emb_dims), lambda bi: (bi, 0, 0)),
        ),
        compiler_params=pltpu.CompilerParams(
            dimension_semantics=("parallel",),
            vmem_limit_bytes=32 * 1024 * 1024),
        cost_estimate=cost,
    )(x, *folded)
    return out.reshape(b, 2 * emb_dims)


if __name__ == "__main__":
    # Small demo shapes: batch=2, points=16, knn=4, emb_dims=64
    # (emb_dims=64 keeps the (1, 2*emb) output block lane-dense: 128 lanes).
    B, N, K, EMB = 2, 16, 4, 64
    key = jax.random.PRNGKey(0)
    x = jax.random.normal(jax.random.fold_in(key, 100), (B, N, 3), jnp.float32)
    params = init_params(key, EMB)
    folded = fold_params(params)

    out = dgcnn_abn_forward(x, folded, k=K, emb_dims=EMB)
    out = jax.block_until_ready(out)

    assert out.shape == (B, 2 * EMB), out.shape
    assert bool(jnp.all(jnp.isfinite(out)))
    print("KERNEL_OK")
</pallas_src>

<mosaic_0001>
module attributes {stable_mosaic.version = 11 : i64} {
  func.func @kernel(%arg0: i32, %arg1: memref<1x16x3xf32, #tpu.memory_space<vmem>>, %arg2: memref<3x64xbf16, #tpu.memory_space<vmem>>, %arg3: memref<3x64xbf16, #tpu.memory_space<vmem>>, %arg4: memref<1x64xf32, #tpu.memory_space<vmem>>, %arg5: memref<64x64xbf16, #tpu.memory_space<vmem>>, %arg6: memref<64x64xbf16, #tpu.memory_space<vmem>>, %arg7: memref<1x64xf32, #tpu.memory_space<vmem>>, %arg8: memref<64x128xbf16, #tpu.memory_space<vmem>>, %arg9: memref<64x128xbf16, #tpu.memory_space<vmem>>, %arg10: memref<1x128xf32, #tpu.memory_space<vmem>>, %arg11: memref<128x256xbf16, #tpu.memory_space<vmem>>, %arg12: memref<128x256xbf16, #tpu.memory_space<vmem>>, %arg13: memref<1x256xf32, #tpu.memory_space<vmem>>, %arg14: memref<64x64xbf16, #tpu.memory_space<vmem>>, %arg15: memref<64x64xbf16, #tpu.memory_space<vmem>>, %arg16: memref<128x64xbf16, #tpu.memory_space<vmem>>, %arg17: memref<256x64xbf16, #tpu.memory_space<vmem>>, %arg18: memref<1x64xf32, #tpu.memory_space<vmem>>, %arg19: memref<1x1x128xf32, #tpu.memory_space<vmem>>) attributes {dimension_semantics = [#tpu.dimension_semantics<parallel>], iteration_bounds = array<i64: 2>, scalar_prefetch = 0 : i64, scratch_operands = 0 : i64, tpu.core_type = #tpu.core_type<tc>, window_params = [{transform_indices = @transform_0, window_bounds = array<i64: 1, 16, 3>}, {pipeline_mode = #tpu.pipeline_mode<synchronous>, transform_indices = @transform_1, window_bounds = array<i64: 3, 64>}, {pipeline_mode = #tpu.pipeline_mode<synchronous>, transform_indices = @transform_2, window_bounds = array<i64: 3, 64>}, {pipeline_mode = #tpu.pipeline_mode<synchronous>, transform_indices = @transform_3, window_bounds = array<i64: 1, 64>}, {pipeline_mode = #tpu.pipeline_mode<synchronous>, transform_indices = @transform_4, window_bounds = array<i64: 64, 64>}, {pipeline_mode = #tpu.pipeline_mode<synchronous>, transform_indices = @transform_5, window_bounds = array<i64: 64, 64>}, {pipeline_mode = #tpu.pipeline_mode<synchronous>, transform_indices = @transform_6, window_bounds = array<i64: 1, 64>}, {pipeline_mode = #tpu.pipeline_mode<synchronous>, transform_indices = @transform_7, window_bounds = array<i64: 64, 128>}, {pipeline_mode = #tpu.pipeline_mode<synchronous>, transform_indices = @transform_8, window_bounds = array<i64: 64, 128>}, {pipeline_mode = #tpu.pipeline_mode<synchronous>, transform_indices = @transform_9, window_bounds = array<i64: 1, 128>}, {pipeline_mode = #tpu.pipeline_mode<synchronous>, transform_indices = @transform_10, window_bounds = array<i64: 128, 256>}, {pipeline_mode = #tpu.pipeline_mode<synchronous>, transform_indices = @transform_11, window_bounds = array<i64: 128, 256>}, {pipeline_mode = #tpu.pipeline_mode<synchronous>, transform_indices = @transform_12, window_bounds = array<i64: 1, 256>}, {pipeline_mode = #tpu.pipeline_mode<synchronous>, transform_indices = @transform_13, window_bounds = array<i64: 64, 64>}, {pipeline_mode = #tpu.pipeline_mode<synchronous>, transform_indices = @transform_14, window_bounds = array<i64: 64, 64>}, {pipeline_mode = #tpu.pipeline_mode<synchronous>, transform_indices = @transform_15, window_bounds = array<i64: 128, 64>}, {pipeline_mode = #tpu.pipeline_mode<synchronous>, transform_indices = @transform_16, window_bounds = array<i64: 256, 64>}, {pipeline_mode = #tpu.pipeline_mode<synchronous>, transform_indices = @transform_17, window_bounds = array<i64: 1, 64>}, {transform_indices = @transform_18, window_bounds = array<i64: 1, 1, 128>}]} {
    %c0 = arith.constant 0 : index
    %c0_0 = arith.constant 0 : index
    %c0_1 = arith.constant 0 : index
    %0 = vector.load %arg1[%c0, %c0_0, %c0_1] : memref<1x16x3xf32, #tpu.memory_space<vmem>>, vector<1x16x3xf32>
    %1 = vector.shape_cast %0 : vector<1x16x3xf32> to vector<16x3xf32>
    %2 = arith.truncf %1 : vector<16x3xf32> to vector<16x3xbf16>
    %c0_2 = arith.constant 0 : index
    %c0_3 = arith.constant 0 : index
    %3 = vector.load %arg2[%c0_2, %c0_3] : memref<3x64xbf16, #tpu.memory_space<vmem>>, vector<3x64xbf16>
    %c0_4 = arith.constant 0 : index
    %c0_5 = arith.constant 0 : index
    %4 = vector.load %arg3[%c0_4, %c0_5] : memref<3x64xbf16, #tpu.memory_space<vmem>>, vector<3x64xbf16>
    %c0_6 = arith.constant 0 : index
    %c0_7 = arith.constant 0 : index
    %5 = vector.load %arg4[%c0_6, %c0_7] : memref<1x64xf32, #tpu.memory_space<vmem>>, vector<1x64xf32>
    %6 = arith.extf %2 : vector<16x3xbf16> to vector<16x3xf32>
    %7 = arith.mulf %6, %6 : vector<16x3xf32>
    %cst = arith.constant dense<0.000000e+00> : vector<16xf32>
    %8 = vector.multi_reduction <add>, %7, %cst [1] : vector<16x3xf32> to vector<16xf32>
    %9 = vector.shape_cast %8 : vector<16xf32> to vector<16x1xf32>
    %cst_8 = arith.constant dense<0.000000e+00> : vector<16x16xf32>
    %10 = tpu.matmul %2, %2, %cst_8 {dimension_numbers = #tpu.dot_dimension_numbers<[1], [1], [0], [0], [0, 0, 1, 0], [], []>} : vector<16x3xbf16>, vector<16x3xbf16>, vector<16x16xf32> -> vector<16x16xf32>
    %cst_9 = arith.constant 2.000000e+00 : f32
    %11 = vector.broadcast %cst_9 : f32 to vector<16x16xf32>
    %12 = arith.mulf %11, %10 : vector<16x16xf32>
    %13 = vector.broadcast %9 : vector<16x1xf32> to vector<16x16xf32>
    %14 = arith.subf %12, %13 : vector<16x16xf32>
    %15 = tpu.transpose %9, [1, 0] : vector<16x1xf32> -> vector<1x16xf32>
    %16 = vector.broadcast %15 : vector<1x16xf32> to vector<16x16xf32>
    %17 = arith.subf %14, %16 : vector<16x16xf32>
    %cst_10 = arith.constant dense<0.000000e+00> : vector<16x64xf32>
    %18 = tpu.matmul %2, %3, %cst_10 {dimension_numbers = #tpu.dot_dimension_numbers<[1], [0], [0], [1], [0, 0, 1, 1], [], []>} : vector<16x3xbf16>, vector<3x64xbf16>, vector<16x64xf32> -> vector<16x64xf32>
    %cst_11 = arith.constant dense<0.000000e+00> : vector<16x64xf32>
    %19 = tpu.matmul %2, %4, %cst_11 {dimension_numbers = #tpu.dot_dimension_numbers<[1], [0], [0], [1], [0, 0, 1, 1], [], []>} : vector<16x3xbf16>, vector<3x64xbf16>, vector<16x64xf32> -> vector<16x64xf32>
    %20 = vector.broadcast %5 : vector<1x64xf32> to vector<16x64xf32>
    %21 = arith.addf %19, %20 : vector<16x64xf32>
    %22 = arith.truncf %18 : vector<16x64xf32> to vector<16x64xbf16>
    %23 = tpu.bitcast %17 : vector<16x16xf32> -> vector<16x16xi32>
    %c0_i32 = arith.constant 0 : i32
    %24 = vector.broadcast %c0_i32 : i32 to vector<16x16xi32>
    %25 = arith.cmpi slt, %23, %24 : vector<16x16xi32>
    %c2147483647_i32 = arith.constant 2147483647 : i32
    %26 = vector.broadcast %c2147483647_i32 : i32 to vector<16x16xi32>
    %27 = arith.xori %23, %26 : vector<16x16xi32>
    %28 = arith.select %25, %27, %23 : vector<16x16xi1>, vector<16x16xi32>
    %29 = tpu.iota {dimensions = array<i32: 1>} : vector<16x16xi32>
    %c-16_i32 = arith.constant -16 : i32
    %30 = vector.broadcast %c-16_i32 : i32 to vector<16x16xi32>
    %31 = arith.andi %28, %30 : vector<16x16xi32>
    %c15_i32 = arith.constant 15 : i32
    %32 = vector.broadcast %c15_i32 : i32 to vector<16x16xi32>
    %33 = arith.subi %32, %29 : vector<16x16xi32>
    %34 = arith.ori %31, %33 : vector<16x16xi32>
    %cst_12 = arith.constant 0xFF800000 : f32
    %35 = vector.broadcast %cst_12 : f32 to vector<16x64xf32>
    %c0_i32_13 = arith.constant 0 : i32
    %cst_14 = arith.constant dense<-2147483648> : vector<16xi32>
    %36 = vector.multi_reduction <maxsi>, %34, %cst_14 [1] : vector<16x16xi32> to vector<16xi32>
    %37 = vector.shape_cast %36 : vector<16xi32> to vector<16x1xi32>
    %38 = vector.broadcast %37 : vector<16x1xi32> to vector<16x16xi32>
    %39 = arith.cmpi eq, %34, %38 : vector<16x16xi32>
    %40 = arith.extui %39 : vector<16x16xi1> to vector<16x16xi32>
    %41 = arith.sitofp %40 : vector<16x16xi32> to vector<16x16xf32>
    %42 = arith.truncf %41 : vector<16x16xf32> to vector<16x16xbf16>
    %cst_15 = arith.constant dense<0.000000e+00> : vector<16x64xf32>
    %43 = tpu.matmul %42, %22, %cst_15 {dimension_numbers = #tpu.dot_dimension_numbers<[1], [0], [0], [1], [0, 0, 1, 1], [], []>} : vector<16x16xbf16>, vector<16x64xbf16>, vector<16x64xf32> -> vector<16x64xf32>
    %44 = arith.maximumf %35, %43 : vector<16x64xf32>
    %c-2147483648_i32 = arith.constant -2147483648 : i32
    %45 = vector.broadcast %c-2147483648_i32 : i32 to vector<16x16xi32>
    %46 = arith.select %39, %45, %34 : vector<16x16xi1>, vector<16x16xi32>
    %c1_i32 = arith.constant 1 : i32
    %cst_16 = arith.constant dense<-2147483648> : vector<16xi32>
    %47 = vector.multi_reduction <maxsi>, %46, %cst_16 [1] : vector<16x16xi32> to vector<16xi32>
    %48 = vector.shape_cast %47 : vector<16xi32> to vector<16x1xi32>
    %49 = vector.broadcast %48 : vector<16x1xi32> to vector<16x16xi32>
    %50 = arith.cmpi eq, %46, %49 : vector<16x16xi32>
    %51 = arith.extui %50 : vector<16x16xi1> to vector<16x16xi32>
    %52 = arith.sitofp %51 : vector<16x16xi32> to vector<16x16xf32>
    %53 = arith.truncf %52 : vector<16x16xf32> to vector<16x16xbf16>
    %cst_17 = arith.constant dense<0.000000e+00> : vector<16x64xf32>
    %54 = tpu.matmul %53, %22, %cst_17 {dimension_numbers = #tpu.dot_dimension_numbers<[1], [0], [0], [1], [0, 0, 1, 1], [], []>} : vector<16x16xbf16>, vector<16x64xbf16>, vector<16x64xf32> -> vector<16x64xf32>
    %55 = arith.maximumf %44, %54 : vector<16x64xf32>
    %c-2147483648_i32_18 = arith.constant -2147483648 : i32
    %56 = vector.broadcast %c-2147483648_i32_18 : i32 to vector<16x16xi32>
    %57 = arith.select %50, %56, %46 : vector<16x16xi1>, vector<16x16xi32>
    %c2_i32 = arith.constant 2 : i32
    %cst_19 = arith.constant dense<-2147483648> : vector<16xi32>
    %58 = vector.multi_reduction <maxsi>, %57, %cst_19 [1] : vector<16x16xi32> to vector<16xi32>
    %59 = vector.shape_cast %58 : vector<16xi32> to vector<16x1xi32>
    %60 = vector.broadcast %59 : vector<16x1xi32> to vector<16x16xi32>
    %61 = arith.cmpi eq, %57, %60 : vector<16x16xi32>
    %62 = arith.extui %61 : vector<16x16xi1> to vector<16x16xi32>
    %63 = arith.sitofp %62 : vector<16x16xi32> to vector<16x16xf32>
    %64 = arith.truncf %63 : vector<16x16xf32> to vector<16x16xbf16>
    %cst_20 = arith.constant dense<0.000000e+00> : vector<16x64xf32>
    %65 = tpu.matmul %64, %22, %cst_20 {dimension_numbers = #tpu.dot_dimension_numbers<[1], [0], [0], [1], [0, 0, 1, 1], [], []>} : vector<16x16xbf16>, vector<16x64xbf16>, vector<16x64xf32> -> vector<16x64xf32>
    %66 = arith.maximumf %55, %65 : vector<16x64xf32>
    %c-2147483648_i32_21 = arith.constant -2147483648 : i32
    %67 = vector.broadcast %c-2147483648_i32_21 : i32 to vector<16x16xi32>
    %68 = arith.select %61, %67, %57 : vector<16x16xi1>, vector<16x16xi32>
    %c3_i32 = arith.constant 3 : i32
    %cst_22 = arith.constant dense<-2147483648> : vector<16xi32>
    %69 = vector.multi_reduction <maxsi>, %68, %cst_22 [1] : vector<16x16xi32> to vector<16xi32>
    %70 = vector.shape_cast %69 : vector<16xi32> to vector<16x1xi32>
    %71 = vector.broadcast %70 : vector<16x1xi32> to vector<16x16xi32>
    %72 = arith.cmpi eq, %68, %71 : vector<16x16xi32>
    %73 = arith.extui %72 : vector<16x16xi1> to vector<16x16xi32>
    %74 = arith.sitofp %73 : vector<16x16xi32> to vector<16x16xf32>
    %75 = arith.truncf %74 : vector<16x16xf32> to vector<16x16xbf16>
    %cst_23 = arith.constant dense<0.000000e+00> : vector<16x64xf32>
    %76 = tpu.matmul %75, %22, %cst_23 {dimension_numbers = #tpu.dot_dimension_numbers<[1], [0], [0], [1], [0, 0, 1, 1], [], []>} : vector<16x16xbf16>, vector<16x64xbf16>, vector<16x64xf32> -> vector<16x64xf32>
    %77 = arith.maximumf %66, %76 : vector<16x64xf32>
    %c-2147483648_i32_24 = arith.constant -2147483648 : i32
    %78 = vector.broadcast %c-2147483648_i32_24 : i32 to vector<16x16xi32>
    %79 = arith.select %72, %78, %68 : vector<16x16xi1>, vector<16x16xi32>
    %80 = arith.addf %77, %21 : vector<16x64xf32>
    %cst_25 = arith.constant 2.000000e-01 : f32
    %81 = vector.broadcast %cst_25 : f32 to vector<16x64xf32>
    %82 = arith.mulf %81, %80 : vector<16x64xf32>
    %83 = arith.maximumf %80, %82 : vector<16x64xf32>
    %84 = arith.truncf %83 : vector<16x64xf32> to vector<16x64xbf16>
    %c0_26 = arith.constant 0 : index
    %c0_27 = arith.constant 0 : index
    %85 = vector.load %arg5[%c0_26, %c0_27] : memref<64x64xbf16, #tpu.memory_space<vmem>>, vector<64x64xbf16>
    %c0_28 = arith.constant 0 : index
    %c0_29 = arith.constant 0 : index
    %86 = vector.load %arg6[%c0_28, %c0_29] : memref<64x64xbf16, #tpu.memory_space<vmem>>, vector<64x64xbf16>
    %c0_30 = arith.constant 0 : index
    %c0_31 = arith.constant 0 : index
    %87 = vector.load %arg7[%c0_30, %c0_31] : memref<1x64xf32, #tpu.memory_space<vmem>>, vector<1x64xf32>
    %88 = arith.extf %84 : vector<16x64xbf16> to vector<16x64xf32>
    %89 = arith.mulf %88, %88 : vector<16x64xf32>
    %cst_32 = arith.constant dense<0.000000e+00> : vector<16xf32>
    %90 = vector.multi_reduction <add>, %89, %cst_32 [1] : vector<16x64xf32> to vector<16xf32>
    %91 = vector.shape_cast %90 : vector<16xf32> to vector<16x1xf32>
    %cst_33 = arith.constant dense<0.000000e+00> : vector<16x16xf32>
    %92 = tpu.matmul %84, %84, %cst_33 {dimension_numbers = #tpu.dot_dimension_numbers<[1], [1], [0], [0], [0, 0, 1, 0], [], []>} : vector<16x64xbf16>, vector<16x64xbf16>, vector<16x16xf32> -> vector<16x16xf32>
    %cst_34 = arith.constant 2.000000e+00 : f32
    %93 = vector.broadcast %cst_34 : f32 to vector<16x16xf32>
    %94 = arith.mulf %93, %92 : vector<16x16xf32>
    %95 = vector.broadcast %91 : vector<16x1xf32> to vector<16x16xf32>
    %96 = arith.subf %94, %95 : vector<16x16xf32>
    %97 = tpu.transpose %91, [1, 0] : vector<16x1xf32> -> vector<1x16xf32>
    %98 = vector.broadcast %97 : vector<1x16xf32> to vector<16x16xf32>
    %99 = arith.subf %96, %98 : vector<16x16xf32>
    %cst_35 = arith.constant dense<0.000000e+00> : vector<16x64xf32>
    %100 = tpu.matmul %84, %85, %cst_35 {dimension_numbers = #tpu.dot_dimension_numbers<[1], [0], [0], [1], [0, 0, 1, 1], [], []>} : vector<16x64xbf16>, vector<64x64xbf16>, vector<16x64xf32> -> vector<16x64xf32>
    %cst_36 = arith.constant dense<0.000000e+00> : vector<16x64xf32>
    %101 = tpu.matmul %84, %86, %cst_36 {dimension_numbers = #tpu.dot_dimension_numbers<[1], [0], [0], [1], [0, 0, 1, 1], [], []>} : vector<16x64xbf16>, vector<64x64xbf16>, vector<16x64xf32> -> vector<16x64xf32>
    %102 = vector.broadcast %87 : vector<1x64xf32> to vector<16x64xf32>
    %103 = arith.addf %101, %102 : vector<16x64xf32>
    %104 = arith.truncf %100 : vector<16x64xf32> to vector<16x64xbf16>
    %105 = tpu.bitcast %99 : vector<16x16xf32> -> vector<16x16xi32>
    %c0_i32_37 = arith.constant 0 : i32
    %106 = vector.broadcast %c0_i32_37 : i32 to vector<16x16xi32>
    %107 = arith.cmpi slt, %105, %106 : vector<16x16xi32>
    %c2147483647_i32_38 = arith.constant 2147483647 : i32
    %108 = vector.broadcast %c2147483647_i32_38 : i32 to vector<16x16xi32>
    %109 = arith.xori %105, %108 : vector<16x16xi32>
    %110 = arith.select %107, %109, %105 : vector<16x16xi1>, vector<16x16xi32>
    %111 = tpu.iota {dimensions = array<i32: 1>} : vector<16x16xi32>
    %c-16_i32_39 = arith.constant -16 : i32
    %112 = vector.broadcast %c-16_i32_39 : i32 to vector<16x16xi32>
    %113 = arith.andi %110, %112 : vector<16x16xi32>
    %c15_i32_40 = arith.constant 15 : i32
    %114 = vector.broadcast %c15_i32_40 : i32 to vector<16x16xi32>
    %115 = arith.subi %114, %111 : vector<16x16xi32>
    %116 = arith.ori %113, %115 : vector<16x16xi32>
    %cst_41 = arith.constant 0xFF800000 : f32
    %117 = vector.broadcast %cst_41 : f32 to vector<16x64xf32>
    %c0_i32_42 = arith.constant 0 : i32
    %cst_43 = arith.constant dense<-2147483648> : vector<16xi32>
    %118 = vector.multi_reduction <maxsi>, %116, %cst_43 [1] : vector<16x16xi32> to vector<16xi32>
    %119 = vector.shape_cast %118 : vector<16xi32> to vector<16x1xi32>
    %120 = vector.broadcast %119 : vector<16x1xi32> to vector<16x16xi32>
    %121 = arith.cmpi eq, %116, %120 : vector<16x16xi32>
    %122 = arith.extui %121 : vector<16x16xi1> to vector<16x16xi32>
    %123 = arith.sitofp %122 : vector<16x16xi32> to vector<16x16xf32>
    %124 = arith.truncf %123 : vector<16x16xf32> to vector<16x16xbf16>
    %cst_44 = arith.constant dense<0.000000e+00> : vector<16x64xf32>
    %125 = tpu.matmul %124, %104, %cst_44 {dimension_numbers = #tpu.dot_dimension_numbers<[1], [0], [0], [1], [0, 0, 1, 1], [], []>} : vector<16x16xbf16>, vector<16x64xbf16>, vector<16x64xf32> -> vector<16x64xf32>
    %126 = arith.maximumf %117, %125 : vector<16x64xf32>
    %c-2147483648_i32_45 = arith.constant -2147483648 : i32
    %127 = vector.broadcast %c-2147483648_i32_45 : i32 to vector<16x16xi32>
    %128 = arith.select %121, %127, %116 : vector<16x16xi1>, vector<16x16xi32>
    %c1_i32_46 = arith.constant 1 : i32
    %cst_47 = arith.constant dense<-2147483648> : vector<16xi32>
    %129 = vector.multi_reduction <maxsi>, %128, %cst_47 [1] : vector<16x16xi32> to vector<16xi32>
    %130 = vector.shape_cast %129 : vector<16xi32> to vector<16x1xi32>
    %131 = vector.broadcast %130 : vector<16x1xi32> to vector<16x16xi32>
    %132 = arith.cmpi eq, %128, %131 : vector<16x16xi32>
    %133 = arith.extui %132 : vector<16x16xi1> to vector<16x16xi32>
    %134 = arith.sitofp %133 : vector<16x16xi32> to vector<16x16xf32>
    %135 = arith.truncf %134 : vector<16x16xf32> to vector<16x16xbf16>
    %cst_48 = arith.constant dense<0.000000e+00> : vector<16x64xf32>
    %136 = tpu.matmul %135, %104, %cst_48 {dimension_numbers = #tpu.dot_dimension_numbers<[1], [0], [0], [1], [0, 0, 1, 1], [], []>} : vector<16x16xbf16>, vector<16x64xbf16>, vector<16x64xf32> -> vector<16x64xf32>
    %137 = arith.maximumf %126, %136 : vector<16x64xf32>
    %c-2147483648_i32_49 = arith.constant -2147483648 : i32
    %138 = vector.broadcast %c-2147483648_i32_49 : i32 to vector<16x16xi32>
    %139 = arith.select %132, %138, %128 : vector<16x16xi1>, vector<16x16xi32>
    %c2_i32_50 = arith.constant 2 : i32
    %cst_51 = arith.constant dense<-2147483648> : vector<16xi32>
    %140 = vector.multi_reduction <maxsi>, %139, %cst_51 [1] : vector<16x16xi32> to vector<16xi32>
    %141 = vector.shape_cast %140 : vector<16xi32> to vector<16x1xi32>
    %142 = vector.broadcast %141 : vector<16x1xi32> to vector<16x16xi32>
    %143 = arith.cmpi eq, %139, %142 : vector<16x16xi32>
    %144 = arith.extui %143 : vector<16x16xi1> to vector<16x16xi32>
    %145 = arith.sitofp %144 : vector<16x16xi32> to vector<16x16xf32>
    %146 = arith.truncf %145 : vector<16x16xf32> to vector<16x16xbf16>
    %cst_52 = arith.constant dense<0.000000e+00> : vector<16x64xf32>
    %147 = tpu.matmul %146, %104, %cst_52 {dimension_numbers = #tpu.dot_dimension_numbers<[1], [0], [0], [1], [0, 0, 1, 1], [], []>} : vector<16x16xbf16>, vector<16x64xbf16>, vector<16x64xf32> -> vector<16x64xf32>
    %148 = arith.maximumf %137, %147 : vector<16x64xf32>
    %c-2147483648_i32_53 = arith.constant -2147483648 : i32
    %149 = vector.broadcast %c-2147483648_i32_53 : i32 to vector<16x16xi32>
    %150 = arith.select %143, %149, %139 : vector<16x16xi1>, vector<16x16xi32>
    %c3_i32_54 = arith.constant 3 : i32
    %cst_55 = arith.constant dense<-2147483648> : vector<16xi32>
    %151 = vector.multi_reduction <maxsi>, %150, %cst_55 [1] : vector<16x16xi32> to vector<16xi32>
    %152 = vector.shape_cast %151 : vector<16xi32> to vector<16x1xi32>
    %153 = vector.broadcast %152 : vector<16x1xi32> to vector<16x16xi32>
    %154 = arith.cmpi eq, %150, %153 : vector<16x16xi32>
    %155 = arith.extui %154 : vector<16x16xi1> to vector<16x16xi32>
    %156 = arith.sitofp %155 : vector<16x16xi32> to vector<16x16xf32>
    %157 = arith.truncf %156 : vector<16x16xf32> to vector<16x16xbf16>
    %cst_56 = arith.constant dense<0.000000e+00> : vector<16x64xf32>
    %158 = tpu.matmul %157, %104, %cst_56 {dimension_numbers = #tpu.dot_dimension_numbers<[1], [0], [0], [1], [0, 0, 1, 1], [], []>} : vector<16x16xbf16>, vector<16x64xbf16>, vector<16x64xf32> -> vector<16x64xf32>
    %159 = arith.maximumf %148, %158 : vector<16x64xf32>
    %c-2147483648_i32_57 = arith.constant -2147483648 : i32
    %160 = vector.broadcast %c-2147483648_i32_57 : i32 to vector<16x16xi32>
    %161 = arith.select %154, %160, %150 : vector<16x16xi1>, vector<16x16xi32>
    %162 = arith.addf %159, %103 : vector<16x64xf32>
    %cst_58 = arith.constant 2.000000e-01 : f32
    %163 = vector.broadcast %cst_58 : f32 to vector<16x64xf32>
    %164 = arith.mulf %163, %162 : vector<16x64xf32>
    %165 = arith.maximumf %162, %164 : vector<16x64xf32>
    %166 = arith.truncf %165 : vector<16x64xf32> to vector<16x64xbf16>
    %c0_59 = arith.constant 0 : index
    %c0_60 = arith.constant 0 : index
    %167 = vector.load %arg8[%c0_59, %c0_60] : memref<64x128xbf16, #tpu.memory_space<vmem>>, vector<64x128xbf16>
    %c0_61 = arith.constant 0 : index
    %c0_62 = arith.constant 0 : index
    %168 = vector.load %arg9[%c0_61, %c0_62] : memref<64x128xbf16, #tpu.memory_space<vmem>>, vector<64x128xbf16>
    %c0_63 = arith.constant 0 : index
    %c0_64 = arith.constant 0 : index
    %169 = vector.load %arg10[%c0_63, %c0_64] : memref<1x128xf32, #tpu.memory_space<vmem>>, vector<1x128xf32>
    %170 = arith.extf %166 : vector<16x64xbf16> to vector<16x64xf32>
    %171 = arith.mulf %170, %170 : vector<16x64xf32>
    %cst_65 = arith.constant dense<0.000000e+00> : vector<16xf32>
    %172 = vector.multi_reduction <add>, %171, %cst_65 [1] : vector<16x64xf32> to vector<16xf32>
    %173 = vector.shape_cast %172 : vector<16xf32> to vector<16x1xf32>
    %cst_66 = arith.constant dense<0.000000e+00> : vector<16x16xf32>
    %174 = tpu.matmul %166, %166, %cst_66 {dimension_numbers = #tpu.dot_dimension_numbers<[1], [1], [0], [0], [0, 0, 1, 0], [], []>} : vector<16x64xbf16>, vector<16x64xbf16>, vector<16x16xf32> -> vector<16x16xf32>
    %cst_67 = arith.constant 2.000000e+00 : f32
    %175 = vector.broadcast %cst_67 : f32 to vector<16x16xf32>
    %176 = arith.mulf %175, %174 : vector<16x16xf32>
    %177 = vector.broadcast %173 : vector<16x1xf32> to vector<16x16xf32>
    %178 = arith.subf %176, %177 : vector<16x16xf32>
    %179 = tpu.transpose %173, [1, 0] : vector<16x1xf32> -> vector<1x16xf32>
    %180 = vector.broadcast %179 : vector<1x16xf32> to vector<16x16xf32>
    %181 = arith.subf %178, %180 : vector<16x16xf32>
    %cst_68 = arith.constant dense<0.000000e+00> : vector<16x128xf32>
    %182 = tpu.matmul %166, %167, %cst_68 {dimension_numbers = #tpu.dot_dimension_numbers<[1], [0], [0], [1], [0, 0, 1, 1], [], []>} : vector<16x64xbf16>, vector<64x128xbf16>, vector<16x128xf32> -> vector<16x128xf32>
    %cst_69 = arith.constant dense<0.000000e+00> : vector<16x128xf32>
    %183 = tpu.matmul %166, %168, %cst_69 {dimension_numbers = #tpu.dot_dimension_numbers<[1], [0], [0], [1], [0, 0, 1, 1], [], []>} : vector<16x64xbf16>, vector<64x128xbf16>, vector<16x128xf32> -> vector<16x128xf32>
    %184 = vector.broadcast %169 : vector<1x128xf32> to vector<16x128xf32>
    %185 = arith.addf %183, %184 : vector<16x128xf32>
    %186 = arith.truncf %182 : vector<16x128xf32> to vector<16x128xbf16>
    %187 = tpu.bitcast %181 : vector<16x16xf32> -> vector<16x16xi32>
    %c0_i32_70 = arith.constant 0 : i32
    %188 = vector.broadcast %c0_i32_70 : i32 to vector<16x16xi32>
    %189 = arith.cmpi slt, %187, %188 : vector<16x16xi32>
    %c2147483647_i32_71 = arith.constant 2147483647 : i32
    %190 = vector.broadcast %c2147483647_i32_71 : i32 to vector<16x16xi32>
    %191 = arith.xori %187, %190 : vector<16x16xi32>
    %192 = arith.select %189, %191, %187 : vector<16x16xi1>, vector<16x16xi32>
    %193 = tpu.iota {dimensions = array<i32: 1>} : vector<16x16xi32>
    %c-16_i32_72 = arith.constant -16 : i32
    %194 = vector.broadcast %c-16_i32_72 : i32 to vector<16x16xi32>
    %195 = arith.andi %192, %194 : vector<16x16xi32>
    %c15_i32_73 = arith.constant 15 : i32
    %196 = vector.broadcast %c15_i32_73 : i32 to vector<16x16xi32>
    %197 = arith.subi %196, %193 : vector<16x16xi32>
    %198 = arith.ori %195, %197 : vector<16x16xi32>
    %cst_74 = arith.constant 0xFF800000 : f32
    %199 = vector.broadcast %cst_74 : f32 to vector<16x128xf32>
    %c0_i32_75 = arith.constant 0 : i32
    %cst_76 = arith.constant dense<-2147483648> : vector<16xi32>
    %200 = vector.multi_reduction <maxsi>, %198, %cst_76 [1] : vector<16x16xi32> to vector<16xi32>
    %201 = vector.shape_cast %200 : vector<16xi32> to vector<16x1xi32>
    %202 = vector.broadcast %201 : vector<16x1xi32> to vector<16x16xi32>
    %203 = arith.cmpi eq, %198, %202 : vector<16x16xi32>
    %204 = arith.extui %203 : vector<16x16xi1> to vector<16x16xi32>
    %205 = arith.sitofp %204 : vector<16x16xi32> to vector<16x16xf32>
    %206 = arith.truncf %205 : vector<16x16xf32> to vector<16x16xbf16>
    %cst_77 = arith.constant dense<0.000000e+00> : vector<16x128xf32>
    %207 = tpu.matmul %206, %186, %cst_77 {dimension_numbers = #tpu.dot_dimension_numbers<[1], [0], [0], [1], [0, 0, 1, 1], [], []>} : vector<16x16xbf16>, vector<16x128xbf16>, vector<16x128xf32> -> vector<16x128xf32>
    %208 = arith.maximumf %199, %207 : vector<16x128xf32>
    %c-2147483648_i32_78 = arith.constant -2147483648 : i32
    %209 = vector.broadcast %c-2147483648_i32_78 : i32 to vector<16x16xi32>
    %210 = arith.select %203, %209, %198 : vector<16x16xi1>, vector<16x16xi32>
    %c1_i32_79 = arith.constant 1 : i32
    %cst_80 = arith.constant dense<-2147483648> : vector<16xi32>
    %211 = vector.multi_reduction <maxsi>, %210, %cst_80 [1] : vector<16x16xi32> to vector<16xi32>
    %212 = vector.shape_cast %211 : vector<16xi32> to vector<16x1xi32>
    %213 = vector.broadcast %212 : vector<16x1xi32> to vector<16x16xi32>
    %214 = arith.cmpi eq, %210, %213 : vector<16x16xi32>
    %215 = arith.extui %214 : vector<16x16xi1> to vector<16x16xi32>
    %216 = arith.sitofp %215 : vector<16x16xi32> to vector<16x16xf32>
    %217 = arith.truncf %216 : vector<16x16xf32> to vector<16x16xbf16>
    %cst_81 = arith.constant dense<0.000000e+00> : vector<16x128xf32>
    %218 = tpu.matmul %217, %186, %cst_81 {dimension_numbers = #tpu.dot_dimension_numbers<[1], [0], [0], [1], [0, 0, 1, 1], [], []>} : vector<16x16xbf16>, vector<16x128xbf16>, vector<16x128xf32> -> vector<16x128xf32>
    %219 = arith.maximumf %208, %218 : vector<16x128xf32>
    %c-2147483648_i32_82 = arith.constant -2147483648 : i32
    %220 = vector.broadcast %c-2147483648_i32_82 : i32 to vector<16x16xi32>
    %221 = arith.select %214, %220, %210 : vector<16x16xi1>, vector<16x16xi32>
    %c2_i32_83 = arith.constant 2 : i32
    %cst_84 = arith.constant dense<-2147483648> : vector<16xi32>
    %222 = vector.multi_reduction <maxsi>, %221, %cst_84 [1] : vector<16x16xi32> to vector<16xi32>
    %223 = vector.shape_cast %222 : vector<16xi32> to vector<16x1xi32>
    %224 = vector.broadcast %223 : vector<16x1xi32> to vector<16x16xi32>
    %225 = arith.cmpi eq, %221, %224 : vector<16x16xi32>
    %226 = arith.extui %225 : vector<16x16xi1> to vector<16x16xi32>
    %227 = arith.sitofp %226 : vector<16x16xi32> to vector<16x16xf32>
    %228 = arith.truncf %227 : vector<16x16xf32> to vector<16x16xbf16>
    %cst_85 = arith.constant dense<0.000000e+00> : vector<16x128xf32>
    %229 = tpu.matmul %228, %186, %cst_85 {dimension_numbers = #tpu.dot_dimension_numbers<[1], [0], [0], [1], [0, 0, 1, 1], [], []>} : vector<16x16xbf16>, vector<16x128xbf16>, vector<16x128xf32> -> vector<16x128xf32>
    %230 = arith.maximumf %219, %229 : vector<16x128xf32>
    %c-2147483648_i32_86 = arith.constant -2147483648 : i32
    %231 = vector.broadcast %c-2147483648_i32_86 : i32 to vector<16x16xi32>
    %232 = arith.select %225, %231, %221 : vector<16x16xi1>, vector<16x16xi32>
    %c3_i32_87 = arith.constant 3 : i32
    %cst_88 = arith.constant dense<-2147483648> : vector<16xi32>
    %233 = vector.multi_reduction <maxsi>, %232, %cst_88 [1] : vector<16x16xi32> to vector<16xi32>
    %234 = vector.shape_cast %233 : vector<16xi32> to vector<16x1xi32>
    %235 = vector.broadcast %234 : vector<16x1xi32> to vector<16x16xi32>
    %236 = arith.cmpi eq, %232, %235 : vector<16x16xi32>
    %237 = arith.extui %236 : vector<16x16xi1> to vector<16x16xi32>
    %238 = arith.sitofp %237 : vector<16x16xi32> to vector<16x16xf32>
    %239 = arith.truncf %238 : vector<16x16xf32> to vector<16x16xbf16>
    %cst_89 = arith.constant dense<0.000000e+00> : vector<16x128xf32>
    %240 = tpu.matmul %239, %186, %cst_89 {dimension_numbers = #tpu.dot_dimension_numbers<[1], [0], [0], [1], [0, 0, 1, 1], [], []>} : vector<16x16xbf16>, vector<16x128xbf16>, vector<16x128xf32> -> vector<16x128xf32>
    %241 = arith.maximumf %230, %240 : vector<16x128xf32>
    %c-2147483648_i32_90 = arith.constant -2147483648 : i32
    %242 = vector.broadcast %c-2147483648_i32_90 : i32 to vector<16x16xi32>
    %243 = arith.select %236, %242, %232 : vector<16x16xi1>, vector<16x16xi32>
    %244 = arith.addf %241, %185 : vector<16x128xf32>
    %cst_91 = arith.constant 2.000000e-01 : f32
    %245 = vector.broadcast %cst_91 : f32 to vector<16x128xf32>
    %246 = arith.mulf %245, %244 : vector<16x128xf32>
    %247 = arith.maximumf %244, %246 : vector<16x128xf32>
    %248 = arith.truncf %247 : vector<16x128xf32> to vector<16x128xbf16>
    %c0_92 = arith.constant 0 : index
    %c0_93 = arith.constant 0 : index
    %249 = vector.load %arg11[%c0_92, %c0_93] : memref<128x256xbf16, #tpu.memory_space<vmem>>, vector<128x256xbf16>
    %c0_94 = arith.constant 0 : index
    %c0_95 = arith.constant 0 : index
    %250 = vector.load %arg12[%c0_94, %c0_95] : memref<128x256xbf16, #tpu.memory_space<vmem>>, vector<128x256xbf16>
    %c0_96 = arith.constant 0 : index
    %c0_97 = arith.constant 0 : index
    %251 = vector.load %arg13[%c0_96, %c0_97] : memref<1x256xf32, #tpu.memory_space<vmem>>, vector<1x256xf32>
    %252 = arith.extf %248 : vector<16x128xbf16> to vector<16x128xf32>
    %253 = arith.mulf %252, %252 : vector<16x128xf32>
    %cst_98 = arith.constant dense<0.000000e+00> : vector<16xf32>
    %254 = vector.multi_reduction <add>, %253, %cst_98 [1] : vector<16x128xf32> to vector<16xf32>
    %255 = vector.shape_cast %254 : vector<16xf32> to vector<16x1xf32>
    %cst_99 = arith.constant dense<0.000000e+00> : vector<16x16xf32>
    %256 = tpu.matmul %248, %248, %cst_99 {dimension_numbers = #tpu.dot_dimension_numbers<[1], [1], [0], [0], [0, 0, 1, 0], [], []>} : vector<16x128xbf16>, vector<16x128xbf16>, vector<16x16xf32> -> vector<16x16xf32>
    %cst_100 = arith.constant 2.000000e+00 : f32
    %257 = vector.broadcast %cst_100 : f32 to vector<16x16xf32>
    %258 = arith.mulf %257, %256 : vector<16x16xf32>
    %259 = vector.broadcast %255 : vector<16x1xf32> to vector<16x16xf32>
    %260 = arith.subf %258, %259 : vector<16x16xf32>
    %261 = tpu.transpose %255, [1, 0] : vector<16x1xf32> -> vector<1x16xf32>
    %262 = vector.broadcast %261 : vector<1x16xf32> to vector<16x16xf32>
    %263 = arith.subf %260, %262 : vector<16x16xf32>
    %cst_101 = arith.constant dense<0.000000e+00> : vector<16x256xf32>
    %264 = tpu.matmul %248, %249, %cst_101 {dimension_numbers = #tpu.dot_dimension_numbers<[1], [0], [0], [1], [0, 0, 1, 1], [], []>} : vector<16x128xbf16>, vector<128x256xbf16>, vector<16x256xf32> -> vector<16x256xf32>
    %cst_102 = arith.constant dense<0.000000e+00> : vector<16x256xf32>
    %265 = tpu.matmul %248, %250, %cst_102 {dimension_numbers = #tpu.dot_dimension_numbers<[1], [0], [0], [1], [0, 0, 1, 1], [], []>} : vector<16x128xbf16>, vector<128x256xbf16>, vector<16x256xf32> -> vector<16x256xf32>
    %266 = vector.broadcast %251 : vector<1x256xf32> to vector<16x256xf32>
    %267 = arith.addf %265, %266 : vector<16x256xf32>
    %268 = arith.truncf %264 : vector<16x256xf32> to vector<16x256xbf16>
    %269 = tpu.bitcast %263 : vector<16x16xf32> -> vector<16x16xi32>
    %c0_i32_103 = arith.constant 0 : i32
    %270 = vector.broadcast %c0_i32_103 : i32 to vector<16x16xi32>
    %271 = arith.cmpi slt, %269, %270 : vector<16x16xi32>
    %c2147483647_i32_104 = arith.constant 2147483647 : i32
    %272 = vector.broadcast %c2147483647_i32_104 : i32 to vector<16x16xi32>
    %273 = arith.xori %269, %272 : vector<16x16xi32>
    %274 = arith.select %271, %273, %269 : vector<16x16xi1>, vector<16x16xi32>
    %275 = tpu.iota {dimensions = array<i32: 1>} : vector<16x16xi32>
    %c-16_i32_105 = arith.constant -16 : i32
    %276 = vector.broadcast %c-16_i32_105 : i32 to vector<16x16xi32>
    %277 = arith.andi %274, %276 : vector<16x16xi32>
    %c15_i32_106 = arith.constant 15 : i32
    %278 = vector.broadcast %c15_i32_106 : i32 to vector<16x16xi32>
    %279 = arith.subi %278, %275 : vector<16x16xi32>
    %280 = arith.ori %277, %279 : vector<16x16xi32>
    %cst_107 = arith.constant 0xFF800000 : f32
    %281 = vector.broadcast %cst_107 : f32 to vector<16x256xf32>
    %c0_i32_108 = arith.constant 0 : i32
    %cst_109 = arith.constant dense<-2147483648> : vector<16xi32>
    %282 = vector.multi_reduction <maxsi>, %280, %cst_109 [1] : vector<16x16xi32> to vector<16xi32>
    %283 = vector.shape_cast %282 : vector<16xi32> to vector<16x1xi32>
    %284 = vector.broadcast %283 : vector<16x1xi32> to vector<16x16xi32>
    %285 = arith.cmpi eq, %280, %284 : vector<16x16xi32>
    %286 = arith.extui %285 : vector<16x16xi1> to vector<16x16xi32>
    %287 = arith.sitofp %286 : vector<16x16xi32> to vector<16x16xf32>
    %288 = arith.truncf %287 : vector<16x16xf32> to vector<16x16xbf16>
    %cst_110 = arith.constant dense<0.000000e+00> : vector<16x256xf32>
    %289 = tpu.matmul %288, %268, %cst_110 {dimension_numbers = #tpu.dot_dimension_numbers<[1], [0], [0], [1], [0, 0, 1, 1], [], []>} : vector<16x16xbf16>, vector<16x256xbf16>, vector<16x256xf32> -> vector<16x256xf32>
    %290 = arith.maximumf %281, %289 : vector<16x256xf32>
    %c-2147483648_i32_111 = arith.constant -2147483648 : i32
    %291 = vector.broadcast %c-2147483648_i32_111 : i32 to vector<16x16xi32>
    %292 = arith.select %285, %291, %280 : vector<16x16xi1>, vector<16x16xi32>
    %c1_i32_112 = arith.constant 1 : i32
    %cst_113 = arith.constant dense<-2147483648> : vector<16xi32>
    %293 = vector.multi_reduction <maxsi>, %292, %cst_113 [1] : vector<16x16xi32> to vector<16xi32>
    %294 = vector.shape_cast %293 : vector<16xi32> to vector<16x1xi32>
    %295 = vector.broadcast %294 : vector<16x1xi32> to vector<16x16xi32>
    %296 = arith.cmpi eq, %292, %295 : vector<16x16xi32>
    %297 = arith.extui %296 : vector<16x16xi1> to vector<16x16xi32>
    %298 = arith.sitofp %297 : vector<16x16xi32> to vector<16x16xf32>
    %299 = arith.truncf %298 : vector<16x16xf32> to vector<16x16xbf16>
    %cst_114 = arith.constant dense<0.000000e+00> : vector<16x256xf32>
    %300 = tpu.matmul %299, %268, %cst_114 {dimension_numbers = #tpu.dot_dimension_numbers<[1], [0], [0], [1], [0, 0, 1, 1], [], []>} : vector<16x16xbf16>, vector<16x256xbf16>, vector<16x256xf32> -> vector<16x256xf32>
    %301 = arith.maximumf %290, %300 : vector<16x256xf32>
    %c-2147483648_i32_115 = arith.constant -2147483648 : i32
    %302 = vector.broadcast %c-2147483648_i32_115 : i32 to vector<16x16xi32>
    %303 = arith.select %296, %302, %292 : vector<16x16xi1>, vector<16x16xi32>
    %c2_i32_116 = arith.constant 2 : i32
    %cst_117 = arith.constant dense<-2147483648> : vector<16xi32>
    %304 = vector.multi_reduction <maxsi>, %303, %cst_117 [1] : vector<16x16xi32> to vector<16xi32>
    %305 = vector.shape_cast %304 : vector<16xi32> to vector<16x1xi32>
    %306 = vector.broadcast %305 : vector<16x1xi32> to vector<16x16xi32>
    %307 = arith.cmpi eq, %303, %306 : vector<16x16xi32>
    %308 = arith.extui %307 : vector<16x16xi1> to vector<16x16xi32>
    %309 = arith.sitofp %308 : vector<16x16xi32> to vector<16x16xf32>
    %310 = arith.truncf %309 : vector<16x16xf32> to vector<16x16xbf16>
    %cst_118 = arith.constant dense<0.000000e+00> : vector<16x256xf32>
    %311 = tpu.matmul %310, %268, %cst_118 {dimension_numbers = #tpu.dot_dimension_numbers<[1], [0], [0], [1], [0, 0, 1, 1], [], []>} : vector<16x16xbf16>, vector<16x256xbf16>, vector<16x256xf32> -> vector<16x256xf32>
    %312 = arith.maximumf %301, %311 : vector<16x256xf32>
    %c-2147483648_i32_119 = arith.constant -2147483648 : i32
    %313 = vector.broadcast %c-2147483648_i32_119 : i32 to vector<16x16xi32>
    %314 = arith.select %307, %313, %303 : vector<16x16xi1>, vector<16x16xi32>
    %c3_i32_120 = arith.constant 3 : i32
    %cst_121 = arith.constant dense<-2147483648> : vector<16xi32>
    %315 = vector.multi_reduction <maxsi>, %314, %cst_121 [1] : vector<16x16xi32> to vector<16xi32>
    %316 = vector.shape_cast %315 : vector<16xi32> to vector<16x1xi32>
    %317 = vector.broadcast %316 : vector<16x1xi32> to vector<16x16xi32>
    %318 = arith.cmpi eq, %314, %317 : vector<16x16xi32>
    %319 = arith.extui %318 : vector<16x16xi1> to vector<16x16xi32>
    %320 = arith.sitofp %319 : vector<16x16xi32> to vector<16x16xf32>
    %321 = arith.truncf %320 : vector<16x16xf32> to vector<16x16xbf16>
    %cst_122 = arith.constant dense<0.000000e+00> : vector<16x256xf32>
    %322 = tpu.matmul %321, %268, %cst_122 {dimension_numbers = #tpu.dot_dimension_numbers<[1], [0], [0], [1], [0, 0, 1, 1], [], []>} : vector<16x16xbf16>, vector<16x256xbf16>, vector<16x256xf32> -> vector<16x256xf32>
    %323 = arith.maximumf %312, %322 : vector<16x256xf32>
    %c-2147483648_i32_123 = arith.constant -2147483648 : i32
    %324 = vector.broadcast %c-2147483648_i32_123 : i32 to vector<16x16xi32>
    %325 = arith.select %318, %324, %314 : vector<16x16xi1>, vector<16x16xi32>
    %326 = arith.addf %323, %267 : vector<16x256xf32>
    %cst_124 = arith.constant 2.000000e-01 : f32
    %327 = vector.broadcast %cst_124 : f32 to vector<16x256xf32>
    %328 = arith.mulf %327, %326 : vector<16x256xf32>
    %329 = arith.maximumf %326, %328 : vector<16x256xf32>
    %330 = arith.truncf %329 : vector<16x256xf32> to vector<16x256xbf16>
    %c0_125 = arith.constant 0 : index
    %c0_126 = arith.constant 0 : index
    %331 = vector.load %arg14[%c0_125, %c0_126] : memref<64x64xbf16, #tpu.memory_space<vmem>>, vector<64x64xbf16>
    %cst_127 = arith.constant dense<0.000000e+00> : vector<16x64xf32>
    %332 = tpu.matmul %84, %331, %cst_127 {dimension_numbers = #tpu.dot_dimension_numbers<[1], [0], [0], [1], [0, 0, 1, 1], [], []>} : vector<16x64xbf16>, vector<64x64xbf16>, vector<16x64xf32> -> vector<16x64xf32>
    %c0_128 = arith.constant 0 : index
    %c0_129 = arith.constant 0 : index
    %333 = vector.load %arg15[%c0_128, %c0_129] : memref<64x64xbf16, #tpu.memory_space<vmem>>, vector<64x64xbf16>
    %cst_130 = arith.constant dense<0.000000e+00> : vector<16x64xf32>
    %334 = tpu.matmul %166, %333, %cst_130 {dimension_numbers = #tpu.dot_dimension_numbers<[1], [0], [0], [1], [0, 0, 1, 1], [], []>} : vector<16x64xbf16>, vector<64x64xbf16>, vector<16x64xf32> -> vector<16x64xf32>
    %335 = arith.addf %332, %334 : vector<16x64xf32>
    %c0_131 = arith.constant 0 : index
    %c0_132 = arith.constant 0 : index
    %336 = vector.load %arg16[%c0_131, %c0_132] : memref<128x64xbf16, #tpu.memory_space<vmem>>, vector<128x64xbf16>
    %cst_133 = arith.constant dense<0.000000e+00> : vector<16x64xf32>
    %337 = tpu.matmul %248, %336, %cst_133 {dimension_numbers = #tpu.dot_dimension_numbers<[1], [0], [0], [1], [0, 0, 1, 1], [], []>} : vector<16x128xbf16>, vector<128x64xbf16>, vector<16x64xf32> -> vector<16x64xf32>
    %338 = arith.addf %335, %337 : vector<16x64xf32>
    %c0_134 = arith.constant 0 : index
    %c0_135 = arith.constant 0 : index
    %339 = vector.load %arg17[%c0_134, %c0_135] : memref<256x64xbf16, #tpu.memory_space<vmem>>, vector<256x64xbf16>
    %cst_136 = arith.constant dense<0.000000e+00> : vector<16x64xf32>
    %340 = tpu.matmul %330, %339, %cst_136 {dimension_numbers = #tpu.dot_dimension_numbers<[1], [0], [0], [1], [0, 0, 1, 1], [], []>} : vector<16x256xbf16>, vector<256x64xbf16>, vector<16x64xf32> -> vector<16x64xf32>
    %341 = arith.addf %338, %340 : vector<16x64xf32>
    %c0_137 = arith.constant 0 : index
    %c0_138 = arith.constant 0 : index
    %342 = vector.load %arg18[%c0_137, %c0_138] : memref<1x64xf32, #tpu.memory_space<vmem>>, vector<1x64xf32>
    %343 = vector.broadcast %342 : vector<1x64xf32> to vector<16x64xf32>
    %344 = arith.addf %341, %343 : vector<16x64xf32>
    %cst_139 = arith.constant 2.000000e-01 : f32
    %345 = vector.broadcast %cst_139 : f32 to vector<16x64xf32>
    %346 = arith.mulf %345, %344 : vector<16x64xf32>
    %347 = arith.maximumf %344, %346 : vector<16x64xf32>
    %cst_140 = arith.constant dense<0xFF800000> : vector<64xf32>
    %348 = vector.multi_reduction <maximumf>, %347, %cst_140 [0] : vector<16x64xf32> to vector<64xf32>
    %349 = vector.shape_cast %348 : vector<64xf32> to vector<1x64xf32>
    %cst_141 = arith.constant dense<0.000000e+00> : vector<64xf32>
    %350 = vector.multi_reduction <add>, %347, %cst_141 [0] : vector<16x64xf32> to vector<64xf32>
    %351 = vector.shape_cast %350 : vector<64xf32> to vector<1x64xf32>
    %cst_142 = arith.constant 1.600000e+01 : f32
    %352 = vector.broadcast %cst_142 : f32 to vector<1x64xf32>
    %353 = arith.divf %351, %352 : vector<1x64xf32>
    %354 = tpu.concatenate %349, %353 in 1 : vector<1x64xf32>, vector<1x64xf32> -> vector<1x128xf32>
    %c0_143 = arith.constant 0 : index
    %c0_144 = arith.constant 0 : index
    %c0_145 = arith.constant 0 : index
    %355 = vector.load %arg19[%c0_143, %c0_144, %c0_145] : memref<1x1x128xf32, #tpu.memory_space<vmem>>, vector<1x1x128xf32>
    %356 = vector.shape_cast %355 : vector<1x1x128xf32> to vector<1x128xf32>
    %357 = vector.shape_cast %354 : vector<1x128xf32> to vector<1x1x128xf32>
    tpu.vector_store %arg19[%c0_143, %c0_144, %c0_145], %357 {strides = array<i32>} : memref<1x1x128xf32, #tpu.memory_space<vmem>>, vector<1x1x128xf32>,
    return
  }
  func.func @transform_0(%arg0: i32) -> (i32, i32, i32) {
    %c0_i32 = arith.constant 0 : i32
    %c0_i32_0 = arith.constant 0 : i32
    %c0_i32_1 = arith.constant 0 : i32
    return %arg0, %c0_i32, %c0_i32_0 : i32, i32, i32
  }
  func.func @transform_1(%arg0: i32) -> (i32, i32) {
    %c0_i32 = arith.constant 0 : i32
    %c0_i32_0 = arith.constant 0 : i32
    %c0_i32_1 = arith.constant 0 : i32
    return %c0_i32, %c0_i32_0 : i32, i32
  }
  func.func @transform_2(%arg0: i32) -> (i32, i32) {
    %c0_i32 = arith.constant 0 : i32
    %c0_i32_0 = arith.constant 0 : i32
    %c0_i32_1 = arith.constant 0 : i32
    return %c0_i32, %c0_i32_0 : i32, i32
  }
  func.func @transform_3(%arg0: i32) -> (i32, i32) {
    %c0_i32 = arith.constant 0 : i32
    %c0_i32_0 = arith.constant 0 : i32
    %c0_i32_1 = arith.constant 0 : i32
    return %c0_i32, %c0_i32_0 : i32, i32
  }
  func.func @transform_4(%arg0: i32) -> (i32, i32) {
    %c0_i32 = arith.constant 0 : i32
    %c0_i32_0 = arith.constant 0 : i32
    %c0_i32_1 = arith.constant 0 : i32
    return %c0_i32, %c0_i32_0 : i32, i32
  }
  func.func @transform_5(%arg0: i32) -> (i32, i32) {
    %c0_i32 = arith.constant 0 : i32
    %c0_i32_0 = arith.constant 0 : i32
    %c0_i32_1 = arith.constant 0 : i32
    return %c0_i32, %c0_i32_0 : i32, i32
  }
  func.func @transform_6(%arg0: i32) -> (i32, i32) {
    %c0_i32 = arith.constant 0 : i32
    %c0_i32_0 = arith.constant 0 : i32
    %c0_i32_1 = arith.constant 0 : i32
    return %c0_i32, %c0_i32_0 : i32, i32
  }
  func.func @transform_7(%arg0: i32) -> (i32, i32) {
    %c0_i32 = arith.constant 0 : i32
    %c0_i32_0 = arith.constant 0 : i32
    %c0_i32_1 = arith.constant 0 : i32
    return %c0_i32, %c0_i32_0 : i32, i32
  }
  func.func @transform_8(%arg0: i32) -> (i32, i32) {
    %c0_i32 = arith.constant 0 : i32
    %c0_i32_0 = arith.constant 0 : i32
    %c0_i32_1 = arith.constant 0 : i32
    return %c0_i32, %c0_i32_0 : i32, i32
  }
  func.func @transform_9(%arg0: i32) -> (i32, i32) {
    %c0_i32 = arith.constant 0 : i32
    %c0_i32_0 = arith.constant 0 : i32
    %c0_i32_1 = arith.constant 0 : i32
    return %c0_i32, %c0_i32_0 : i32, i32
  }
  func.func @transform_10(%arg0: i32) -> (i32, i32) {
    %c0_i32 = arith.constant 0 : i32
    %c0_i32_0 = arith.constant 0 : i32
    %c0_i32_1 = arith.constant 0 : i32
    return %c0_i32, %c0_i32_0 : i32, i32
  }
  func.func @transform_11(%arg0: i32) -> (i32, i32) {
    %c0_i32 = arith.constant 0 : i32
    %c0_i32_0 = arith.constant 0 : i32
    %c0_i32_1 = arith.constant 0 : i32
    return %c0_i32, %c0_i32_0 : i32, i32
  }
  func.func @transform_12(%arg0: i32) -> (i32, i32) {
    %c0_i32 = arith.constant 0 : i32
    %c0_i32_0 = arith.constant 0 : i32
    %c0_i32_1 = arith.constant 0 : i32
    return %c0_i32, %c0_i32_0 : i32, i32
  }
  func.func @transform_13(%arg0: i32) -> (i32, i32) {
    %c0_i32 = arith.constant 0 : i32
    %c0_i32_0 = arith.constant 0 : i32
    %c0_i32_1 = arith.constant 0 : i32
    return %c0_i32, %c0_i32_0 : i32, i32
  }
  func.func @transform_14(%arg0: i32) -> (i32, i32) {
    %c0_i32 = arith.constant 0 : i32
    %c0_i32_0 = arith.constant 0 : i32
    %c0_i32_1 = arith.constant 0 : i32
    return %c0_i32, %c0_i32_0 : i32, i32
  }
  func.func @transform_15(%arg0: i32) -> (i32, i32) {
    %c0_i32 = arith.constant 0 : i32
    %c0_i32_0 = arith.constant 0 : i32
    %c0_i32_1 = arith.constant 0 : i32
    return %c0_i32, %c0_i32_0 : i32, i32
  }
  func.func @transform_16(%arg0: i32) -> (i32, i32) {
    %c0_i32 = arith.constant 0 : i32
    %c0_i32_0 = arith.constant 0 : i32
    %c0_i32_1 = arith.constant 0 : i32
    return %c0_i32, %c0_i32_0 : i32, i32
  }
  func.func @transform_17(%arg0: i32) -> (i32, i32) {
    %c0_i32 = arith.constant 0 : i32
    %c0_i32_0 = arith.constant 0 : i32
    %c0_i32_1 = arith.constant 0 : i32
    return %c0_i32, %c0_i32_0 : i32, i32
  }
  func.func @transform_18(%arg0: i32) -> (i32, i32, i32) {
    %c0_i32 = arith.constant 0 : i32
    %c0_i32_0 = arith.constant 0 : i32
    %c0_i32_1 = arith.constant 0 : i32
    return %arg0, %c0_i32, %c0_i32_0 : i32, i32, i32
  }
}

</mosaic_0001>

<llo_original>
// kernel: tpu_custom_call.1
$region0: #{tpu_custom_call.1}
  #allocation0 [shape = 'u32[]', space=smem, size = 0x4, offset = 0x4, fixed_abs, tag = 'smem constant byte address 0x4 - core index']
  #allocation1 [shape = 'u32[144,128]{1,0:T(1,128)}', space=vmem, size = 0x12000, scoped, tag = 'internal scratch']
  %s0 = inlined_call_operand.vmem [shape: f32[2,16,3], index: 0, kind: input, shape index: {}]
  %s1 = inlined_call_operand.hbm [shape: bf16[3,64], index: 1, kind: input, shape index: {}]
  %s2 = inlined_call_operand.hbm [shape: bf16[3,64], index: 2, kind: input, shape index: {}]
  %s3 = inlined_call_operand.hbm [shape: f32[1,64], index: 3, kind: input, shape index: {}]
  %s4 = inlined_call_operand.hbm [shape: bf16[64,64], index: 4, kind: input, shape index: {}]
  %s5 = inlined_call_operand.hbm [shape: bf16[64,64], index: 5, kind: input, shape index: {}]
  %s6 = inlined_call_operand.hbm [shape: f32[1,64], index: 6, kind: input, shape index: {}]
  %s7 = inlined_call_operand.hbm [shape: bf16[64,128], index: 7, kind: input, shape index: {}]
  %s8 = inlined_call_operand.hbm [shape: bf16[64,128], index: 8, kind: input, shape index: {}]
  %s9 = inlined_call_operand.vmem [shape: f32[1,128], index: 9, kind: input, shape index: {}]
  %s10 = inlined_call_operand.vmem [shape: bf16[128,256], index: 10, kind: input, shape index: {}]
  %s11 = inlined_call_operand.vmem [shape: bf16[128,256], index: 11, kind: input, shape index: {}]
  %s12 = inlined_call_operand.vmem [shape: f32[1,256], index: 12, kind: input, shape index: {}]
  %s13 = inlined_call_operand.hbm [shape: bf16[64,64], index: 13, kind: input, shape index: {}]
  %s14 = inlined_call_operand.hbm [shape: bf16[64,64], index: 14, kind: input, shape index: {}]
  %s15 = inlined_call_operand.vmem [shape: bf16[128,64], index: 15, kind: input, shape index: {}]
  %s16 = inlined_call_operand.vmem [shape: bf16[256,64], index: 16, kind: input, shape index: {}]
  %s17 = inlined_call_operand.vmem [shape: f32[1,64], index: 17, kind: input, shape index: {}]
  %s18 = inlined_call_operand.hbm [shape: f32[2,1,128], index: 18, kind: output, shape index: {}]
  %s19 = sld [smem:[#allocation0]]
  $region145: #{tpu_custom_call.1} parent=0
    _
  %s21 = ssub.s32 1, %s19
  %s22 = scalar_select 0, %s21, %s19
  $region1: #{tpu_custom_call.1} parent=0
    #allocation2 [shape = 'u8[1024]{0}', space=vmem, size = 0x400, scoped, tag = 'input window, operand 1, single buffered']
    #allocation3 [shape = 's32[2]{0}', space=sflag, size = 0x8, scoped, tag = 'scoped memory for tpu_custom_call.1']
    #allocation4 [shape = 's32[2]{0}', space=sflag, size = 0x8, scoped, tag = 'scoped memory for tpu_custom_call.1']
    #allocation5 [shape = 'u8[1024]{0}', space=vmem, size = 0x400, scoped, tag = 'input window, operand 2, single buffered']
    #allocation6 [shape = 's32[1]{0}', space=sflag, size = 0x4, scoped, tag = 'scoped memory for tpu_custom_call.1']
    #allocation7 [shape = 'u8[512]{0}', space=vmem, size = 0x400, scoped, tag = 'input window, operand 3, single buffered']
    #allocation8 [shape = 'u8[16384]{0}', space=vmem, size = 0x4000, scoped, tag = 'input window, operand 4, single buffered']
    #allocation9 [shape = 's32[1]{0}', space=sflag, size = 0x4, scoped, tag = 'scoped memory for tpu_custom_call.1']
    #allocation10 [shape = 'u8[16384]{0}', space=vmem, size = 0x4000, scoped, tag = 'input window, operand 5, single buffered']
    #allocation11 [shape = 'u8[512]{0}', space=vmem, size = 0x400, scoped, tag = 'input window, operand 6, single buffered']
    #allocation12 [shape = 's32[1]{0}', space=sflag, size = 0x4, scoped, tag = 'scoped memory for tpu_custom_call.1']
    #allocation13 [shape = 'u8[16384]{0}', space=vmem, size = 0x4000, scoped, tag = 'input window, operand 7, single buffered']
    #allocation14 [shape = 'u8[16384]{0}', space=vmem, size = 0x4000, scoped, tag = 'input window, operand 8, single buffered']
    #allocation15 [shape = 's32[1]{0}', space=sflag, size = 0x4, scoped, tag = 'scoped memory for tpu_custom_call.1']
    #allocation16 [shape = 'u8[16384]{0}', space=vmem, size = 0x4000, scoped, tag = 'input window, operand 13, single buffered']
    #allocation17 [shape = 'u8[16384]{0}', space=vmem, size = 0x4000, scoped, tag = 'input window, operand 14, single buffered']
    #allocation18 [shape = 's32[1]{0}', space=sflag, size = 0x4, scoped, tag = 'scoped memory for tpu_custom_call.1']
    #allocation19 [shape = 'u8[1024]{0}', space=vmem, size = 0x400, scoped, tag = 'output window, operand 0']
    %23 = vsyncpa [#allocation3], 0
    %24 = vsyncpa [#allocation6], 0
    %25 = vsyncpa [#allocation9], 0
    %26 = vsyncpa [#allocation12], 0
    %27 = vsyncpa [#allocation15], 0
    %28 = vsyncpa [#allocation18], 0
    %29 = vsyncpa [#allocation4], 0
    %s30 = scalar_lea.sflag [#allocation4], 1
    %31 = vsyncpa %s30, 0
    loop: start=0, step=1, limit=4
    $region2: #{tpu_custom_call.1} parent=1 // loop_pre_header
      _
    $region3: #{tpu_custom_call.1} parent=1 // loop_header
      %s33 = sphi 0, %s37
      %p34 = scmp.ge.s32.totalorder %s33, 4
      %s43 = sphi 0, %s45
      %s46 = sphi 0, %s43
      %s47 = sphi 0, %s46
      %s63 = sphi 0, %s47
      %s67 = sphi 0, %s67
      %s69 = sphi 0, %s67
      %s70 = sphi 0, %s69
      %s84 = sphi 0, %s70
      %s88 = sphi 0, %s88
      %s90 = sphi 0, %s88
      %s91 = sphi 0, %s90
      %s105 = sphi 0, %s91
      %s109 = sphi 0, %s109
      %s111 = sphi 0, %s109
      %s112 = sphi 0, %s111
      %s126 = sphi 0, %s112
      %s130 = sphi 0, %s130
      %s132 = sphi 0, %s130
      %s133 = sphi 0, %s132
      %s147 = sphi 0, %s133
      %s151 = sphi 0, %s151
      %s153 = sphi 0, %s151
      %s154 = sphi 0, %s153
      %s168 = sphi 0, %s154
      %s172 = sphi 0, %s172
      %s174 = sphi 0, %s172
      %s175 = sphi 0, %s174
      %s189 = sphi 0, %s175
      %s193 = sphi 0, %s193
      %s195 = sphi 0, %s193
      %s196 = sphi 0, %s195
      %s210 = sphi 0, %s196
      %s214 = sphi 0, %s214
      %s216 = sphi 0, %s214
      %s217 = sphi 0, %s216
      %s231 = sphi 0, %s217
      %s235 = sphi 0, %s235
      %s237 = sphi 0, %s235
      %s238 = sphi 0, %s237
      %s252 = sphi 0, %s238
      %s256 = sphi 0, %s256
      %s258 = sphi 0, %s256
      %s259 = sphi 0, %s258
      %s273 = sphi 0, %s259
      %s277 = sphi 0, %s277
      %s279 = sphi 0, %s277
      %s280 = sphi 0, %s279
      %s294 = sphi 0, %s280
      %s298 = sphi 0, %s298
      %s300 = sphi 0, %s298
      %s301 = sphi 0, %s300
      %s315 = sphi 0, %s301
      %s319 = sphi 0, %s319
      %s321 = sphi 0, %s319
      %s322 = sphi 0, %s321
      %s336 = sphi 0, %s322
      %s340 = sphi 0, %s340
      %s342 = sphi 0, %s340
      %s343 = sphi 0, %s342
      %s357 = sphi 0, %s343
      %s361 = sphi 0, %s361
      %s363 = sphi 0, %s361
      %s364 = sphi 0, %s363
      %s378 = sphi 0, %s364
      %s382 = sphi 0, %s382
      %s384 = sphi 0, %s382
      %s385 = sphi 0, %s384
      %s399 = sphi 0, %s385
      %s403 = sphi 0, %s403
      %s405 = sphi 0, %s403
      %s406 = sphi 0, %s405
      %s420 = sphi 0, %s406
      %s426 = sphi 0, %s428
      %s429 = sphi 0, %s426
      %s430 = sphi 0, %s429
      %s446 = sphi 0, %s430
    $region4: #{tpu_custom_call.1} parent=1 // loop_header_branch
      %36 = sbr.rel (%p34) target = $region8
    $region5: #{tpu_custom_call.1} parent=1 // loop_body
      %s38 = ssub.s32 %s33, 1
      %s39 = ssub.s32 %s33, 2
      %s40 = sadd.s32 %s33, 1
      %s41 = ssub.s32 %s33, %s40
      %p42 = scmp.eq.s32.totalorder %s41, 0
      %s44 = sadd.s32 %s43, 1
      %s45 = scalar_select %p42, %s43, %s44
      %p48 = pneg %p42
      %p49 = scmp.eq.s32.totalorder %s33, 1
      %p50 = por %p48, %p49
      %p51 = scmp.ne.s32.totalorder %s43, %s46
      %p52 = scmp.eq.s32.totalorder %s33, 0
      %p53 = por %p51, %p52
      %p54 = scmp.ne.s32.totalorder %s43, %s46
      %p55 = scmp.eq.s32.totalorder %s38, 1
      %p56 = por %p54, %p55
      %p57 = scmp.ne.s32.totalorder %s46, %s47
      %p58 = scmp.eq.s32.totalorder %s38, 0
      %p59 = por %p57, %p58
      %p60 = scmp.ne.s32.totalorder %s46, %s47
      %p61 = scmp.eq.s32.totalorder %s39, 1
      %p62 = por %p60, %p61
      %p64 = scmp.ne.s32.totalorder %s47, %s63
      %p65 = scmp.eq.s32.totalorder %s39, 0
      %p66 = por %p64, %p65
      %s68 = sadd.s32 %s67, 1
      %p71 = scmp.eq.s32.totalorder %s33, 1
      %p72 = scmp.ne.s32.totalorder %s67, %s69
      %p73 = scmp.eq.s32.totalorder %s33, 0
      %p74 = por %p72, %p73
      %p75 = scmp.ne.s32.totalorder %s67, %s69
      %p76 = scmp.eq.s32.totalorder %s38, 1
      %p77 = por %p75, %p76
      %p78 = scmp.ne.s32.totalorder %s69, %s70
      %p79 = scmp.eq.s32.totalorder %s38, 0
      %p80 = por %p78, %p79
      %p81 = scmp.ne.s32.totalorder %s69, %s70
      %p82 = scmp.eq.s32.totalorder %s39, 1
      %p83 = por %p81, %p82
      %p85 = scmp.ne.s32.totalorder %s70, %s84
      %p86 = scmp.eq.s32.totalorder %s39, 0
      %p87 = por %p85, %p86
      %s89 = sadd.s32 %s88, 1
      %p92 = scmp.eq.s32.totalorder %s33, 1
      %p93 = scmp.ne.s32.totalorder %s88, %s90
      %p94 = scmp.eq.s32.totalorder %s33, 0
      %p95 = por %p93, %p94
      %p96 = scmp.ne.s32.totalorder %s88, %s90
      %p97 = scmp.eq.s32.totalorder %s38, 1
      %p98 = por %p96, %p97
      %p99 = scmp.ne.s32.totalorder %s90, %s91
      %p100 = scmp.eq.s32.totalorder %s38, 0
      %p101 = por %p99, %p100
      %p102 = scmp.ne.s32.totalorder %s90, %s91
      %p103 = scmp.eq.s32.totalorder %s39, 1
      %p104 = por %p102, %p103
      %p106 = scmp.ne.s32.totalorder %s91, %s105
      %p107 = scmp.eq.s32.totalorder %s39, 0
      %p108 = por %p106, %p107
      %s110 = sadd.s32 %s109, 1
      %p113 = scmp.eq.s32.totalorder %s33, 1
      %p114 = scmp.ne.s32.totalorder %s109, %s111
      %p115 = scmp.eq.s32.totalorder %s33, 0
      %p116 = por %p114, %p115
      %p117 = scmp.ne.s32.totalorder %s109, %s111
      %p118 = scmp.eq.s32.totalorder %s38, 1
      %p119 = por %p117, %p118
      %p120 = scmp.ne.s32.totalorder %s111, %s112
      %p121 = scmp.eq.s32.totalorder %s38, 0
      %p122 = por %p120, %p121
      %p123 = scmp.ne.s32.totalorder %s111, %s112
      %p124 = scmp.eq.s32.totalorder %s39, 1
      %p125 = por %p123, %p124
      %p127 = scmp.ne.s32.totalorder %s112, %s126
      %p128 = scmp.eq.s32.totalorder %s39, 0
      %p129 = por %p127, %p128
      %s131 = sadd.s32 %s130, 1
      %p134 = scmp.eq.s32.totalorder %s33, 1
      %p135 = scmp.ne.s32.totalorder %s130, %s132
      %p136 = scmp.eq.s32.totalorder %s33, 0
      %p137 = por %p135, %p136
      %p138 = scmp.ne.s32.totalorder %s130, %s132
      %p139 = scmp.eq.s32.totalorder %s38, 1
      %p140 = por %p138, %p139
      %p141 = scmp.ne.s32.totalorder %s132, %s133
      %p142 = scmp.eq.s32.totalorder %s38, 0
      %p143 = por %p141, %p142
      %p144 = scmp.ne.s32.totalorder %s132, %s133
      %p145 = scmp.eq.s32.totalorder %s39, 1
      %p146 = por %p144, %p145
      %p148 = scmp.ne.s32.totalorder %s133, %s147
      %p149 = scmp.eq.s32.totalorder %s39, 0
      %p150 = por %p148, %p149
      %s152 = sadd.s32 %s151, 1
      %p155 = scmp.eq.s32.totalorder %s33, 1
      %p156 = scmp.ne.s32.totalorder %s151, %s153
      %p157 = scmp.eq.s32.totalorder %s33, 0
      %p158 = por %p156, %p157
      %p159 = scmp.ne.s32.totalorder %s151, %s153
      %p160 = scmp.eq.s32.totalorder %s38, 1
      %p161 = por %p159, %p160
      %p162 = scmp.ne.s32.totalorder %s153, %s154
      %p163 = scmp.eq.s32.totalorder %s38, 0
      %p164 = por %p162, %p163
      %p165 = scmp.ne.s32.totalorder %s153, %s154
      %p166 = scmp.eq.s32.totalorder %s39, 1
      %p167 = por %p165, %p166
      %p169 = scmp.ne.s32.totalorder %s154, %s168
      %p170 = scmp.eq.s32.totalorder %s39, 0
      %p171 = por %p169, %p170
      %s173 = sadd.s32 %s172, 1
      %p176 = scmp.eq.s32.totalorder %s33, 1
      %p177 = scmp.ne.s32.totalorder %s172, %s174
      %p178 = scmp.eq.s32.totalorder %s33, 0
      %p179 = por %p177, %p178
      %p180 = scmp.ne.s32.totalorder %s172, %s174
      %p181 = scmp.eq.s32.totalorder %s38, 1
      %p182 = por %p180, %p181
      %p183 = scmp.ne.s32.totalorder %s174, %s175
      %p184 = scmp.eq.s32.totalorder %s38, 0
      %p185 = por %p183, %p184
      %p186 = scmp.ne.s32.totalorder %s174, %s175
      %p187 = scmp.eq.s32.totalorder %s39, 1
      %p188 = por %p186, %p187
      %p190 = scmp.ne.s32.totalorder %s175, %s189
      %p191 = scmp.eq.s32.totalorder %s39, 0
      %p192 = por %p190, %p191
      %s194 = sadd.s32 %s193, 1
      %p197 = scmp.eq.s32.totalorder %s33, 1
      %p198 = scmp.ne.s32.totalorder %s193, %s195
      %p199 = scmp.eq.s32.totalorder %s33, 0
      %p200 = por %p198, %p199
      %p201 = scmp.ne.s32.totalorder %s193, %s195
      %p202 = scmp.eq.s32.totalorder %s38, 1
      %p203 = por %p201, %p202
      %p204 = scmp.ne.s32.totalorder %s195, %s196
      %p205 = scmp.eq.s32.totalorder %s38, 0
      %p206 = por %p204, %p205
      %p207 = scmp.ne.s32.totalorder %s195, %s196
      %p208 = scmp.eq.s32.totalorder %s39, 1
      %p209 = por %p207, %p208
      %p211 = scmp.ne.s32.totalorder %s196, %s210
      %p212 = scmp.eq.s32.totalorder %s39, 0
      %p213 = por %p211, %p212
      %s215 = sadd.s32 %s214, 1
      %p218 = scmp.eq.s32.totalorder %s33, 1
      %p219 = scmp.ne.s32.totalorder %s214, %s216
      %p220 = scmp.eq.s32.totalorder %s33, 0
      %p221 = por %p219, %p220
      %p222 = scmp.ne.s32.totalorder %s214, %s216
      %p223 = scmp.eq.s32.totalorder %s38, 1
      %p224 = por %p222, %p223
      %p225 = scmp.ne.s32.totalorder %s216, %s217
      %p226 = scmp.eq.s32.totalorder %s38, 0
      %p227 = por %p225, %p226
      %p228 = scmp.ne.s32.totalorder %s216, %s217
      %p229 = scmp.eq.s32.totalorder %s39, 1
      %p230 = por %p228, %p229
      %p232 = scmp.ne.s32.totalorder %s217, %s231
      %p233 = scmp.eq.s32.totalorder %s39, 0
      %p234 = por %p232, %p233
      %s236 = sadd.s32 %s235, 1
      %p239 = scmp.eq.s32.totalorder %s33, 1
      %p240 = scmp.ne.s32.totalorder %s235, %s237
      %p241 = scmp.eq.s32.totalorder %s33, 0
      %p242 = por %p240, %p241
      %p243 = scmp.ne.s32.totalorder %s235, %s237
      %p244 = scmp.eq.s32.totalorder %s38, 1
      %p245 = por %p243, %p244
      %p246 = scmp.ne.s32.totalorder %s237, %s238
      %p247 = scmp.eq.s32.totalorder %s38, 0
      %p248 = por %p246, %p247
      %p249 = scmp.ne.s32.totalorder %s237, %s238
      %p250 = scmp.eq.s32.totalorder %s39, 1
      %p251 = por %p249, %p250
      %p253 = scmp.ne.s32.totalorder %s238, %s252
      %p254 = scmp.eq.s32.totalorder %s39, 0
      %p255 = por %p253, %p254
      %s257 = sadd.s32 %s256, 1
      %p260 = scmp.eq.s32.totalorder %s33, 1
      %p261 = scmp.ne.s32.totalorder %s256, %s258
      %p262 = scmp.eq.s32.totalorder %s33, 0
      %p263 = por %p261, %p262
      %p264 = scmp.ne.s32.totalorder %s256, %s258
      %p265 = scmp.eq.s32.totalorder %s38, 1
      %p266 = por %p264, %p265
      %p267 = scmp.ne.s32.totalorder %s258, %s259
      %p268 = scmp.eq.s32.totalorder %s38, 0
      %p269 = por %p267, %p268
      %p270 = scmp.ne.s32.totalorder %s258, %s259
      %p271 = scmp.eq.s32.totalorder %s39, 1
      %p272 = por %p270, %p271
      %p274 = scmp.ne.s32.totalorder %s259, %s273
      %p275 = scmp.eq.s32.totalorder %s39, 0
      %p276 = por %p274, %p275
      %s278 = sadd.s32 %s277, 1
      %p281 = scmp.eq.s32.totalorder %s33, 1
      %p282 = scmp.ne.s32.totalorder %s277, %s279
      %p283 = scmp.eq.s32.totalorder %s33, 0
      %p284 = por %p282, %p283
      %p285 = scmp.ne.s32.totalorder %s277, %s279
      %p286 = scmp.eq.s32.totalorder %s38, 1
      %p287 = por %p285, %p286
      %p288 = scmp.ne.s32.totalorder %s279, %s280
      %p289 = scmp.eq.s32.totalorder %s38, 0
      %p290 = por %p288, %p289
      %p291 = scmp.ne.s32.totalorder %s279, %s280
      %p292 = scmp.eq.s32.totalorder %s39, 1
      %p293 = por %p291, %p292
      %p295 = scmp.ne.s32.totalorder %s280, %s294
      %p296 = scmp.eq.s32.totalorder %s39, 0
      %p297 = por %p295, %p296
      %s299 = sadd.s32 %s298, 1
      %p302 = scmp.eq.s32.totalorder %s33, 1
      %p303 = scmp.ne.s32.totalorder %s298, %s300
      %p304 = scmp.eq.s32.totalorder %s33, 0
      %p305 = por %p303, %p304
      %p306 = scmp.ne.s32.totalorder %s298, %s300
      %p307 = scmp.eq.s32.totalorder %s38, 1
      %p308 = por %p306, %p307
      %p309 = scmp.ne.s32.totalorder %s300, %s301
      %p310 = scmp.eq.s32.totalorder %s38, 0
      %p311 = por %p309, %p310
      %p312 = scmp.ne.s32.totalorder %s300, %s301
      %p313 = scmp.eq.s32.totalorder %s39, 1
      %p314 = por %p312, %p313
      %p316 = scmp.ne.s32.totalorder %s301, %s315
      %p317 = scmp.eq.s32.totalorder %s39, 0
      %p318 = por %p316, %p317
      %s320 = sadd.s32 %s319, 1
      %p323 = scmp.eq.s32.totalorder %s33, 1
      %p324 = scmp.ne.s32.totalorder %s319, %s321
      %p325 = scmp.eq.s32.totalorder %s33, 0
      %p326 = por %p324, %p325
      %p327 = scmp.ne.s32.totalorder %s319, %s321
      %p328 = scmp.eq.s32.totalorder %s38, 1
      %p329 = por %p327, %p328
      %p330 = scmp.ne.s32.totalorder %s321, %s322
      %p331 = scmp.eq.s32.totalorder %s38, 0
      %p332 = por %p330, %p331
      %p333 = scmp.ne.s32.totalorder %s321, %s322
      %p334 = scmp.eq.s32.totalorder %s39, 1
      %p335 = por %p333, %p334
      %p337 = scmp.ne.s32.totalorder %s322, %s336
      %p338 = scmp.eq.s32.totalorder %s39, 0
      %p339 = por %p337, %p338
      %s341 = sadd.s32 %s340, 1
      %p344 = scmp.eq.s32.totalorder %s33, 1
      %p345 = scmp.ne.s32.totalorder %s340, %s342
      %p346 = scmp.eq.s32.totalorder %s33, 0
      %p347 = por %p345, %p346
      %p348 = scmp.ne.s32.totalorder %s340, %s342
      %p349 = scmp.eq.s32.totalorder %s38, 1
      %p350 = por %p348, %p349
      %p351 = scmp.ne.s32.totalorder %s342, %s343
      %p352 = scmp.eq.s32.totalorder %s38, 0
      %p353 = por %p351, %p352
      %p354 = scmp.ne.s32.totalorder %s342, %s343
      %p355 = scmp.eq.s32.totalorder %s39, 1
      %p356 = por %p354, %p355
      %p358 = scmp.ne.s32.totalorder %s343, %s357
      %p359 = scmp.eq.s32.totalorder %s39, 0
      %p360 = por %p358, %p359
      %s362 = sadd.s32 %s361, 1
      %p365 = scmp.eq.s32.totalorder %s33, 1
      %p366 = scmp.ne.s32.totalorder %s361, %s363
      %p367 = scmp.eq.s32.totalorder %s33, 0
      %p368 = por %p366, %p367
      %p369 = scmp.ne.s32.totalorder %s361, %s363
      %p370 = scmp.eq.s32.totalorder %s38, 1
      %p371 = por %p369, %p370
      %p372 = scmp.ne.s32.totalorder %s363, %s364
      %p373 = scmp.eq.s32.totalorder %s38, 0
      %p374 = por %p372, %p373
      %p375 = scmp.ne.s32.totalorder %s363, %s364
      %p376 = scmp.eq.s32.totalorder %s39, 1
      %p377 = por %p375, %p376
      %p379 = scmp.ne.s32.totalorder %s364, %s378
      %p380 = scmp.eq.s32.totalorder %s39, 0
      %p381 = por %p379, %p380
      %s383 = sadd.s32 %s382, 1
      %p386 = scmp.eq.s32.totalorder %s33, 1
      %p387 = scmp.ne.s32.totalorder %s382, %s384
      %p388 = scmp.eq.s32.totalorder %s33, 0
      %p389 = por %p387, %p388
      %p390 = scmp.ne.s32.totalorder %s382, %s384
      %p391 = scmp.eq.s32.totalorder %s38, 1
      %p392 = por %p390, %p391
      %p393 = scmp.ne.s32.totalorder %s384, %s385
      %p394 = scmp.eq.s32.totalorder %s38, 0
      %p395 = por %p393, %p394
      %p396 = scmp.ne.s32.totalorder %s384, %s385
      %p397 = scmp.eq.s32.totalorder %s39, 1
      %p398 = por %p396, %p397
      %p400 = scmp.ne.s32.totalorder %s385, %s399
      %p401 = scmp.eq.s32.totalorder %s39, 0
      %p402 = por %p400, %p401
      %s404 = sadd.s32 %s403, 1
      %p407 = scmp.eq.s32.totalorder %s33, 1
      %p408 = scmp.ne.s32.totalorder %s403, %s405
      %p409 = scmp.eq.s32.totalorder %s33, 0
      %p410 = por %p408, %p409
      %p411 = scmp.ne.s32.totalorder %s403, %s405
      %p412 = scmp.eq.s32.totalorder %s38, 1
      %p413 = por %p411, %p412
      %p414 = scmp.ne.s32.totalorder %s405, %s406
      %p415 = scmp.eq.s32.totalorder %s38, 0
      %p416 = por %p414, %p415
      %p417 = scmp.ne.s32.totalorder %s405, %s406
      %p418 = scmp.eq.s32.totalorder %s39, 1
      %p419 = por %p417, %p418
      %p421 = scmp.ne.s32.totalorder %s406, %s420
      %p422 = scmp.eq.s32.totalorder %s39, 0
      %p423 = por %p421, %p422
      %s424 = ssub.s32 %s33, %s40
      %p425 = scmp.eq.s32.totalorder %s424, 0
      %s427 = sadd.s32 %s426, 1
      %s428 = scalar_select %p425, %s426, %s427
      %p431 = pneg %p425
      %p432 = scmp.eq.s32.totalorder %s33, 1
      %p433 = por %p431, %p432
      %p434 = scmp.ne.s32.totalorder %s426, %s429
      %p435 = scmp.eq.s32.totalorder %s33, 0
      %p436 = por %p434, %p435
      %p437 = scmp.ne.s32.totalorder %s426, %s429
      %p438 = scmp.eq.s32.totalorder %s38, 1
      %p439 = por %p437, %p438
      %p440 = scmp.ne.s32.totalorder %s429, %s430
      %p441 = scmp.eq.s32.totalorder %s38, 0
      %p442 = por %p440, %p441
      %p443 = scmp.ne.s32.totalorder %s429, %s430
      %p444 = scmp.eq.s32.totalorder %s39, 1
      %p445 = por %p443, %p444
      %p447 = scmp.ne.s32.totalorder %s430, %s446
      %p448 = scmp.eq.s32.totalorder %s39, 0
      %p449 = por %p447, %p448
      %p450 = scmp.le.s32.totalorder 1, %s33
      %p451 = scmp.lt.s32.totalorder %s33, 3
      %p452 = pnand %p450, %p451
      %p453 = pneg %p452
      // Predicated region
      $region9: #{tpu_custom_call.1} parent=5 // pred_check
        _
      $region10: #{tpu_custom_call.1} parent=5 // pred_check_branch
        %455 = sbr.rel (%p452) target = $region12
      $region11: #{tpu_custom_call.1} parent=5 // pred_region
        %s456 = ssub.s32 %s33, 1
        // Predicated region
        $region13: #{tpu_custom_call.1} parent=11 // pred_check
          %p457 = pneg %p80
        $region14: #{tpu_custom_call.1} parent=11 // pred_check_branch
          %459 = sbr.rel (%p457) target = $region16
        $region15: #{tpu_custom_call.1} parent=11 // pred_region
          %s461 = ssub.s32 32, 32
          %462 = vsyncadd [#allocation3], %s461
          %s464 = sshll.u32 [#allocation2], 4
          %s465 = int_to_ptr.vmem [resolvable:$true] %s464
          %467 = dma.hbm_to_vmem [thread:$0]  %s1, 32, %s465, [#allocation3]
        $region16: #{tpu_custom_call.1} parent=11 // pred_fallthru
          _
        // Predicated region
        $region17: #{tpu_custom_call.1} parent=11 // pred_check
          %p468 = pneg %p101
        $region18: #{tpu_custom_call.1} parent=11 // pred_check_branch
          %470 = sbr.rel (%p468) target = $region20
        $region19: #{tpu_custom_call.1} parent=11 // pred_region
          %s472 = ssub.s32 32, 32
          %473 = vsyncadd [#allocation6], %s472
          %s475 = sshll.u32 [#allocation5], 4
          %s476 = int_to_ptr.vmem [resolvable:$true] %s475
          %478 = dma.hbm_to_vmem [thread:$0]  %s2, 32, %s476, [#allocation6]
        $region20: #{tpu_custom_call.1} parent=11 // pred_fallthru
          _
        // Predicated region
        $region21: #{tpu_custom_call.1} parent=11 // pred_check
          %p479 = pneg %p122
        $region22: #{tpu_custom_call.1} parent=11 // pred_check_branch
          %481 = sbr.rel (%p479) target = $region24
        $region23: #{tpu_custom_call.1} parent=11 // pred_region
          %s483 = ssub.s32 16, 16
          %484 = vsyncadd [#allocation6], %s483
          %s486 = sshll.u32 [#allocation7], 4
          %s487 = int_to_ptr.vmem [resolvable:$true] %s486
          %489 = dma.hbm_to_vmem [thread:$0]  %s3, 16, %s487, [#allocation6]
        $region24: #{tpu_custom_call.1} parent=11 // pred_fallthru
          _
        // Predicated region
        $region25: #{tpu_custom_call.1} parent=11 // pred_check
          %p490 = pneg %p143
        $region26: #{tpu_custom_call.1} parent=11 // pred_check_branch
          %492 = sbr.rel (%p490) target = $region28
        $region27: #{tpu_custom_call.1} parent=11 // pred_region
          %s494 = ssub.s32 512, 512
          %495 = vsyncadd [#allocation9], %s494
          %s496 = sshll.u32 [#allocation8], 4
          %s497 = int_to_ptr.vmem [resolvable:$true] %s496
          %502 = dma.hbm_to_vmem [thread:$0]  %s4, 512, %s497, [#allocation9], 64, 64, 4
        $region28: #{tpu_custom_call.1} parent=11 // pred_fallthru
          _
        // Predicated region
        $region29: #{tpu_custom_call.1} parent=11 // pred_check
          %p503 = pneg %p164
        $region30: #{tpu_custom_call.1} parent=11 // pred_check_branch
          %505 = sbr.rel (%p503) target = $region32
        $region31: #{tpu_custom_call.1} parent=11 // pred_region
          %s507 = ssub.s32 512, 512
          %508 = vsyncadd [#allocation9], %s507
          %s509 = sshll.u32 [#allocation10], 4
          %s510 = int_to_ptr.vmem [resolvable:$true] %s509
          %515 = dma.hbm_to_vmem [thread:$0]  %s5, 512, %s510, [#allocation9], 64, 64, 4
        $region32: #{tpu_custom_call.1} parent=11 // pred_fallthru
          _
        // Predicated region
        $region33: #{tpu_custom_call.1} parent=11 // pred_check
          %p516 = pneg %p185
        $region34: #{tpu_custom_call.1} parent=11 // pred_check_branch
          %518 = sbr.rel (%p516) target = $region36
        $region35: #{tpu_custom_call.1} parent=11 // pred_region
          %s520 = ssub.s32 16, 16
          %521 = vsyncadd [#allocation12], %s520
          %s523 = sshll.u32 [#allocation11], 4
          %s524 = int_to_ptr.vmem [resolvable:$true] %s523
          %526 = dma.hbm_to_vmem [thread:$0]  %s6, 16, %s524, [#allocation12]
        $region36: #{tpu_custom_call.1} parent=11 // pred_fallthru
          _
        // Predicated region
        $region37: #{tpu_custom_call.1} parent=11 // pred_check
          %p527 = pneg %p206
        $region38: #{tpu_custom_call.1} parent=11 // pred_check_branch
          %529 = sbr.rel (%p527) target = $region40
        $region39: #{tpu_custom_call.1} parent=11 // pred_region
          %s531 = ssub.s32 512, 512
          %532 = vsyncadd [#allocation12], %s531
          %s533 = sshll.u32 [#allocation13], 4
          %s534 = int_to_ptr.vmem [resolvable:$true] %s533
          %539 = dma.hbm_to_vmem [thread:$0]  %s7, 512, %s534, [#allocation12], 64, 64, 4
        $region40: #{tpu_custom_call.1} parent=11 // pred_fallthru
          _
        // Predicated region
        $region41: #{tpu_custom_call.1} parent=11 // pred_check
          %p540 = pneg %p227
        $region42: #{tpu_custom_call.1} parent=11 // pred_check_branch
          %542 = sbr.rel (%p540) target = $region44
        $region43: #{tpu_custom_call.1} parent=11 // pred_region
          %s544 = ssub.s32 512, 512
          %545 = vsyncadd [#allocation15], %s544
          %s546 = sshll.u32 [#allocation14], 4
          %s547 = int_to_ptr.vmem [resolvable:$true] %s546
          %552 = dma.hbm_to_vmem [thread:$0]  %s8, 512, %s547, [#allocation15], 64, 64, 4
        $region44: #{tpu_custom_call.1} parent=11 // pred_fallthru
          _
        // Predicated region
        $region45: #{tpu_custom_call.1} parent=11 // pred_check
          %p553 = pneg %p248
        $region46: #{tpu_custom_call.1} parent=11 // pred_check_branch
          %555 = sbr.rel (%p553) target = $region48
        $region47: #{tpu_custom_call.1} parent=11 // pred_region
          _
        $region48: #{tpu_custom_call.1} parent=11 // pred_fallthru
          _
        // Predicated region
        $region49: #{tpu_custom_call.1} parent=11 // pred_check
          %p556 = pneg %p269
        $region50: #{tpu_custom_call.1} parent=11 // pred_check_branch
          %558 = sbr.rel (%p556) target = $region52
        $region51: #{tpu_custom_call.1} parent=11 // pred_region
          _
        $region52: #{tpu_custom_call.1} parent=11 // pred_fallthru
          _
        // Predicated region
        $region53: #{tpu_custom_call.1} parent=11 // pred_check
          %p559 = pneg %p290
        $region54: #{tpu_custom_call.1} parent=11 // pred_check_branch
          %561 = sbr.rel (%p559) target = $region56
        $region55: #{tpu_custom_call.1} parent=11 // pred_region
          _
        $region56: #{tpu_custom_call.1} parent=11 // pred_fallthru
          _
        // Predicated region
        $region57: #{tpu_custom_call.1} parent=11 // pred_check
          %p562 = pneg %p311
        $region58: #{tpu_custom_call.1} parent=11 // pred_check_branch
          %564 = sbr.rel (%p562) target = $region60
        $region59: #{tpu_custom_call.1} parent=11 // pred_region
          _
        $region60: #{tpu_custom_call.1} parent=11 // pred_fallthru
          _
        // Predicated region
        $region61: #{tpu_custom_call.1} parent=11 // pred_check
          %p565 = pneg %p332
        $region62: #{tpu_custom_call.1} parent=11 // pred_check_branch
          %567 = sbr.rel (%p565) target = $region64
        $region63: #{tpu_custom_call.1} parent=11 // pred_region
          %s569 = ssub.s32 512, 512
          %570 = vsyncadd [#allocation15], %s569
          %s571 = sshll.u32 [#allocation16], 4
          %s572 = int_to_ptr.vmem [resolvable:$true] %s571
          %577 = dma.hbm_to_vmem [thread:$0]  %s13, 512, %s572, [#allocation15], 64, 64, 4
        $region64: #{tpu_custom_call.1} parent=11 // pred_fallthru
          _
        // Predicated region
        $region65: #{tpu_custom_call.1} parent=11 // pred_check
          %p578 = pneg %p353
        $region66: #{tpu_custom_call.1} parent=11 // pred_check_branch
          %580 = sbr.rel (%p578) target = $region68
        $region67: #{tpu_custom_call.1} parent=11 // pred_region
          %s582 = ssub.s32 512, 512
          %583 = vsyncadd [#allocation18], %s582
          %s584 = sshll.u32 [#allocation17], 4
          %s585 = int_to_ptr.vmem [resolvable:$true] %s584
          %590 = dma.hbm_to_vmem [thread:$0]  %s14, 512, %s585, [#allocation18], 64, 64, 4
        $region68: #{tpu_custom_call.1} parent=11 // pred_fallthru
          _
        // Predicated region
        $region69: #{tpu_custom_call.1} parent=11 // pred_check
          %p591 = pneg %p374
        $region70: #{tpu_custom_call.1} parent=11 // pred_check_branch
          %593 = sbr.rel (%p591) target = $region72
        $region71: #{tpu_custom_call.1} parent=11 // pred_region
          _
        $region72: #{tpu_custom_call.1} parent=11 // pred_fallthru
          _
        // Predicated region
        $region73: #{tpu_custom_call.1} parent=11 // pred_check
          %p594 = pneg %p395
        $region74: #{tpu_custom_call.1} parent=11 // pred_check_branch
          %596 = sbr.rel (%p594) target = $region76
        $region75: #{tpu_custom_call.1} parent=11 // pred_region
          _
        $region76: #{tpu_custom_call.1} parent=11 // pred_fallthru
          _
        // Predicated region
        $region77: #{tpu_custom_call.1} parent=11 // pred_check
          %p597 = pneg %p416
        $region78: #{tpu_custom_call.1} parent=11 // pred_check_branch
          %599 = sbr.rel (%p597) target = $region80
        $region79: #{tpu_custom_call.1} parent=11 // pred_region
          _
        $region80: #{tpu_custom_call.1} parent=11 // pred_fallthru
          _
      $region12: #{tpu_custom_call.1} parent=5 // pred_fallthru
        _
      %p600 = scmp.lt.s32.totalorder %s33, 2
      // Predicated region
      $region81: #{tpu_custom_call.1} parent=5 // pred_check
        %p601 = pneg %p600
      $region82: #{tpu_custom_call.1} parent=5 // pred_check_branch
        %603 = sbr.rel (%p601) target = $region84
      $region83: #{tpu_custom_call.1} parent=5 // pred_region
        // Predicated region
        $region85: #{tpu_custom_call.1} parent=83 // pred_check
          %p604 = pneg %p53
        $region86: #{tpu_custom_call.1} parent=83 // pred_check_branch
          %606 = sbr.rel (%p604) target = $region88
        $region87: #{tpu_custom_call.1} parent=83 // pred_region
          %p607 = scmp.lt.s32.totalorder %s33, 1
          %s608 = scalar_select %p607, %s33, 1
          %s609 = smul.addr %s608, 2
          %s610 = smul.addr %s609, 8
          %s611 = scalar_lea.vmem %s0, %s610
        $region88: #{tpu_custom_call.1} parent=83 // pred_fallthru
          _
      $region84: #{tpu_custom_call.1} parent=5 // pred_fallthru
        _
      %p612 = scmp.le.s32.totalorder 1, %s33
      %p613 = scmp.lt.s32.totalorder %s33, 3
      %p614 = pnand %p612, %p613
      %p615 = pneg %p614
      // Predicated region
      $region89: #{tpu_custom_call.1} parent=5 // pred_check
        _
      $region90: #{tpu_custom_call.1} parent=5 // pred_check_branch
        %617 = sbr.rel (%p614) target = $region92
      $region91: #{tpu_custom_call.1} parent=5 // pred_region
        %s618 = ssub.s32 %s33, 1
        // Predicated region
        $region93: #{tpu_custom_call.1} parent=91 // pred_check
          %p619 = pneg %p80
        $region94: #{tpu_custom_call.1} parent=91 // pred_check_branch
          %621 = sbr.rel (%p619) target = $region96
        $region95: #{tpu_custom_call.1} parent=91 // pred_region
          %622 = dma.done [#allocation3], 32
        $region96: #{tpu_custom_call.1} parent=91 // pred_fallthru
          _
        // Predicated region
        $region97: #{tpu_custom_call.1} parent=91 // pred_check
          %p623 = pneg %p101
        $region98: #{tpu_custom_call.1} parent=91 // pred_check_branch
          %625 = sbr.rel (%p623) target = $region100
        $region99: #{tpu_custom_call.1} parent=91 // pred_region
          %626 = dma.done [#allocation6], 32
        $region100: #{tpu_custom_call.1} parent=91 // pred_fallthru
          _
        // Predicated region
        $region101: #{tpu_custom_call.1} parent=91 // pred_check
          %p627 = pneg %p122
        $region102: #{tpu_custom_call.1} parent=91 // pred_check_branch
          %629 = sbr.rel (%p627) target = $region104
        $region103: #{tpu_custom_call.1} parent=91 // pred_region
          %630 = dma.done [#allocation6], 16
        $region104: #{tpu_custom_call.1} parent=91 // pred_fallthru
          _
        // Predicated region
        $region105: #{tpu_custom_call.1} parent=91 // pred_check
          %p631 = pneg %p143
        $region106: #{tpu_custom_call.1} parent=91 // pred_check_branch
          %633 = sbr.rel (%p631) target = $region108
        $region107: #{tpu_custom_call.1} parent=91 // pred_region
          %634 = dma.done [#allocation9], 512
        $region108: #{tpu_custom_call.1} parent=91 // pred_fallthru
          _
        // Predicated region
        $region109: #{tpu_custom_call.1} parent=91 // pred_check
          %p635 = pneg %p164
        $region110: #{tpu_custom_call.1} parent=91 // pred_check_branch
          %637 = sbr.rel (%p635) target = $region112
        $region111: #{tpu_custom_call.1} parent=91 // pred_region
          %638 = dma.done [#allocation9], 512
        $region112: #{tpu_custom_call.1} parent=91 // pred_fallthru
          _
        // Predicated region
        $region113: #{tpu_custom_call.1} parent=91 // pred_check
          %p639 = pneg %p185
        $region114: #{tpu_custom_call.1} parent=91 // pred_check_branch
          %641 = sbr.rel (%p639) target = $region116
        $region115: #{tpu_custom_call.1} parent=91 // pred_region
          %642 = dma.done [#allocation12], 16
        $region116: #{tpu_custom_call.1} parent=91 // pred_fallthru
          _
        // Predicated region
        $region117: #{tpu_custom_call.1} parent=91 // pred_check
          %p643 = pneg %p206
        $region118: #{tpu_custom_call.1} parent=91 // pred_check_branch
          %645 = sbr.rel (%p643) target = $region120
        $region119: #{tpu_custom_call.1} parent=91 // pred_region
          %646 = dma.done [#allocation12], 512
        $region120: #{tpu_custom_call.1} parent=91 // pred_fallthru
          _
        // Predicated region
        $region121: #{tpu_custom_call.1} parent=91 // pred_check
          %p647 = pneg %p227
        $region122: #{tpu_custom_call.1} parent=91 // pred_check_branch
          %649 = sbr.rel (%p647) target = $region124
        $region123: #{tpu_custom_call.1} parent=91 // pred_region
          %650 = dma.done [#allocation15], 512
        $region124: #{tpu_custom_call.1} parent=91 // pred_fallthru
          _
        // Predicated region
        $region125: #{tpu_custom_call.1} parent=91 // pred_check
          %p651 = pneg %p332
        $region126: #{tpu_custom_call.1} parent=91 // pred_check_branch
          %653 = sbr.rel (%p651) target = $region128
        $region127: #{tpu_custom_call.1} parent=91 // pred_region
          %654 = dma.done [#allocation15], 512
        $region128: #{tpu_custom_call.1} parent=91 // pred_fallthru
          _
        // Predicated region
        $region129: #{tpu_custom_call.1} parent=91 // pred_check
          %p655 = pneg %p353
        $region130: #{tpu_custom_call.1} parent=91 // pred_check_branch
          %657 = sbr.rel (%p655) target = $region132
        $region131: #{tpu_custom_call.1} parent=91 // pred_region
          %658 = dma.done [#allocation18], 512
        $region132: #{tpu_custom_call.1} parent=91 // pred_fallthru
          _
        %p659 = scmp.lt.s32.totalorder %s38, 1
        %s660 = scalar_select %p659, %s38, 1
        %s661 = smul.addr %s660, 2
        %s662 = smul.addr %s661, 8
        %s663 = scalar_lea.vmem %s0, %s662
        %p664 = pneg %p59
        %p665 = pneg %p56
        %p666 = pneg %p80
        %p667 = pneg %p77
        %p668 = pneg %p101
        %p669 = pneg %p98
        %p670 = pneg %p122
        %p671 = pneg %p119
        %p672 = pneg %p143
        %p673 = pneg %p140
        %p674 = pneg %p164
        %p675 = pneg %p161
        %p676 = pneg %p185
        %p677 = pneg %p182
        %p678 = pneg %p206
        %p679 = pneg %p203
        %p680 = pneg %p227
        %p681 = pneg %p224
        %p682 = pneg %p248
        %p683 = pneg %p245
        %p684 = pneg %p269
        %p685 = pneg %p266
        %p686 = pneg %p290
        %p687 = pneg %p287
        %p688 = pneg %p311
        %p689 = pneg %p308
        %p690 = pneg %p332
        %p691 = pneg %p329
        %p692 = pneg %p353
        %p693 = pneg %p350
        %p694 = pneg %p374
        %p695 = pneg %p371
        %p696 = pneg %p395
        %p697 = pneg %p392
        %p698 = pneg %p416
        %p699 = pneg %p413
        %p700 = pneg %p442
        %p701 = pneg %p439
        %s702 = sand.u32 %s429, 1
        %s703 = scalar_lea.sflag [#allocation4], %s702
        %s704 = sand.u32 %s429, 1
        %s705 = scalar_lea.vmem [#allocation19], %s704
        %p706 = scmp.lt.s32.totalorder %s38, 1
        %s707 = scalar_select %p706, %s38, 1
        %s708 = smul.addr %s707, 2
        %s709 = smul.addr %s708, 8
        %s710 = scalar_lea.vmem %s0, %s709
        %v712 = vld [vmem:[%s710] sm:$0xff]
        %v713 = vld [vmem:[%s710 + $0x8] sm:$0xff]
        %v714 = vpack.c.bf16 %v713, %v712
        %v715 = vld [vmem:[#allocation2] sm:$0x3]
        %v716 = vld [vmem:[#allocation5] sm:$0x3]
        %v717 = vld [vmem:[#allocation7] sm:$0x1]
        %v718 = vunpack.c.l.bf16 %v714
        %v719 = vunpack.c.h.bf16 %v714
        %v720 = vmul.f32 %v718, %v718
        %v721 = vmul.f32 %v719, %v719
        %vm722 = vcmask 23552
        %v723 = vsel %vm722, %v720, 0.0
        %724 = vadd.xlane.f32.xlu0 %v723
        %v725 = vpop.xlane.xlu0 %724
        %v726 = vsel %vm722, %v721, 0.0
        %727 = vadd.xlane.f32.xlu0 %v726
        %v728 = vpop.xlane.xlu0 %727
        %v730 = vsel %vm722, %v714, 0
        %732 = vmatprep.subr.bf16.mxu0 0
        %733 = vmatpush1.bf16.xpose.msra.mxu0 %v730
        %734 = vmatprep.subr.bf16.mxu0 0
        %735 = vmatpush1.bf16.xpose.msra.mxu0 0
        %736 = vmatprep.subr.bf16.mxu0 0
        %737 = vmatpush1.bf16.xpose.msra.mxu0 0
        %738 = vmatprep.subr.bf16.mxu0 0
        %739 = vmatpush1.bf16.xpose.msra.mxu0 0
        %740 = vmatprep.subr.bf16.mxu0 0
        %741 = vmatpush1.bf16.xpose.msra.mxu0 0
        %742 = vmatprep.subr.bf16.mxu0 0
        %743 = vmatpush1.bf16.xpose.msra.mxu0 0
        %744 = vmatprep.subr.bf16.mxu0 0
        %745 = vmatpush1.bf16.xpose.msra.mxu0 0
        %746 = vmatprep.subr.bf16.mxu0 0
        %747 = vmatpush1.bf16.xpose.msra.mxu0 0
        %748 = vmatprep.subr.bf16.mxu0 0
        %749 = vmatpush1.bf16.xpose.msra.mxu0 0
        %750 = vmatprep.subr.bf16.mxu0 0
        %751 = vmatpush1.bf16.xpose.msra.mxu0 0
        %752 = vmatprep.subr.bf16.mxu0 0
        %753 = vmatpush1.bf16.xpose.msra.mxu0 0
        %754 = vmatprep.subr.bf16.mxu0 0
        %755 = vmatpush1.bf16.xpose.msra.mxu0 0
        %756 = vmatprep.subr.bf16.mxu0 0
        %757 = vmatpush1.bf16.xpose.msra.mxu0 0
        %758 = vmatprep.subr.bf16.mxu0 0
        %759 = vmatpush1.bf16.xpose.msra.mxu0 0
        %760 = vmatprep.subr.bf16.mxu0 0
        %761 = vmatpush1.bf16.xpose.msra.mxu0 0
        %762 = vmatprep.subr.bf16.mxu0 0
        %763 = vmatpush1.bf16.xpose.msra.mxu0 0
        %764 = vmatprep.mubr.bf16.mxu0 0
        %765 = vmatmul.mubr.bf16.gmra.mrb[0].mxu0 %v730
        %v766 = vpop.f32.mrb[0].mxu0
        %v767 = vadd.f32 0.0, %v766
        %v768 = vpop.f32.mrb[0].mxu0
        %v769 = vpop.f32.mrb[0].mxu0
        %v770 = vadd.f32 0.0, %v769
        %v771 = vpop.f32.mrb[0].mxu0
        %772 = vdwg.mxu0
        %v773 = vmul.f32 %v767, 2.0
        %v774 = vmul.f32 %v770, 2.0
        %v775 = vsub.f32 %v773, %v725
        %v776 = vsub.f32 %v774, %v728
        %777 = vxpose.xlu0.b32.start [1/16] %v725, 128
        %778 = vxpose.xlu0.b32.cont [2/16] %v728, 128
        %779 = vxpose.xlu0.b32.cont [3/16] 0.0, 128
        %780 = vxpose.xlu0.b32.cont [4/16] 0.0, 128
        %781 = vxpose.xlu0.b32.cont [5/16] 0.0, 128
        %782 = vxpose.xlu0.b32.cont [6/16] 0.0, 128
        %783 = vxpose.xlu0.b32.cont [7/16] 0.0, 128
        %784 = vxpose.xlu0.b32.cont [8/16] 0.0, 128
        %785 = vxpose.xlu0.b32.cont [9/16] 0.0, 128
        %786 = vxpose.xlu0.b32.cont [10/16] 0.0, 128
        %787 = vxpose.xlu0.b32.cont [11/16] 0.0, 128
        %788 = vxpose.xlu0.b32.cont [12/16] 0.0, 128
        %789 = vxpose.xlu0.b32.cont [13/16] 0.0, 128
        %790 = vxpose.xlu0.b32.cont [14/16] 0.0, 128
        %791 = vxpose.xlu0.b32.cont [15/16] 0.0, 128
        %792 = vxpose.xlu0.b32.end [16/16] 0.0, 128
        %v793 = vpop.trf.xlu0
        %v794 = vpop.trf.xlu0
        %v795 = vpop.trf.xlu0
        %v796 = vpop.trf.xlu0
        %v797 = vpop.trf.xlu0
        %v798 = vpop.trf.xlu0
        %v799 = vpop.trf.xlu0
        %v800 = vpop.trf.xlu0
        %v801 = vpop.trf.xlu0
        %v802 = vpop.trf.xlu0
        %v803 = vpop.trf.xlu0
        %v804 = vpop.trf.xlu0
        %v805 = vpop.trf.xlu0
        %v806 = vpop.trf.xlu0
        %v807 = vpop.trf.xlu0
        %v808 = vpop.trf.xlu0
        %v809 = vlaneseq
        %v810 = vshrl.u32 %v809, 7
        %v811 = vsub.s32 0, %v810
        %v812 = vrot.slane %v793, %v811
        %v813 = vsub.f32 %v775, %v812
        %v814 = vsub.f32 %v776, %v812
        %vm815 = vcmask 1040384
        %vm816 = vcmask 1041408
        %v817 = vsel %vm815, 4294967295, 65535
        %v818 = vsel %vm816, %v817, 0
        %v820 = vand.u32 %v715, %v818
        %822 = vmatprep.subr.bf16.mxu0 0
        %823 = vmatpush1.bf16.msra.mxu0 %v820
        %824 = vmatprep.subr.bf16.mxu0 0
        %825 = vmatpush1.bf16.msra.mxu0 0
        %826 = vmatprep.subr.bf16.mxu0 0
        %827 = vmatpush1.bf16.msra.mxu0 0
        %828 = vmatprep.subr.bf16.mxu0 0
        %829 = vmatpush1.bf16.msra.mxu0 0
        %830 = vmatprep.subr.bf16.mxu0 0
        %831 = vmatpush1.bf16.msra.mxu0 0
        %832 = vmatprep.subr.bf16.mxu0 0
        %833 = vmatpush1.bf16.msra.mxu0 0
        %834 = vmatprep.subr.bf16.mxu0 0
        %835 = vmatpush1.bf16.msra.mxu0 0
        %836 = vmatprep.subr.bf16.mxu0 0
        %837 = vmatpush1.bf16.msra.mxu0 0
        %838 = vmatprep.subr.bf16.mxu0 0
        %839 = vmatpush1.bf16.msra.mxu0 0
        %840 = vmatprep.subr.bf16.mxu0 0
        %841 = vmatpush1.bf16.msra.mxu0 0
        %842 = vmatprep.subr.bf16.mxu0 0
        %843 = vmatpush1.bf16.msra.mxu0 0
        %844 = vmatprep.subr.bf16.mxu0 0
        %845 = vmatpush1.bf16.msra.mxu0 0
        %846 = vmatprep.subr.bf16.mxu0 0
        %847 = vmatpush1.bf16.msra.mxu0 0
        %848 = vmatprep.subr.bf16.mxu0 0
        %849 = vmatpush1.bf16.msra.mxu0 0
        %850 = vmatprep.subr.bf16.mxu0 0
        %851 = vmatpush1.bf16.msra.mxu0 0
        %852 = vmatprep.subr.bf16.mxu0 0
        %853 = vmatpush1.bf16.msra.mxu0 0
        %854 = vmatprep.mubr.bf16.mxu0 0
        %855 = vmatmul.mubr.bf16.gmra.mrb[0].mxu0 %v730
        %v856 = vpop.f32.mrb[0].mxu0
        %v857 = vadd.f32 0.0, %v856
        %v858 = vpop.f32.mrb[0].mxu0
        %v859 = vpop.f32.mrb[0].mxu0
        %v860 = vadd.f32 0.0, %v859
        %v861 = vpop.f32.mrb[0].mxu0
        %862 = vdwg.mxu0
        %v864 = vlaneseq
        %v865 = vshrl.u32 %v864, 7
        %v866 = vsub.s32 0, %v865
        %v867 = vrot.slane %v717, %v866
        %v870 = vand.u32 %v716, %v818
        %872 = vmatprep.subr.bf16.mxu0 0
        %873 = vmatpush1.bf16.msra.mxu0 %v870
        %874 = vmatprep.subr.bf16.mxu0 0
        %875 = vmatpush1.bf16.msra.mxu0 0
        %876 = vmatprep.subr.bf16.mxu0 0
        %877 = vmatpush1.bf16.msra.mxu0 0
        %878 = vmatprep.subr.bf16.mxu0 0
        %879 = vmatpush1.bf16.msra.mxu0 0
        %880 = vmatprep.subr.bf16.mxu0 0
        %881 = vmatpush1.bf16.msra.mxu0 0
        %882 = vmatprep.subr.bf16.mxu0 0
        %883 = vmatpush1.bf16.msra.mxu0 0
        %884 = vmatprep.subr.bf16.mxu0 0
        %885 = vmatpush1.bf16.msra.mxu0 0
        %886 = vmatprep.subr.bf16.mxu0 0
        %887 = vmatpush1.bf16.msra.mxu0 0
        %888 = vmatprep.subr.bf16.mxu0 0
        %889 = vmatpush1.bf16.msra.mxu0 0
        %890 = vmatprep.subr.bf16.mxu0 0
        %891 = vmatpush1.bf16.msra.mxu0 0
        %892 = vmatprep.subr.bf16.mxu0 0
        %893 = vmatpush1.bf16.msra.mxu0 0
        %894 = vmatprep.subr.bf16.mxu0 0
        %895 = vmatpush1.bf16.msra.mxu0 0
        %896 = vmatprep.subr.bf16.mxu0 0
        %897 = vmatpush1.bf16.msra.mxu0 0
        %898 = vmatprep.subr.bf16.mxu0 0
        %899 = vmatpush1.bf16.msra.mxu0 0
        %900 = vmatprep.subr.bf16.mxu0 0
        %901 = vmatpush1.bf16.msra.mxu0 0
        %902 = vmatprep.subr.bf16.mxu0 0
        %903 = vmatpush1.bf16.msra.mxu0 0
        %904 = vmatprep.mubr.bf16.mxu0 0
        %905 = vmatmul.mubr.bf16.gmra.mrb[0].mxu0 %v730
        %v906 = vpop.f32.mrb[0].mxu0
        %v907 = vadd.f32 %v867, %v906
        %v908 = vpop.f32.mrb[0].mxu0
        %v909 = vpop.f32.mrb[0].mxu0
        %v910 = vadd.f32 %v867, %v909
        %v911 = vpop.f32.mrb[0].mxu0
        %912 = vdwg.mxu0
        %v913 = vpack.c.bf16 %v860, %v857
        %vm916 = vcmp.lt.s32.totalorder %v813, 0
        %vm917 = vcmp.lt.s32.totalorder %v814, 0
        %v918 = vxor.u32 %v813, 2147483647
        %v919 = vxor.u32 %v814, 2147483647
        %v920 = vsel %vm916, %v918, %v813
        %v921 = vsel %vm917, %v919, %v814
        %v922 = vlaneseq
        %v923 = vand.u32 %v922, 127
        %v924 = vand.u32 %v920, 4294967280
        %v925 = vand.u32 %v921, 4294967280
        %v926 = vsub.s32 15, %v923
        %v927 = vor.u32 %v924, %v926
        %v928 = vor.u32 %v925, %v926
        %vm929 = vcmask 130048
        %v930 = vsel %vm929, %v927, 2147483648
        %v931 = vand.u32 %v930, 65535
        %v932 = vshra.s32 %v930, 16
        %v933 = vcvt.s32.f32 %v931
        %v934 = vcvt.s32.f32 %v932
        %935 = vmax.xlane.f32.xlu0 %v934
        %v936 = vpop.xlane.xlu0 %935
        %vm937 = vcmp.eq.f32.partialorder %v934, %v936
        %v938 = vsel %vm937, %v933, -inf
        %939 = vmax.xlane.f32.xlu0 %v938
        %v940 = vpop.xlane.xlu0 %939
        %v941 = vcvt.f32.s32 %v940
        %v942 = vcvt.f32.s32 %v936
        %v943 = vshll.u32 %v942, 16
        %v944 = vadd.s32 %v943, %v941
        %v945 = vsel %vm929, %v928, 2147483648
        %v946 = vand.u32 %v945, 65535
        %v947 = vshra.s32 %v945, 16
        %v948 = vcvt.s32.f32 %v946
        %v949 = vcvt.s32.f32 %v947
        %950 = vmax.xlane.f32.xlu0 %v949
        %v951 = vpop.xlane.xlu0 %950
        %vm952 = vcmp.eq.f32.partialorder %v949, %v951
        %v953 = vsel %vm952, %v948, -inf
        %954 = vmax.xlane.f32.xlu0 %v953
        %v955 = vpop.xlane.xlu0 %954
        %v956 = vcvt.f32.s32 %v955
        %v957 = vcvt.f32.s32 %v951
        %v958 = vshll.u32 %v957, 16
        %v959 = vadd.s32 %v958, %v956
        %vm960 = vcmp.eq.s32.totalorder %v927, %v944
        %vm961 = vcmp.eq.s32.totalorder %v928, %v959
        %v962 = vsel %vm960, 1, 0
        %v963 = vsel %vm961, 1, 0
        %v964 = vcvt.s32.f32 %v962
        %v965 = vcvt.s32.f32 %v963
        %v966 = vpack.c.bf16 %v965, %v964
        %v968 = vsel %vm929, %v966, 0
        %970 = vmatprep.subr.bf16.mxu0 0
        %971 = vmatpush1.bf16.msra.mxu0 %v913
        %972 = vmatprep.subr.bf16.mxu0 0
        %973 = vmatpush1.bf16.msra.mxu0 0
        %974 = vmatprep.subr.bf16.mxu0 0
        %975 = vmatpush1.bf16.msra.mxu0 0
        %976 = vmatprep.subr.bf16.mxu0 0
        %977 = vmatpush1.bf16.msra.mxu0 0
        %978 = vmatprep.subr.bf16.mxu0 0
        %979 = vmatpush1.bf16.msra.mxu0 0
        %980 = vmatprep.subr.bf16.mxu0 0
        %981 = vmatpush1.bf16.msra.mxu0 0
        %982 = vmatprep.subr.bf16.mxu0 0
        %983 = vmatpush1.bf16.msra.mxu0 0
        %984 = vmatprep.subr.bf16.mxu0 0
        %985 = vmatpush1.bf16.msra.mxu0 0
        %986 = vmatprep.subr.bf16.mxu0 0
        %987 = vmatpush1.bf16.msra.mxu0 0
        %988 = vmatprep.subr.bf16.mxu0 0
        %989 = vmatpush1.bf16.msra.mxu0 0
        %990 = vmatprep.subr.bf16.mxu0 0
        %991 = vmatpush1.bf16.msra.mxu0 0
        %992 = vmatprep.subr.bf16.mxu0 0
        %993 = vmatpush1.bf16.msra.mxu0 0
        %994 = vmatprep.subr.bf16.mxu0 0
        %995 = vmatpush1.bf16.msra.mxu0 0
        %996 = vmatprep.subr.bf16.mxu0 0
        %997 = vmatpush1.bf16.msra.mxu0 0
        %998 = vmatprep.subr.bf16.mxu0 0
        %999 = vmatpush1.bf16.msra.mxu0 0
        %1000 = vmatprep.subr.bf16.mxu0 0
        %1001 = vmatpush1.bf16.msra.mxu0 0
        %1002 = vmatprep.mubr.bf16.mxu0 0
        %1003 = vmatmul.mubr.bf16.gmra.mrb[0].mxu0 %v968
        %v1004 = vpop.f32.mrb[0].mxu0
        %v1005 = vadd.f32 0.0, %v1004
        %v1006 = vpop.f32.mrb[0].mxu0
        %v1007 = vpop.f32.mrb[0].mxu0
        %v1008 = vadd.f32 0.0, %v1007
        %v1009 = vpop.f32.mrb[0].mxu0
        %1010 = vdwg.mxu0
        %v1011 = vsel %vm960, 2147483648, %v927
        %v1012 = vsel %vm961, 2147483648, %v928
        %v1013 = vsel %vm929, %v1011, 2147483648
        %v1014 = vand.u32 %v1013, 65535
        %v1015 = vshra.s32 %v1013, 16
        %v1016 = vcvt.s32.f32 %v1014
        %v1017 = vcvt.s32.f32 %v1015
        %1018 = vmax.xlane.f32.xlu0 %v1017
        %v1019 = vpop.xlane.xlu0 %1018
        %vm1020 = vcmp.eq.f32.partialorder %v1017, %v1019
        %v1021 = vsel %vm1020, %v1016, -inf
        %1022 = vmax.xlane.f32.xlu0 %v1021
        %v1023 = vpop.xlane.xlu0 %1022
        %v1024 = vcvt.f32.s32 %v1023
        %v1025 = vcvt.f32.s32 %v1019
        %v1026 = vshll.u32 %v1025, 16
        %v1027 = vadd.s32 %v1026, %v1024
        %v1028 = vsel %vm929, %v1012, 2147483648
        %v1029 = vand.u32 %v1028, 65535
        %v1030 = vshra.s32 %v1028, 16
        %v1031 = vcvt.s32.f32 %v1029
        %v1032 = vcvt.s32.f32 %v1030
        %1033 = vmax.xlane.f32.xlu0 %v1032
        %v1034 = vpop.xlane.xlu0 %1033
        %vm1035 = vcmp.eq.f32.partialorder %v1032, %v1034
        %v1036 = vsel %vm1035, %v1031, -inf
        %1037 = vmax.xlane.f32.xlu0 %v1036
        %v1038 = vpop.xlane.xlu0 %1037
        %v1039 = vcvt.f32.s32 %v1038
        %v1040 = vcvt.f32.s32 %v1034
        %v1041 = vshll.u32 %v1040, 16
        %v1042 = vadd.s32 %v1041, %v1039
        %vm1043 = vcmp.eq.s32.totalorder %v1011, %v1027
        %vm1044 = vcmp.eq.s32.totalorder %v1012, %v1042
        %v1045 = vsel %vm1043, 1, 0
        %v1046 = vsel %vm1044, 1, 0
        %v1047 = vcvt.s32.f32 %v1045
        %v1048 = vcvt.s32.f32 %v1046
        %v1049 = vpack.c.bf16 %v1048, %v1047
        %v1051 = vsel %vm929, %v1049, 0
        %1053 = vmatprep.subr.bf16.mxu0 0
        %1054 = vmatpush1.bf16.msra.mxu0 %v913
        %1055 = vmatprep.subr.bf16.mxu0 0
        %1056 = vmatpush1.bf16.msra.mxu0 0
        %1057 = vmatprep.subr.bf16.mxu0 0
        %1058 = vmatpush1.bf16.msra.mxu0 0
        %1059 = vmatprep.subr.bf16.mxu0 0
        %1060 = vmatpush1.bf16.msra.mxu0 0
        %1061 = vmatprep.subr.bf16.mxu0 0
        %1062 = vmatpush1.bf16.msra.mxu0 0
        %1063 = vmatprep.subr.bf16.mxu0 0
        %1064 = vmatpush1.bf16.msra.mxu0 0
        %1065 = vmatprep.subr.bf16.mxu0 0
        %1066 = vmatpush1.bf16.msra.mxu0 0
        %1067 = vmatprep.subr.bf16.mxu0 0
        %1068 = vmatpush1.bf16.msra.mxu0 0
        %1069 = vmatprep.subr.bf16.mxu0 0
        %1070 = vmatpush1.bf16.msra.mxu0 0
        %1071 = vmatprep.subr.bf16.mxu0 0
        %1072 = vmatpush1.bf16.msra.mxu0 0
        %1073 = vmatprep.subr.bf16.mxu0 0
        %1074 = vmatpush1.bf16.msra.mxu0 0
        %1075 = vmatprep.subr.bf16.mxu0 0
        %1076 = vmatpush1.bf16.msra.mxu0 0
        %1077 = vmatprep.subr.bf16.mxu0 0
        %1078 = vmatpush1.bf16.msra.mxu0 0
        %1079 = vmatprep.subr.bf16.mxu0 0
        %1080 = vmatpush1.bf16.msra.mxu0 0
        %1081 = vmatprep.subr.bf16.mxu0 0
        %1082 = vmatpush1.bf16.msra.mxu0 0
        %1083 = vmatprep.subr.bf16.mxu0 0
        %1084 = vmatpush1.bf16.msra.mxu0 0
        %1085 = vmatprep.mubr.bf16.mxu0 0
        %1086 = vmatmul.mubr.bf16.gmra.mrb[0].mxu0 %v1051
        %v1087 = vpop.f32.mrb[0].mxu0
        %v1088 = vadd.f32 0.0, %v1087
        %v1089 = vpop.f32.mrb[0].mxu0
        %v1090 = vpop.f32.mrb[0].mxu0
        %v1091 = vadd.f32 0.0, %v1090
        %v1092 = vpop.f32.mrb[0].mxu0
        %1093 = vdwg.mxu0
        %v1094 = vmax.f32 %v1005, %v1088
        %v1095 = vmax.f32 %v1008, %v1091
        %v1096 = vsel %vm1043, 2147483648, %v1011
        %v1097 = vsel %vm1044, 2147483648, %v1012
        %v1098 = vsel %vm929, %v1096, 2147483648
        %v1099 = vand.u32 %v1098, 65535
        %v1100 = vshra.s32 %v1098, 16
        %v1101 = vcvt.s32.f32 %v1099
        %v1102 = vcvt.s32.f32 %v1100
        %1103 = vmax.xlane.f32.xlu0 %v1102
        %v1104 = vpop.xlane.xlu0 %1103
        %vm1105 = vcmp.eq.f32.partialorder %v1102, %v1104
        %v1106 = vsel %vm1105, %v1101, -inf
        %1107 = vmax.xlane.f32.xlu0 %v1106
        %v1108 = vpop.xlane.xlu0 %1107
        %v1109 = vcvt.f32.s32 %v1108
        %v1110 = vcvt.f32.s32 %v1104
        %v1111 = vshll.u32 %v1110, 16
        %v1112 = vadd.s32 %v1111, %v1109
        %v1113 = vsel %vm929, %v1097, 2147483648
        %v1114 = vand.u32 %v1113, 65535
        %v1115 = vshra.s32 %v1113, 16
        %v1116 = vcvt.s32.f32 %v1114
        %v1117 = vcvt.s32.f32 %v1115
        %1118 = vmax.xlane.f32.xlu0 %v1117
        %v1119 = vpop.xlane.xlu0 %1118
        %vm1120 = vcmp.eq.f32.partialorder %v1117, %v1119
        %v1121 = vsel %vm1120, %v1116, -inf
        %1122 = vmax.xlane.f32.xlu0 %v1121
        %v1123 = vpop.xlane.xlu0 %1122
        %v1124 = vcvt.f32.s32 %v1123
        %v1125 = vcvt.f32.s32 %v1119
        %v1126 = vshll.u32 %v1125, 16
        %v1127 = vadd.s32 %v1126, %v1124
        %vm1128 = vcmp.eq.s32.totalorder %v1096, %v1112
        %vm1129 = vcmp.eq.s32.totalorder %v1097, %v1127
        %v1130 = vsel %vm1128, 1, 0
        %v1131 = vsel %vm1129, 1, 0
        %v1132 = vcvt.s32.f32 %v1130
        %v1133 = vcvt.s32.f32 %v1131
        %v1134 = vpack.c.bf16 %v1133, %v1132
        %v1136 = vsel %vm929, %v1134, 0
        %1138 = vmatprep.subr.bf16.mxu0 0
        %1139 = vmatpush1.bf16.msra.mxu0 %v913
        %1140 = vmatprep.subr.bf16.mxu0 0
        %1141 = vmatpush1.bf16.msra.mxu0 0
        %1142 = vmatprep.subr.bf16.mxu0 0
        %1143 = vmatpush1.bf16.msra.mxu0 0
        %1144 = vmatprep.subr.bf16.mxu0 0
        %1145 = vmatpush1.bf16.msra.mxu0 0
        %1146 = vmatprep.subr.bf16.mxu0 0
        %1147 = vmatpush1.bf16.msra.mxu0 0
        %1148 = vmatprep.subr.bf16.mxu0 0
        %1149 = vmatpush1.bf16.msra.mxu0 0
        %1150 = vmatprep.subr.bf16.mxu0 0
        %1151 = vmatpush1.bf16.msra.mxu0 0
        %1152 = vmatprep.subr.bf16.mxu0 0
        %1153 = vmatpush1.bf16.msra.mxu0 0
        %1154 = vmatprep.subr.bf16.mxu0 0
        %1155 = vmatpush1.bf16.msra.mxu0 0
        %1156 = vmatprep.subr.bf16.mxu0 0
        %1157 = vmatpush1.bf16.msra.mxu0 0
        %1158 = vmatprep.subr.bf16.mxu0 0
        %1159 = vmatpush1.bf16.msra.mxu0 0
        %1160 = vmatprep.subr.bf16.mxu0 0
        %1161 = vmatpush1.bf16.msra.mxu0 0
        %1162 = vmatprep.subr.bf16.mxu0 0
        %1163 = vmatpush1.bf16.msra.mxu0 0
        %1164 = vmatprep.subr.bf16.mxu0 0
        %1165 = vmatpush1.bf16.msra.mxu0 0
        %1166 = vmatprep.subr.bf16.mxu0 0
        %1167 = vmatpush1.bf16.msra.mxu0 0
        %1168 = vmatprep.subr.bf16.mxu0 0
        %1169 = vmatpush1.bf16.msra.mxu0 0
        %1170 = vmatprep.mubr.bf16.mxu0 0
        %1171 = vmatmul.mubr.bf16.gmra.mrb[0].mxu0 %v1136
        %v1172 = vpop.f32.mrb[0].mxu0
        %v1173 = vadd.f32 0.0, %v1172
        %v1174 = vpop.f32.mrb[0].mxu0
        %v1175 = vpop.f32.mrb[0].mxu0
        %v1176 = vadd.f32 0.0, %v1175
        %v1177 = vpop.f32.mrb[0].mxu0
        %1178 = vdwg.mxu0
        %v1179 = vmax.f32 %v1094, %v1173
        %v1180 = vmax.f32 %v1095, %v1176
        %v1181 = vsel %vm1128, 2147483648, %v1096
        %v1182 = vsel %vm1129, 2147483648, %v1097
        %v1183 = vsel %vm929, %v1181, 2147483648
        %v1184 = vand.u32 %v1183, 65535
        %v1185 = vshra.s32 %v1183, 16
        %v1186 = vcvt.s32.f32 %v1184
        %v1187 = vcvt.s32.f32 %v1185
        %1188 = vmax.xlane.f32.xlu0 %v1187
        %v1189 = vpop.xlane.xlu0 %1188
        %vm1190 = vcmp.eq.f32.partialorder %v1187, %v1189
        %v1191 = vsel %vm1190, %v1186, -inf
        %1192 = vmax.xlane.f32.xlu0 %v1191
        %v1193 = vpop.xlane.xlu0 %1192
        %v1194 = vcvt.f32.s32 %v1193
        %v1195 = vcvt.f32.s32 %v1189
        %v1196 = vshll.u32 %v1195, 16
        %v1197 = vadd.s32 %v1196, %v1194
        %v1198 = vsel %vm929, %v1182, 2147483648
        %v1199 = vand.u32 %v1198, 65535
        %v1200 = vshra.s32 %v1198, 16
        %v1201 = vcvt.s32.f32 %v1199
        %v1202 = vcvt.s32.f32 %v1200
        %1203 = vmax.xlane.f32.xlu0 %v1202
        %v1204 = vpop.xlane.xlu0 %1203
        %vm1205 = vcmp.eq.f32.partialorder %v1202, %v1204
        %v1206 = vsel %vm1205, %v1201, -inf
        %1207 = vmax.xlane.f32.xlu0 %v1206
        %v1208 = vpop.xlane.xlu0 %1207
        %v1209 = vcvt.f32.s32 %v1208
        %v1210 = vcvt.f32.s32 %v1204
        %v1211 = vshll.u32 %v1210, 16
        %v1212 = vadd.s32 %v1211, %v1209
        %vm1213 = vcmp.eq.s32.totalorder %v1181, %v1197
        %vm1214 = vcmp.eq.s32.totalorder %v1182, %v1212
        %v1215 = vsel %vm1213, 1, 0
        %v1216 = vsel %vm1214, 1, 0
        %v1217 = vcvt.s32.f32 %v1215
        %v1218 = vcvt.s32.f32 %v1216
        %v1219 = vpack.c.bf16 %v1218, %v1217
        %v1221 = vsel %vm929, %v1219, 0
        %1223 = vmatprep.subr.bf16.mxu0 0
        %1224 = vmatpush1.bf16.msra.mxu0 %v913
        %1225 = vmatprep.subr.bf16.mxu0 0
        %1226 = vmatpush1.bf16.msra.mxu0 0
        %1227 = vmatprep.subr.bf16.mxu0 0
        %1228 = vmatpush1.bf16.msra.mxu0 0
        %1229 = vmatprep.subr.bf16.mxu0 0
        %1230 = vmatpush1.bf16.msra.mxu0 0
        %1231 = vmatprep.subr.bf16.mxu0 0
        %1232 = vmatpush1.bf16.msra.mxu0 0
        %1233 = vmatprep.subr.bf16.mxu0 0
        %1234 = vmatpush1.bf16.msra.mxu0 0
        %1235 = vmatprep.subr.bf16.mxu0 0
        %1236 = vmatpush1.bf16.msra.mxu0 0
        %1237 = vmatprep.subr.bf16.mxu0 0
        %1238 = vmatpush1.bf16.msra.mxu0 0
        %1239 = vmatprep.subr.bf16.mxu0 0
        %1240 = vmatpush1.bf16.msra.mxu0 0
        %1241 = vmatprep.subr.bf16.mxu0 0
        %1242 = vmatpush1.bf16.msra.mxu0 0
        %1243 = vmatprep.subr.bf16.mxu0 0
        %1244 = vmatpush1.bf16.msra.mxu0 0
        %1245 = vmatprep.subr.bf16.mxu0 0
        %1246 = vmatpush1.bf16.msra.mxu0 0
        %1247 = vmatprep.subr.bf16.mxu0 0
        %1248 = vmatpush1.bf16.msra.mxu0 0
        %1249 = vmatprep.subr.bf16.mxu0 0
        %1250 = vmatpush1.bf16.msra.mxu0 0
        %1251 = vmatprep.subr.bf16.mxu0 0
        %1252 = vmatpush1.bf16.msra.mxu0 0
        %1253 = vmatprep.subr.bf16.mxu0 0
        %1254 = vmatpush1.bf16.msra.mxu0 0
        %1255 = vmatprep.mubr.bf16.mxu0 0
        %1256 = vmatmul.mubr.bf16.gmra.mrb[0].mxu0 %v1221
        %v1257 = vpop.f32.mrb[0].mxu0
        %v1258 = vadd.f32 0.0, %v1257
        %v1259 = vpop.f32.mrb[0].mxu0
        %v1260 = vpop.f32.mrb[0].mxu0
        %v1261 = vadd.f32 0.0, %v1260
        %v1262 = vpop.f32.mrb[0].mxu0
        %1263 = vdwg.mxu0
        %v1264 = vmax.f32 %v1179, %v1258
        %v1265 = vmax.f32 %v1180, %v1261
        %v1266 = vadd.f32 %v1264, %v907
        %v1267 = vadd.f32 %v1265, %v910
        %v1268 = vmul.f32 %v1266, 0.2
        %v1269 = vmul.f32 %v1267, 0.2
        %v1270 = vmax.f32 %v1266, %v1268
        %v1271 = vmax.f32 %v1267, %v1269
        %v1272 = vpack.c.bf16 %v1271, %v1270
        %v1273 = vld [vmem:[#allocation8] sm:$0xf]
        %v1274 = vld [vmem:[#allocation8 + $0x4] sm:$0xf]
        %v1275 = vld [vmem:[#allocation8 + $0x8] sm:$0xf]
        %v1276 = vld [vmem:[#allocation8 + $0xc] sm:$0xf]
        %v1277 = vld [vmem:[#allocation8 + $0x10] sm:$0xf]
        %v1278 = vld [vmem:[#allocation8 + $0x14] sm:$0xf]
        %v1279 = vld [vmem:[#allocation8 + $0x18] sm:$0xf]
        %v1280 = vld [vmem:[#allocation8 + $0x1c] sm:$0xf]
        %v1281 = vld [vmem:[#allocation10] sm:$0xf]
        %v1282 = vld [vmem:[#allocation10 + $0x4] sm:$0xf]
        %v1283 = vld [vmem:[#allocation10 + $0x8] sm:$0xf]
        %v1284 = vld [vmem:[#allocation10 + $0xc] sm:$0xf]
        %v1285 = vld [vmem:[#allocation10 + $0x10] sm:$0xf]
        %v1286 = vld [vmem:[#allocation10 + $0x14] sm:$0xf]
        %v1287 = vld [vmem:[#allocation10 + $0x18] sm:$0xf]
        %v1288 = vld [vmem:[#allocation10 + $0x1c] sm:$0xf]
        %v1289 = vld [vmem:[#allocation11] sm:$0x1]
        %v1290 = vunpack.c.l.bf16 %v1272
        %v1291 = vunpack.c.h.bf16 %v1272
        %v1292 = vmul.f32 %v1290, %v1290
        %v1293 = vmul.f32 %v1291, %v1291
        %vm1294 = vcmask 523264
        %v1295 = vsel %vm1294, %v1292, 0.0
        %1296 = vadd.xlane.f32.xlu0 %v1295
        %v1297 = vpop.xlane.xlu0 %1296
        %v1298 = vsel %vm1294, %v1293, 0.0
        %1299 = vadd.xlane.f32.xlu0 %v1298
        %v1300 = vpop.xlane.xlu0 %1299
        %v1302 = vsel %vm1294, %v1272, 0
        %1304 = vmatprep.subr.bf16.mxu0 0
        %1305 = vmatpush1.bf16.xpose.msra.mxu0 %v1302
        %1306 = vmatprep.subr.bf16.mxu0 0
        %1307 = vmatpush1.bf16.xpose.msra.mxu0 0
        %1308 = vmatprep.subr.bf16.mxu0 0
        %1309 = vmatpush1.bf16.xpose.msra.mxu0 0
        %1310 = vmatprep.subr.bf16.mxu0 0
        %1311 = vmatpush1.bf16.xpose.msra.mxu0 0
        %1312 = vmatprep.subr.bf16.mxu0 0
        %1313 = vmatpush1.bf16.xpose.msra.mxu0 0
        %1314 = vmatprep.subr.bf16.mxu0 0
        %1315 = vmatpush1.bf16.xpose.msra.mxu0 0
        %1316 = vmatprep.subr.bf16.mxu0 0
        %1317 = vmatpush1.bf16.xpose.msra.mxu0 0
        %1318 = vmatprep.subr.bf16.mxu0 0
        %1319 = vmatpush1.bf16.xpose.msra.mxu0 0
        %1320 = vmatprep.subr.bf16.mxu0 0
        %1321 = vmatpush1.bf16.xpose.msra.mxu0 0
        %1322 = vmatprep.subr.bf16.mxu0 0
        %1323 = vmatpush1.bf16.xpose.msra.mxu0 0
        %1324 = vmatprep.subr.bf16.mxu0 0
        %1325 = vmatpush1.bf16.xpose.msra.mxu0 0
        %1326 = vmatprep.subr.bf16.mxu0 0
        %1327 = vmatpush1.bf16.xpose.msra.mxu0 0
        %1328 = vmatprep.subr.bf16.mxu0 0
        %1329 = vmatpush1.bf16.xpose.msra.mxu0 0
        %1330 = vmatprep.subr.bf16.mxu0 0
        %1331 = vmatpush1.bf16.xpose.msra.mxu0 0
        %1332 = vmatprep.subr.bf16.mxu0 0
        %1333 = vmatpush1.bf16.xpose.msra.mxu0 0
        %1334 = vmatprep.subr.bf16.mxu0 0
        %1335 = vmatpush1.bf16.xpose.msra.mxu0 0
        %1336 = vmatprep.mubr.bf16.mxu0 0
        %1337 = vmatmul.mubr.bf16.gmra.mrb[0].mxu0 %v1302
        %v1338 = vpop.f32.mrb[0].mxu0
        %v1339 = vadd.f32 0.0, %v1338
        %v1340 = vpop.f32.mrb[0].mxu0
        %v1341 = vpop.f32.mrb[0].mxu0
        %v1342 = vadd.f32 0.0, %v1341
        %v1343 = vpop.f32.mrb[0].mxu0
        %1344 = vdwg.mxu0
        %v1345 = vmul.f32 %v1339, 2.0
        %v1346 = vmul.f32 %v1342, 2.0
        %v1347 = vsub.f32 %v1345, %v1297
        %v1348 = vsub.f32 %v1346, %v1300
        %1349 = vxpose.xlu0.b32.start [1/16] %v1297, 128
        %1350 = vxpose.xlu0.b32.cont [2/16] %v1300, 128
        %1351 = vxpose.xlu0.b32.cont [3/16] 0.0, 128
        %1352 = vxpose.xlu0.b32.cont [4/16] 0.0, 128
        %1353 = vxpose.xlu0.b32.cont [5/16] 0.0, 128
        %1354 = vxpose.xlu0.b32.cont [6/16] 0.0, 128
        %1355 = vxpose.xlu0.b32.cont [7/16] 0.0, 128
        %1356 = vxpose.xlu0.b32.cont [8/16] 0.0, 128
        %1357 = vxpose.xlu0.b32.cont [9/16] 0.0, 128
        %1358 = vxpose.xlu0.b32.cont [10/16] 0.0, 128
        %1359 = vxpose.xlu0.b32.cont [11/16] 0.0, 128
        %1360 = vxpose.xlu0.b32.cont [12/16] 0.0, 128
        %1361 = vxpose.xlu0.b32.cont [13/16] 0.0, 128
        %1362 = vxpose.xlu0.b32.cont [14/16] 0.0, 128
        %1363 = vxpose.xlu0.b32.cont [15/16] 0.0, 128
        %1364 = vxpose.xlu0.b32.end [16/16] 0.0, 128
        %v1365 = vpop.trf.xlu0
        %v1366 = vpop.trf.xlu0
        %v1367 = vpop.trf.xlu0
        %v1368 = vpop.trf.xlu0
        %v1369 = vpop.trf.xlu0
        %v1370 = vpop.trf.xlu0
        %v1371 = vpop.trf.xlu0
        %v1372 = vpop.trf.xlu0
        %v1373 = vpop.trf.xlu0
        %v1374 = vpop.trf.xlu0
        %v1375 = vpop.trf.xlu0
        %v1376 = vpop.trf.xlu0
        %v1377 = vpop.trf.xlu0
        %v1378 = vpop.trf.xlu0
        %v1379 = vpop.trf.xlu0
        %v1380 = vpop.trf.xlu0
        %v1381 = vlaneseq
        %v1382 = vshrl.u32 %v1381, 7
        %v1383 = vsub.s32 0, %v1382
        %v1384 = vrot.slane %v1365, %v1383
        %v1385 = vsub.f32 %v1347, %v1384
        %v1386 = vsub.f32 %v1348, %v1384
        %v1395 = vunpack.c.l.b16 %v1273
        %v1396 = vunpack.c.l.b16 %v1274
        %v1397 = vunpack.c.l.b16 %v1275
        %v1398 = vunpack.c.l.b16 %v1276
        %v1399 = vunpack.c.l.b16 %v1277
        %v1400 = vunpack.c.l.b16 %v1278
        %v1401 = vunpack.c.l.b16 %v1279
        %v1402 = vunpack.c.l.b16 %v1280
        %v1403 = vpack.c.b16 %v1396, %v1395
        %v1404 = vpack.c.b16 %v1398, %v1397
        %v1405 = vpack.c.b16 %v1400, %v1399
        %v1406 = vpack.c.b16 %v1402, %v1401
        %1411 = vmatprep.subr.bf16.mxu0 0
        %1412 = vmatpush1.bf16.msra.mxu0 %v1403
        %1413 = vmatprep.subr.bf16.mxu0 0
        %1414 = vmatpush1.bf16.msra.mxu0 %v1404
        %1415 = vmatprep.subr.bf16.mxu0 0
        %1416 = vmatpush1.bf16.msra.mxu0 %v1405
        %1417 = vmatprep.subr.bf16.mxu0 0
        %1418 = vmatpush1.bf16.msra.mxu0 %v1406
        %1419 = vmatprep.subr.bf16.mxu0 0
        %1420 = vmatpush1.bf16.msra.mxu0 0
        %1421 = vmatprep.subr.bf16.mxu0 0
        %1422 = vmatpush1.bf16.msra.mxu0 0
        %1423 = vmatprep.subr.bf16.mxu0 0
        %1424 = vmatpush1.bf16.msra.mxu0 0
        %1425 = vmatprep.subr.bf16.mxu0 0
        %1426 = vmatpush1.bf16.msra.mxu0 0
        %1427 = vmatprep.subr.bf16.mxu0 0
        %1428 = vmatpush1.bf16.msra.mxu0 0
        %1429 = vmatprep.subr.bf16.mxu0 0
        %1430 = vmatpush1.bf16.msra.mxu0 0
        %1431 = vmatprep.subr.bf16.mxu0 0
        %1432 = vmatpush1.bf16.msra.mxu0 0
        %1433 = vmatprep.subr.bf16.mxu0 0
        %1434 = vmatpush1.bf16.msra.mxu0 0
        %1435 = vmatprep.subr.bf16.mxu0 0
        %1436 = vmatpush1.bf16.msra.mxu0 0
        %1437 = vmatprep.subr.bf16.mxu0 0
        %1438 = vmatpush1.bf16.msra.mxu0 0
        %1439 = vmatprep.subr.bf16.mxu0 0
        %1440 = vmatpush1.bf16.msra.mxu0 0
        %1441 = vmatprep.subr.bf16.mxu0 0
        %1442 = vmatpush1.bf16.msra.mxu0 0
        %1443 = vmatprep.mubr.bf16.mxu0 0
        %1444 = vmatmul.mubr.bf16.gmra.mrb[0].mxu0 %v1302
        %v1445 = vpop.f32.mrb[0].mxu0
        %v1446 = vadd.f32 0.0, %v1445
        %v1447 = vpop.f32.mrb[0].mxu0
        %v1448 = vpop.f32.mrb[0].mxu0
        %v1449 = vadd.f32 0.0, %v1448
        %v1450 = vpop.f32.mrb[0].mxu0
        %1451 = vdwg.mxu0
        %v1453 = vlaneseq
        %v1454 = vshrl.u32 %v1453, 7
        %v1455 = vsub.s32 0, %v1454
        %v1456 = vrot.slane %v1289, %v1455
        %v1466 = vunpack.c.l.b16 %v1281
        %v1467 = vunpack.c.l.b16 %v1282
        %v1468 = vunpack.c.l.b16 %v1283
        %v1469 = vunpack.c.l.b16 %v1284
        %v1470 = vunpack.c.l.b16 %v1285
        %v1471 = vunpack.c.l.b16 %v1286
        %v1472 = vunpack.c.l.b16 %v1287
        %v1473 = vunpack.c.l.b16 %v1288
        %v1474 = vpack.c.b16 %v1467, %v1466
        %v1475 = vpack.c.b16 %v1469, %v1468
        %v1476 = vpack.c.b16 %v1471, %v1470
        %v1477 = vpack.c.b16 %v1473, %v1472
        %1482 = vmatprep.subr.bf16.mxu0 0
        %1483 = vmatpush1.bf16.msra.mxu0 %v1474
        %1484 = vmatprep.subr.bf16.mxu0 0
        %1485 = vmatpush1.bf16.msra.mxu0 %v1475
        %1486 = vmatprep.subr.bf16.mxu0 0
        %1487 = vmatpush1.bf16.msra.mxu0 %v1476
        %1488 = vmatprep.subr.bf16.mxu0 0
        %1489 = vmatpush1.bf16.msra.mxu0 %v1477
        %1490 = vmatprep.subr.bf16.mxu0 0
        %1491 = vmatpush1.bf16.msra.mxu0 0
        %1492 = vmatprep.subr.bf16.mxu0 0
        %1493 = vmatpush1.bf16.msra.mxu0 0
        %1494 = vmatprep.subr.bf16.mxu0 0
        %1495 = vmatpush1.bf16.msra.mxu0 0
        %1496 = vmatprep.subr.bf16.mxu0 0
        %1497 = vmatpush1.bf16.msra.mxu0 0
        %1498 = vmatprep.subr.bf16.mxu0 0
        %1499 = vmatpush1.bf16.msra.mxu0 0
        %1500 = vmatprep.subr.bf16.mxu0 0
        %1501 = vmatpush1.bf16.msra.mxu0 0
        %1502 = vmatprep.subr.bf16.mxu0 0
        %1503 = vmatpush1.bf16.msra.mxu0 0
        %1504 = vmatprep.subr.bf16.mxu0 0
        %1505 = vmatpush1.bf16.msra.mxu0 0
        %1506 = vmatprep.subr.bf16.mxu0 0
        %1507 = vmatpush1.bf16.msra.mxu0 0
        %1508 = vmatprep.subr.bf16.mxu0 0
        %1509 = vmatpush1.bf16.msra.mxu0 0
        %1510 = vmatprep.subr.bf16.mxu0 0
        %1511 = vmatpush1.bf16.msra.mxu0 0
        %1512 = vmatprep.subr.bf16.mxu0 0
        %1513 = vmatpush1.bf16.msra.mxu0 0
        %1514 = vmatprep.mubr.bf16.mxu0 0
        %1515 = vmatmul.mubr.bf16.gmra.mrb[0].mxu0 %v1302
        %v1516 = vpop.f32.mrb[0].mxu0
        %v1517 = vadd.f32 %v1456, %v1516
        %v1518 = vpop.f32.mrb[0].mxu0
        %v1519 = vpop.f32.mrb[0].mxu0
        %v1520 = vadd.f32 %v1456, %v1519
        %v1521 = vpop.f32.mrb[0].mxu0
        %1522 = vdwg.mxu0
        %v1523 = vpack.c.bf16 %v1449, %v1446
        %vm1526 = vcmp.lt.s32.totalorder %v1385, 0
        %vm1527 = vcmp.lt.s32.totalorder %v1386, 0
        %v1528 = vxor.u32 %v1385, 2147483647
        %v1529 = vxor.u32 %v1386, 2147483647
        %v1530 = vsel %vm1526, %v1528, %v1385
        %v1531 = vsel %vm1527, %v1529, %v1386
        %v1532 = vand.u32 %v1530, 4294967280
        %v1533 = vand.u32 %v1531, 4294967280
        %v1534 = vor.u32 %v1532, %v926
        %v1535 = vor.u32 %v1533, %v926
        %v1536 = vsel %vm929, %v1534, 2147483648
        %v1537 = vand.u32 %v1536, 65535
        %v1538 = vshra.s32 %v1536, 16
        %v1539 = vcvt.s32.f32 %v1537
        %v1540 = vcvt.s32.f32 %v1538
        %1541 = vmax.xlane.f32.xlu0 %v1540
        %v1542 = vpop.xlane.xlu0 %1541
        %vm1543 = vcmp.eq.f32.partialorder %v1540, %v1542
        %v1544 = vsel %vm1543, %v1539, -inf
        %1545 = vmax.xlane.f32.xlu0 %v1544
        %v1546 = vpop.xlane.xlu0 %1545
        %v1547 = vcvt.f32.s32 %v1546
        %v1548 = vcvt.f32.s32 %v1542
        %v1549 = vshll.u32 %v1548, 16
        %v1550 = vadd.s32 %v1549, %v1547
        %v1551 = vsel %vm929, %v1535, 2147483648
        %v1552 = vand.u32 %v1551, 65535
        %v1553 = vshra.s32 %v1551, 16
        %v1554 = vcvt.s32.f32 %v1552
        %v1555 = vcvt.s32.f32 %v1553
        %1556 = vmax.xlane.f32.xlu0 %v1555
        %v1557 = vpop.xlane.xlu0 %1556
        %vm1558 = vcmp.eq.f32.partialorder %v1555, %v1557
        %v1559 = vsel %vm1558, %v1554, -inf
        %1560 = vmax.xlane.f32.xlu0 %v1559
        %v1561 = vpop.xlane.xlu0 %1560
        %v1562 = vcvt.f32.s32 %v1561
        %v1563 = vcvt.f32.s32 %v1557
        %v1564 = vshll.u32 %v1563, 16
        %v1565 = vadd.s32 %v1564, %v1562
        %vm1566 = vcmp.eq.s32.totalorder %v1534, %v1550
        %vm1567 = vcmp.eq.s32.totalorder %v1535, %v1565
        %v1568 = vsel %vm1566, 1, 0
        %v1569 = vsel %vm1567, 1, 0
        %v1570 = vcvt.s32.f32 %v1568
        %v1571 = vcvt.s32.f32 %v1569
        %v1572 = vpack.c.bf16 %v1571, %v1570
        %v1574 = vsel %vm929, %v1572, 0
        %1576 = vmatprep.subr.bf16.mxu0 0
        %1577 = vmatpush1.bf16.msra.mxu0 %v1523
        %1578 = vmatprep.subr.bf16.mxu0 0
        %1579 = vmatpush1.bf16.msra.mxu0 0
        %1580 = vmatprep.subr.bf16.mxu0 0
        %1581 = vmatpush1.bf16.msra.mxu0 0
        %1582 = vmatprep.subr.bf16.mxu0 0
        %1583 = vmatpush1.bf16.msra.mxu0 0
        %1584 = vmatprep.subr.bf16.mxu0 0
        %1585 = vmatpush1.bf16.msra.mxu0 0
        %1586 = vmatprep.subr.bf16.mxu0 0
        %1587 = vmatpush1.bf16.msra.mxu0 0
        %1588 = vmatprep.subr.bf16.mxu0 0
        %1589 = vmatpush1.bf16.msra.mxu0 0
        %1590 = vmatprep.subr.bf16.mxu0 0
        %1591 = vmatpush1.bf16.msra.mxu0 0
        %1592 = vmatprep.subr.bf16.mxu0 0
        %1593 = vmatpush1.bf16.msra.mxu0 0
        %1594 = vmatprep.subr.bf16.mxu0 0
        %1595 = vmatpush1.bf16.msra.mxu0 0
        %1596 = vmatprep.subr.bf16.mxu0 0
        %1597 = vmatpush1.bf16.msra.mxu0 0
        %1598 = vmatprep.subr.bf16.mxu0 0
        %1599 = vmatpush1.bf16.msra.mxu0 0
        %1600 = vmatprep.subr.bf16.mxu0 0
        %1601 = vmatpush1.bf16.msra.mxu0 0
        %1602 = vmatprep.subr.bf16.mxu0 0
        %1603 = vmatpush1.bf16.msra.mxu0 0
        %1604 = vmatprep.subr.bf16.mxu0 0
        %1605 = vmatpush1.bf16.msra.mxu0 0
        %1606 = vmatprep.subr.bf16.mxu0 0
        %1607 = vmatpush1.bf16.msra.mxu0 0
        %1608 = vmatprep.mubr.bf16.mxu0 0
        %1609 = vmatmul.mubr.bf16.gmra.mrb[0].mxu0 %v1574
        %v1610 = vpop.f32.mrb[0].mxu0
        %v1611 = vadd.f32 0.0, %v1610
        %v1612 = vpop.f32.mrb[0].mxu0
        %v1613 = vpop.f32.mrb[0].mxu0
        %v1614 = vadd.f32 0.0, %v1613
        %v1615 = vpop.f32.mrb[0].mxu0
        %1616 = vdwg.mxu0
        %v1617 = vsel %vm1566, 2147483648, %v1534
        %v1618 = vsel %vm1567, 2147483648, %v1535
        %v1619 = vsel %vm929, %v1617, 2147483648
        %v1620 = vand.u32 %v1619, 65535
        %v1621 = vshra.s32 %v1619, 16
        %v1622 = vcvt.s32.f32 %v1620
        %v1623 = vcvt.s32.f32 %v1621
        %1624 = vmax.xlane.f32.xlu0 %v1623
        %v1625 = vpop.xlane.xlu0 %1624
        %vm1626 = vcmp.eq.f32.partialorder %v1623, %v1625
        %v1627 = vsel %vm1626, %v1622, -inf
        %1628 = vmax.xlane.f32.xlu0 %v1627
        %v1629 = vpop.xlane.xlu0 %1628
        %v1630 = vcvt.f32.s32 %v1629
        %v1631 = vcvt.f32.s32 %v1625
        %v1632 = vshll.u32 %v1631, 16
        %v1633 = vadd.s32 %v1632, %v1630
        %v1634 = vsel %vm929, %v1618, 2147483648
        %v1635 = vand.u32 %v1634, 65535
        %v1636 = vshra.s32 %v1634, 16
        %v1637 = vcvt.s32.f32 %v1635
        %v1638 = vcvt.s32.f32 %v1636
        %1639 = vmax.xlane.f32.xlu0 %v1638
        %v1640 = vpop.xlane.xlu0 %1639
        %vm1641 = vcmp.eq.f32.partialorder %v1638, %v1640
        %v1642 = vsel %vm1641, %v1637, -inf
        %1643 = vmax.xlane.f32.xlu0 %v1642
        %v1644 = vpop.xlane.xlu0 %1643
        %v1645 = vcvt.f32.s32 %v1644
        %v1646 = vcvt.f32.s32 %v1640
        %v1647 = vshll.u32 %v1646, 16
        %v1648 = vadd.s32 %v1647, %v1645
        %vm1649 = vcmp.eq.s32.totalorder %v1617, %v1633
        %vm1650 = vcmp.eq.s32.totalorder %v1618, %v1648
        %v1651 = vsel %vm1649, 1, 0
        %v1652 = vsel %vm1650, 1, 0
        %v1653 = vcvt.s32.f32 %v1651
        %v1654 = vcvt.s32.f32 %v1652
        %v1655 = vpack.c.bf16 %v1654, %v1653
        %v1657 = vsel %vm929, %v1655, 0
        %1659 = vmatprep.subr.bf16.mxu0 0
        %1660 = vmatpush1.bf16.msra.mxu0 %v1523
        %1661 = vmatprep.subr.bf16.mxu0 0
        %1662 = vmatpush1.bf16.msra.mxu0 0
        %1663 = vmatprep.subr.bf16.mxu0 0
        %1664 = vmatpush1.bf16.msra.mxu0 0
        %1665 = vmatprep.subr.bf16.mxu0 0
        %1666 = vmatpush1.bf16.msra.mxu0 0
        %1667 = vmatprep.subr.bf16.mxu0 0
        %1668 = vmatpush1.bf16.msra.mxu0 0
        %1669 = vmatprep.subr.bf16.mxu0 0
        %1670 = vmatpush1.bf16.msra.mxu0 0
        %1671 = vmatprep.subr.bf16.mxu0 0
        %1672 = vmatpush1.bf16.msra.mxu0 0
        %1673 = vmatprep.subr.bf16.mxu0 0
        %1674 = vmatpush1.bf16.msra.mxu0 0
        %1675 = vmatprep.subr.bf16.mxu0 0
        %1676 = vmatpush1.bf16.msra.mxu0 0
        %1677 = vmatprep.subr.bf16.mxu0 0
        %1678 = vmatpush1.bf16.msra.mxu0 0
        %1679 = vmatprep.subr.bf16.mxu0 0
        %1680 = vmatpush1.bf16.msra.mxu0 0
        %1681 = vmatprep.subr.bf16.mxu0 0
        %1682 = vmatpush1.bf16.msra.mxu0 0
        %1683 = vmatprep.subr.bf16.mxu0 0
        %1684 = vmatpush1.bf16.msra.mxu0 0
        %1685 = vmatprep.subr.bf16.mxu0 0
        %1686 = vmatpush1.bf16.msra.mxu0 0
        %1687 = vmatprep.subr.bf16.mxu0 0
        %1688 = vmatpush1.bf16.msra.mxu0 0
        %1689 = vmatprep.subr.bf16.mxu0 0
        %1690 = vmatpush1.bf16.msra.mxu0 0
        %1691 = vmatprep.mubr.bf16.mxu0 0
        %1692 = vmatmul.mubr.bf16.gmra.mrb[0].mxu0 %v1657
        %v1693 = vpop.f32.mrb[0].mxu0
        %v1694 = vadd.f32 0.0, %v1693
        %v1695 = vpop.f32.mrb[0].mxu0
        %v1696 = vpop.f32.mrb[0].mxu0
        %v1697 = vadd.f32 0.0, %v1696
        %v1698 = vpop.f32.mrb[0].mxu0
        %1699 = vdwg.mxu0
        %v1700 = vmax.f32 %v1611, %v1694
        %v1701 = vmax.f32 %v1614, %v1697
        %v1702 = vsel %vm1649, 2147483648, %v1617
        %v1703 = vsel %vm1650, 2147483648, %v1618
        %v1704 = vsel %vm929, %v1702, 2147483648
        %v1705 = vand.u32 %v1704, 65535
        %v1706 = vshra.s32 %v1704, 16
        %v1707 = vcvt.s32.f32 %v1705
        %v1708 = vcvt.s32.f32 %v1706
        %1709 = vmax.xlane.f32.xlu0 %v1708
        %v1710 = vpop.xlane.xlu0 %1709
        %vm1711 = vcmp.eq.f32.partialorder %v1708, %v1710
        %v1712 = vsel %vm1711, %v1707, -inf
        %1713 = vmax.xlane.f32.xlu0 %v1712
        %v1714 = vpop.xlane.xlu0 %1713
        %v1715 = vcvt.f32.s32 %v1714
        %v1716 = vcvt.f32.s32 %v1710
        %v1717 = vshll.u32 %v1716, 16
        %v1718 = vadd.s32 %v1717, %v1715
        %v1719 = vsel %vm929, %v1703, 2147483648
        %v1720 = vand.u32 %v1719, 65535
        %v1721 = vshra.s32 %v1719, 16
        %v1722 = vcvt.s32.f32 %v1720
        %v1723 = vcvt.s32.f32 %v1721
        %1724 = vmax.xlane.f32.xlu0 %v1723
        %v1725 = vpop.xlane.xlu0 %1724
        %vm1726 = vcmp.eq.f32.partialorder %v1723, %v1725
        %v1727 = vsel %vm1726, %v1722, -inf
        %1728 = vmax.xlane.f32.xlu0 %v1727
        %v1729 = vpop.xlane.xlu0 %1728
        %v1730 = vcvt.f32.s32 %v1729
        %v1731 = vcvt.f32.s32 %v1725
        %v1732 = vshll.u32 %v1731, 16
        %v1733 = vadd.s32 %v1732, %v1730
        %vm1734 = vcmp.eq.s32.totalorder %v1702, %v1718
        %vm1735 = vcmp.eq.s32.totalorder %v1703, %v1733
        %v1736 = vsel %vm1734, 1, 0
        %v1737 = vsel %vm1735, 1, 0
        %v1738 = vcvt.s32.f32 %v1736
        %v1739 = vcvt.s32.f32 %v1737
        %v1740 = vpack.c.bf16 %v1739, %v1738
        %v1742 = vsel %vm929, %v1740, 0
        %1744 = vmatprep.subr.bf16.mxu0 0
        %1745 = vmatpush1.bf16.msra.mxu0 %v1523
        %1746 = vmatprep.subr.bf16.mxu0 0
        %1747 = vmatpush1.bf16.msra.mxu0 0
        %1748 = vmatprep.subr.bf16.mxu0 0
        %1749 = vmatpush1.bf16.msra.mxu0 0
        %1750 = vmatprep.subr.bf16.mxu0 0
        %1751 = vmatpush1.bf16.msra.mxu0 0
        %1752 = vmatprep.subr.bf16.mxu0 0
        %1753 = vmatpush1.bf16.msra.mxu0 0
        %1754 = vmatprep.subr.bf16.mxu0 0
        %1755 = vmatpush1.bf16.msra.mxu0 0
        %1756 = vmatprep.subr.bf16.mxu0 0
        %1757 = vmatpush1.bf16.msra.mxu0 0
        %1758 = vmatprep.subr.bf16.mxu0 0
        %1759 = vmatpush1.bf16.msra.mxu0 0
        %1760 = vmatprep.subr.bf16.mxu0 0
        %1761 = vmatpush1.bf16.msra.mxu0 0
        %1762 = vmatprep.subr.bf16.mxu0 0
        %1763 = vmatpush1.bf16.msra.mxu0 0
        %1764 = vmatprep.subr.bf16.mxu0 0
        %1765 = vmatpush1.bf16.msra.mxu0 0
        %1766 = vmatprep.subr.bf16.mxu0 0
        %1767 = vmatpush1.bf16.msra.mxu0 0
        %1768 = vmatprep.subr.bf16.mxu0 0
        %1769 = vmatpush1.bf16.msra.mxu0 0
        %1770 = vmatprep.subr.bf16.mxu0 0
        %1771 = vmatpush1.bf16.msra.mxu0 0
        %1772 = vmatprep.subr.bf16.mxu0 0
        %1773 = vmatpush1.bf16.msra.mxu0 0
        %1774 = vmatprep.subr.bf16.mxu0 0
        %1775 = vmatpush1.bf16.msra.mxu0 0
        %1776 = vmatprep.mubr.bf16.mxu0 0
        %1777 = vmatmul.mubr.bf16.gmra.mrb[0].mxu0 %v1742
        %v1778 = vpop.f32.mrb[0].mxu0
        %v1779 = vadd.f32 0.0, %v1778
        %v1780 = vpop.f32.mrb[0].mxu0
        %v1781 = vpop.f32.mrb[0].mxu0
        %v1782 = vadd.f32 0.0, %v1781
        %v1783 = vpop.f32.mrb[0].mxu0
        %1784 = vdwg.mxu0
        %v1785 = vmax.f32 %v1700, %v1779
        %v1786 = vmax.f32 %v1701, %v1782
        %v1787 = vsel %vm1734, 2147483648, %v1702
        %v1788 = vsel %vm1735, 2147483648, %v1703
        %v1789 = vsel %vm929, %v1787, 2147483648
        %v1790 = vand.u32 %v1789, 65535
        %v1791 = vshra.s32 %v1789, 16
        %v1792 = vcvt.s32.f32 %v1790
        %v1793 = vcvt.s32.f32 %v1791
        %1794 = vmax.xlane.f32.xlu0 %v1793
        %v1795 = vpop.xlane.xlu0 %1794
        %vm1796 = vcmp.eq.f32.partialorder %v1793, %v1795
        %v1797 = vsel %vm1796, %v1792, -inf
        %1798 = vmax.xlane.f32.xlu0 %v1797
        %v1799 = vpop.xlane.xlu0 %1798
        %v1800 = vcvt.f32.s32 %v1799
        %v1801 = vcvt.f32.s32 %v1795
        %v1802 = vshll.u32 %v1801, 16
        %v1803 = vadd.s32 %v1802, %v1800
        %v1804 = vsel %vm929, %v1788, 2147483648
        %v1805 = vand.u32 %v1804, 65535
        %v1806 = vshra.s32 %v1804, 16
        %v1807 = vcvt.s32.f32 %v1805
        %v1808 = vcvt.s32.f32 %v1806
        %1809 = vmax.xlane.f32.xlu0 %v1808
        %v1810 = vpop.xlane.xlu0 %1809
        %vm1811 = vcmp.eq.f32.partialorder %v1808, %v1810
        %v1812 = vsel %vm1811, %v1807, -inf
        %1813 = vmax.xlane.f32.xlu0 %v1812
        %v1814 = vpop.xlane.xlu0 %1813
        %v1815 = vcvt.f32.s32 %v1814
        %v1816 = vcvt.f32.s32 %v1810
        %v1817 = vshll.u32 %v1816, 16
        %v1818 = vadd.s32 %v1817, %v1815
        %vm1819 = vcmp.eq.s32.totalorder %v1787, %v1803
        %vm1820 = vcmp.eq.s32.totalorder %v1788, %v1818
        %v1821 = vsel %vm1819, 1, 0
        %v1822 = vsel %vm1820, 1, 0
        %v1823 = vcvt.s32.f32 %v1821
        %v1824 = vcvt.s32.f32 %v1822
        %v1825 = vpack.c.bf16 %v1824, %v1823
        %v1827 = vsel %vm929, %v1825, 0
        %1829 = vmatprep.subr.bf16.mxu0 0
        %1830 = vmatpush1.bf16.msra.mxu0 %v1523
        %1831 = vmatprep.subr.bf16.mxu0 0
        %1832 = vmatpush1.bf16.msra.mxu0 0
        %1833 = vmatprep.subr.bf16.mxu0 0
        %1834 = vmatpush1.bf16.msra.mxu0 0
        %1835 = vmatprep.subr.bf16.mxu0 0
        %1836 = vmatpush1.bf16.msra.mxu0 0
        %1837 = vmatprep.subr.bf16.mxu0 0
        %1838 = vmatpush1.bf16.msra.mxu0 0
        %1839 = vmatprep.subr.bf16.mxu0 0
        %1840 = vmatpush1.bf16.msra.mxu0 0
        %1841 = vmatprep.subr.bf16.mxu0 0
        %1842 = vmatpush1.bf16.msra.mxu0 0
        %1843 = vmatprep.subr.bf16.mxu0 0
        %1844 = vmatpush1.bf16.msra.mxu0 0
        %1845 = vmatprep.subr.bf16.mxu0 0
        %1846 = vmatpush1.bf16.msra.mxu0 0
        %1847 = vmatprep.subr.bf16.mxu0 0
        %1848 = vmatpush1.bf16.msra.mxu0 0
        %1849 = vmatprep.subr.bf16.mxu0 0
        %1850 = vmatpush1.bf16.msra.mxu0 0
        %1851 = vmatprep.subr.bf16.mxu0 0
        %1852 = vmatpush1.bf16.msra.mxu0 0
        %1853 = vmatprep.subr.bf16.mxu0 0
        %1854 = vmatpush1.bf16.msra.mxu0 0
        %1855 = vmatprep.subr.bf16.mxu0 0
        %1856 = vmatpush1.bf16.msra.mxu0 0
        %1857 = vmatprep.subr.bf16.mxu0 0
        %1858 = vmatpush1.bf16.msra.mxu0 0
        %1859 = vmatprep.subr.bf16.mxu0 0
        %1860 = vmatpush1.bf16.msra.mxu0 0
        %1861 = vmatprep.mubr.bf16.mxu0 0
        %1862 = vmatmul.mubr.bf16.gmra.mrb[0].mxu0 %v1827
        %v1863 = vpop.f32.mrb[0].mxu0
        %v1864 = vadd.f32 0.0, %v1863
        %v1865 = vpop.f32.mrb[0].mxu0
        %v1866 = vpop.f32.mrb[0].mxu0
        %v1867 = vadd.f32 0.0, %v1866
        %v1868 = vpop.f32.mrb[0].mxu0
        %1869 = vdwg.mxu0
        %v1870 = vmax.f32 %v1785, %v1864
        %v1871 = vmax.f32 %v1786, %v1867
        %v1872 = vadd.f32 %v1870, %v1517
        %v1873 = vadd.f32 %v1871, %v1520
        %v1874 = vmul.f32 %v1872, 0.2
        %v1875 = vmul.f32 %v1873, 0.2
        %v1876 = vmax.f32 %v1872, %v1874
        %v1877 = vmax.f32 %v1873, %v1875
        %v1878 = vpack.c.bf16 %v1877, %v1876
        %v1879 = vld [vmem:[#allocation13] sm:$0xf]
        %v1880 = vld [vmem:[#allocation13 + $0x4] sm:$0xf]
        %v1881 = vld [vmem:[#allocation13 + $0x8] sm:$0xf]
        %v1882 = vld [vmem:[#allocation13 + $0xc] sm:$0xf]
        %v1883 = vld [vmem:[#allocation13 + $0x10] sm:$0xf]
        %v1884 = vld [vmem:[#allocation13 + $0x14] sm:$0xf]
        %v1885 = vld [vmem:[#allocation13 + $0x18] sm:$0xf]
        %v1886 = vld [vmem:[#allocation13 + $0x1c] sm:$0xf]
        %v1887 = vld [vmem:[#allocation14] sm:$0xf]
        %v1888 = vld [vmem:[#allocation14 + $0x4] sm:$0xf]
        %v1889 = vld [vmem:[#allocation14 + $0x8] sm:$0xf]
        %v1890 = vld [vmem:[#allocation14 + $0xc] sm:$0xf]
        %v1891 = vld [vmem:[#allocation14 + $0x10] sm:$0xf]
        %v1892 = vld [vmem:[#allocation14 + $0x14] sm:$0xf]
        %v1893 = vld [vmem:[#allocation14 + $0x18] sm:$0xf]
        %v1894 = vld [vmem:[#allocation14 + $0x1c] sm:$0xf]
        %v1895 = vld [vmem:[%s9] sm:$0x1]
        %v1896 = vunpack.c.l.bf16 %v1878
        %v1897 = vunpack.c.h.bf16 %v1878
        %v1898 = vmul.f32 %v1896, %v1896
        %v1899 = vmul.f32 %v1897, %v1897
        %v1900 = vsel %vm1294, %v1898, 0.0
        %1901 = vadd.xlane.f32.xlu0 %v1900
        %v1902 = vpop.xlane.xlu0 %1901
        %v1903 = vsel %vm1294, %v1899, 0.0
        %1904 = vadd.xlane.f32.xlu0 %v1903
        %v1905 = vpop.xlane.xlu0 %1904
        %v1907 = vsel %vm1294, %v1878, 0
        %1909 = vmatprep.subr.bf16.mxu0 0
        %1910 = vmatpush1.bf16.xpose.msra.mxu0 %v1907
        %1911 = vmatprep.subr.bf16.mxu0 0
        %1912 = vmatpush1.bf16.xpose.msra.mxu0 0
        %1913 = vmatprep.subr.bf16.mxu0 0
        %1914 = vmatpush1.bf16.xpose.msra.mxu0 0
        %1915 = vmatprep.subr.bf16.mxu0 0
        %1916 = vmatpush1.bf16.xpose.msra.mxu0 0
        %1917 = vmatprep.subr.bf16.mxu0 0
        %1918 = vmatpush1.bf16.xpose.msra.mxu0 0
        %1919 = vmatprep.subr.bf16.mxu0 0
        %1920 = vmatpush1.bf16.xpose.msra.mxu0 0
        %1921 = vmatprep.subr.bf16.mxu0 0
        %1922 = vmatpush1.bf16.xpose.msra.mxu0 0
        %1923 = vmatprep.subr.bf16.mxu0 0
        %1924 = vmatpush1.bf16.xpose.msra.mxu0 0
        %1925 = vmatprep.subr.bf16.mxu0 0
        %1926 = vmatpush1.bf16.xpose.msra.mxu0 0
        %1927 = vmatprep.subr.bf16.mxu0 0
        %1928 = vmatpush1.bf16.xpose.msra.mxu0 0
        %1929 = vmatprep.subr.bf16.mxu0 0
        %1930 = vmatpush1.bf16.xpose.msra.mxu0 0
        %1931 = vmatprep.subr.bf16.mxu0 0
        %1932 = vmatpush1.bf16.xpose.msra.mxu0 0
        %1933 = vmatprep.subr.bf16.mxu0 0
        %1934 = vmatpush1.bf16.xpose.msra.mxu0 0
        %1935 = vmatprep.subr.bf16.mxu0 0
        %1936 = vmatpush1.bf16.xpose.msra.mxu0 0
        %1937 = vmatprep.subr.bf16.mxu0 0
        %1938 = vmatpush1.bf16.xpose.msra.mxu0 0
        %1939 = vmatprep.subr.bf16.mxu0 0
        %1940 = vmatpush1.bf16.xpose.msra.mxu0 0
        %1941 = vmatprep.mubr.bf16.mxu0 0
        %1942 = vmatmul.mubr.bf16.gmra.mrb[0].mxu0 %v1907
        %v1943 = vpop.f32.mrb[0].mxu0
        %v1944 = vadd.f32 0.0, %v1943
        %v1945 = vpop.f32.mrb[0].mxu0
        %v1946 = vpop.f32.mrb[0].mxu0
        %v1947 = vadd.f32 0.0, %v1946
        %v1948 = vpop.f32.mrb[0].mxu0
        %1949 = vdwg.mxu0
        %v1950 = vmul.f32 %v1944, 2.0
        %v1951 = vmul.f32 %v1947, 2.0
        %v1952 = vsub.f32 %v1950, %v1902
        %v1953 = vsub.f32 %v1951, %v1905
        %1954 = vxpose.xlu0.b32.start [1/16] %v1902, 128
        %1955 = vxpose.xlu0.b32.cont [2/16] %v1905, 128
        %1956 = vxpose.xlu0.b32.cont [3/16] 0.0, 128
        %1957 = vxpose.xlu0.b32.cont [4/16] 0.0, 128
        %1958 = vxpose.xlu0.b32.cont [5/16] 0.0, 128
        %1959 = vxpose.xlu0.b32.cont [6/16] 0.0, 128
        %1960 = vxpose.xlu0.b32.cont [7/16] 0.0, 128
        %1961 = vxpose.xlu0.b32.cont [8/16] 0.0, 128
        %1962 = vxpose.xlu0.b32.cont [9/16] 0.0, 128
        %1963 = vxpose.xlu0.b32.cont [10/16] 0.0, 128
        %1964 = vxpose.xlu0.b32.cont [11/16] 0.0, 128
        %1965 = vxpose.xlu0.b32.cont [12/16] 0.0, 128
        %1966 = vxpose.xlu0.b32.cont [13/16] 0.0, 128
        %1967 = vxpose.xlu0.b32.cont [14/16] 0.0, 128
        %1968 = vxpose.xlu0.b32.cont [15/16] 0.0, 128
        %1969 = vxpose.xlu0.b32.end [16/16] 0.0, 128
        %v1970 = vpop.trf.xlu0
        %v1971 = vpop.trf.xlu0
        %v1972 = vpop.trf.xlu0
        %v1973 = vpop.trf.xlu0
        %v1974 = vpop.trf.xlu0
        %v1975 = vpop.trf.xlu0
        %v1976 = vpop.trf.xlu0
        %v1977 = vpop.trf.xlu0
        %v1978 = vpop.trf.xlu0
        %v1979 = vpop.trf.xlu0
        %v1980 = vpop.trf.xlu0
        %v1981 = vpop.trf.xlu0
        %v1982 = vpop.trf.xlu0
        %v1983 = vpop.trf.xlu0
        %v1984 = vpop.trf.xlu0
        %v1985 = vpop.trf.xlu0
        %v1986 = vlaneseq
        %v1987 = vshrl.u32 %v1986, 7
        %v1988 = vsub.s32 0, %v1987
        %v1989 = vrot.slane %v1970, %v1988
        %v1990 = vsub.f32 %v1952, %v1989
        %v1991 = vsub.f32 %v1953, %v1989
        %v2000 = vunpack.c.l.b16 %v1879
        %v2001 = vunpack.c.l.b16 %v1880
        %v2002 = vunpack.c.l.b16 %v1881
        %v2003 = vunpack.c.l.b16 %v1882
        %v2004 = vunpack.c.l.b16 %v1883
        %v2005 = vunpack.c.l.b16 %v1884
        %v2006 = vunpack.c.l.b16 %v1885
        %v2007 = vunpack.c.l.b16 %v1886
        %v2008 = vpack.c.b16 %v2001, %v2000
        %v2009 = vpack.c.b16 %v2003, %v2002
        %v2010 = vpack.c.b16 %v2005, %v2004
        %v2011 = vpack.c.b16 %v2007, %v2006
        %2016 = vmatprep.subr.bf16.mxu0 0
        %2017 = vmatpush1.bf16.msra.mxu0 %v2008
        %2018 = vmatprep.subr.bf16.mxu0 0
        %2019 = vmatpush1.bf16.msra.mxu0 %v2009
        %2020 = vmatprep.subr.bf16.mxu0 0
        %2021 = vmatpush1.bf16.msra.mxu0 %v2010
        %2022 = vmatprep.subr.bf16.mxu0 0
        %2023 = vmatpush1.bf16.msra.mxu0 %v2011
        %2024 = vmatprep.subr.bf16.mxu0 0
        %2025 = vmatpush1.bf16.msra.mxu0 0
        %2026 = vmatprep.subr.bf16.mxu0 0
        %2027 = vmatpush1.bf16.msra.mxu0 0
        %2028 = vmatprep.subr.bf16.mxu0 0
        %2029 = vmatpush1.bf16.msra.mxu0 0
        %2030 = vmatprep.subr.bf16.mxu0 0
        %2031 = vmatpush1.bf16.msra.mxu0 0
        %2032 = vmatprep.subr.bf16.mxu0 0
        %2033 = vmatpush1.bf16.msra.mxu0 0
        %2034 = vmatprep.subr.bf16.mxu0 0
        %2035 = vmatpush1.bf16.msra.mxu0 0
        %2036 = vmatprep.subr.bf16.mxu0 0
        %2037 = vmatpush1.bf16.msra.mxu0 0
        %2038 = vmatprep.subr.bf16.mxu0 0
        %2039 = vmatpush1.bf16.msra.mxu0 0
        %2040 = vmatprep.subr.bf16.mxu0 0
        %2041 = vmatpush1.bf16.msra.mxu0 0
        %2042 = vmatprep.subr.bf16.mxu0 0
        %2043 = vmatpush1.bf16.msra.mxu0 0
        %2044 = vmatprep.subr.bf16.mxu0 0
        %2045 = vmatpush1.bf16.msra.mxu0 0
        %2046 = vmatprep.subr.bf16.mxu0 0
        %2047 = vmatpush1.bf16.msra.mxu0 0
        %2048 = vmatprep.mubr.bf16.mxu0 0
        %2049 = vmatmul.mubr.bf16.gmra.mrb[0].mxu0 %v1907
        %v2050 = vpop.f32.mrb[0].mxu0
        %v2051 = vadd.f32 0.0, %v2050
        %v2052 = vpop.f32.mrb[0].mxu0
        %v2053 = vpop.f32.mrb[0].mxu0
        %v2054 = vadd.f32 0.0, %v2053
        %v2055 = vpop.f32.mrb[0].mxu0
        %2056 = vdwg.mxu0
        %v2058 = vlaneseq
        %v2059 = vshrl.u32 %v2058, 7
        %v2060 = vsub.s32 0, %v2059
        %v2061 = vrot.slane %v1895, %v2060
        %v2071 = vunpack.c.l.b16 %v1887
        %v2072 = vunpack.c.l.b16 %v1888
        %v2073 = vunpack.c.l.b16 %v1889
        %v2074 = vunpack.c.l.b16 %v1890
        %v2075 = vunpack.c.l.b16 %v1891
        %v2076 = vunpack.c.l.b16 %v1892
        %v2077 = vunpack.c.l.b16 %v1893
        %v2078 = vunpack.c.l.b16 %v1894
        %v2079 = vpack.c.b16 %v2072, %v2071
        %v2080 = vpack.c.b16 %v2074, %v2073
        %v2081 = vpack.c.b16 %v2076, %v2075
        %v2082 = vpack.c.b16 %v2078, %v2077
        %2087 = vmatprep.subr.bf16.mxu0 0
        %2088 = vmatpush1.bf16.msra.mxu0 %v2079
        %2089 = vmatprep.subr.bf16.mxu0 0
        %2090 = vmatpush1.bf16.msra.mxu0 %v2080
        %2091 = vmatprep.subr.bf16.mxu0 0
        %2092 = vmatpush1.bf16.msra.mxu0 %v2081
        %2093 = vmatprep.subr.bf16.mxu0 0
        %2094 = vmatpush1.bf16.msra.mxu0 %v2082
        %2095 = vmatprep.subr.bf16.mxu0 0
        %2096 = vmatpush1.bf16.msra.mxu0 0
        %2097 = vmatprep.subr.bf16.mxu0 0
        %2098 = vmatpush1.bf16.msra.mxu0 0
        %2099 = vmatprep.subr.bf16.mxu0 0
        %2100 = vmatpush1.bf16.msra.mxu0 0
        %2101 = vmatprep.subr.bf16.mxu0 0
        %2102 = vmatpush1.bf16.msra.mxu0 0
        %2103 = vmatprep.subr.bf16.mxu0 0
        %2104 = vmatpush1.bf16.msra.mxu0 0
        %2105 = vmatprep.subr.bf16.mxu0 0
        %2106 = vmatpush1.bf16.msra.mxu0 0
        %2107 = vmatprep.subr.bf16.mxu0 0
        %2108 = vmatpush1.bf16.msra.mxu0 0
        %2109 = vmatprep.subr.bf16.mxu0 0
        %2110 = vmatpush1.bf16.msra.mxu0 0
        %2111 = vmatprep.subr.bf16.mxu0 0
        %2112 = vmatpush1.bf16.msra.mxu0 0
        %2113 = vmatprep.subr.bf16.mxu0 0
        %2114 = vmatpush1.bf16.msra.mxu0 0
        %2115 = vmatprep.subr.bf16.mxu0 0
        %2116 = vmatpush1.bf16.msra.mxu0 0
        %2117 = vmatprep.subr.bf16.mxu0 0
        %2118 = vmatpush1.bf16.msra.mxu0 0
        %2119 = vmatprep.mubr.bf16.mxu0 0
        %2120 = vmatmul.mubr.bf16.gmra.mrb[0].mxu0 %v1907
        %v2121 = vpop.f32.mrb[0].mxu0
        %v2122 = vadd.f32 %v2061, %v2121
        %v2123 = vpop.f32.mrb[0].mxu0
        %v2124 = vpop.f32.mrb[0].mxu0
        %v2125 = vadd.f32 %v2061, %v2124
        %v2126 = vpop.f32.mrb[0].mxu0
        %2127 = vdwg.mxu0
        %v2128 = vpack.c.bf16 %v2054, %v2051
        %vm2131 = vcmp.lt.s32.totalorder %v1990, 0
        %vm2132 = vcmp.lt.s32.totalorder %v1991, 0
        %v2133 = vxor.u32 %v1990, 2147483647
        %v2134 = vxor.u32 %v1991, 2147483647
        %v2135 = vsel %vm2131, %v2133, %v1990
        %v2136 = vsel %vm2132, %v2134, %v1991
        %v2137 = vand.u32 %v2135, 4294967280
        %v2138 = vand.u32 %v2136, 4294967280
        %v2139 = vor.u32 %v2137, %v926
        %v2140 = vor.u32 %v2138, %v926
        %v2141 = vsel %vm929, %v2139, 2147483648
        %v2142 = vand.u32 %v2141, 65535
        %v2143 = vshra.s32 %v2141, 16
        %v2144 = vcvt.s32.f32 %v2142
        %v2145 = vcvt.s32.f32 %v2143
        %2146 = vmax.xlane.f32.xlu0 %v2145
        %v2147 = vpop.xlane.xlu0 %2146
        %vm2148 = vcmp.eq.f32.partialorder %v2145, %v2147
        %v2149 = vsel %vm2148, %v2144, -inf
        %2150 = vmax.xlane.f32.xlu0 %v2149
        %v2151 = vpop.xlane.xlu0 %2150
        %v2152 = vcvt.f32.s32 %v2151
        %v2153 = vcvt.f32.s32 %v2147
        %v2154 = vshll.u32 %v2153, 16
        %v2155 = vadd.s32 %v2154, %v2152
        %v2156 = vsel %vm929, %v2140, 2147483648
        %v2157 = vand.u32 %v2156, 65535
        %v2158 = vshra.s32 %v2156, 16
        %v2159 = vcvt.s32.f32 %v2157
        %v2160 = vcvt.s32.f32 %v2158
        %2161 = vmax.xlane.f32.xlu0 %v2160
        %v2162 = vpop.xlane.xlu0 %2161
        %vm2163 = vcmp.eq.f32.partialorder %v2160, %v2162
        %v2164 = vsel %vm2163, %v2159, -inf
        %2165 = vmax.xlane.f32.xlu0 %v2164
        %v2166 = vpop.xlane.xlu0 %2165
        %v2167 = vcvt.f32.s32 %v2166
        %v2168 = vcvt.f32.s32 %v2162
        %v2169 = vshll.u32 %v2168, 16
        %v2170 = vadd.s32 %v2169, %v2167
        %vm2171 = vcmp.eq.s32.totalorder %v2139, %v2155
        %vm2172 = vcmp.eq.s32.totalorder %v2140, %v2170
        %v2173 = vsel %vm2171, 1, 0
        %v2174 = vsel %vm2172, 1, 0
        %v2175 = vcvt.s32.f32 %v2173
        %v2176 = vcvt.s32.f32 %v2174
        %v2177 = vpack.c.bf16 %v2176, %v2175
        %v2179 = vsel %vm929, %v2177, 0
        %2181 = vmatprep.subr.bf16.mxu0 0
        %2182 = vmatpush1.bf16.msra.mxu0 %v2128
        %2183 = vmatprep.subr.bf16.mxu0 0
        %2184 = vmatpush1.bf16.msra.mxu0 0
        %2185 = vmatprep.subr.bf16.mxu0 0
        %2186 = vmatpush1.bf16.msra.mxu0 0
        %2187 = vmatprep.subr.bf16.mxu0 0
        %2188 = vmatpush1.bf16.msra.mxu0 0
        %2189 = vmatprep.subr.bf16.mxu0 0
        %2190 = vmatpush1.bf16.msra.mxu0 0
        %2191 = vmatprep.subr.bf16.mxu0 0
        %2192 = vmatpush1.bf16.msra.mxu0 0
        %2193 = vmatprep.subr.bf16.mxu0 0
        %2194 = vmatpush1.bf16.msra.mxu0 0
        %2195 = vmatprep.subr.bf16.mxu0 0
        %2196 = vmatpush1.bf16.msra.mxu0 0
        %2197 = vmatprep.subr.bf16.mxu0 0
        %2198 = vmatpush1.bf16.msra.mxu0 0
        %2199 = vmatprep.subr.bf16.mxu0 0
        %2200 = vmatpush1.bf16.msra.mxu0 0
        %2201 = vmatprep.subr.bf16.mxu0 0
        %2202 = vmatpush1.bf16.msra.mxu0 0
        %2203 = vmatprep.subr.bf16.mxu0 0
        %2204 = vmatpush1.bf16.msra.mxu0 0
        %2205 = vmatprep.subr.bf16.mxu0 0
        %2206 = vmatpush1.bf16.msra.mxu0 0
        %2207 = vmatprep.subr.bf16.mxu0 0
        %2208 = vmatpush1.bf16.msra.mxu0 0
        %2209 = vmatprep.subr.bf16.mxu0 0
        %2210 = vmatpush1.bf16.msra.mxu0 0
        %2211 = vmatprep.subr.bf16.mxu0 0
        %2212 = vmatpush1.bf16.msra.mxu0 0
        %2213 = vmatprep.mubr.bf16.mxu0 0
        %2214 = vmatmul.mubr.bf16.gmra.mrb[0].mxu0 %v2179
        %v2215 = vpop.f32.mrb[0].mxu0
        %v2216 = vadd.f32 0.0, %v2215
        %v2217 = vpop.f32.mrb[0].mxu0
        %v2218 = vpop.f32.mrb[0].mxu0
        %v2219 = vadd.f32 0.0, %v2218
        %v2220 = vpop.f32.mrb[0].mxu0
        %2221 = vdwg.mxu0
        %v2222 = vsel %vm2171, 2147483648, %v2139
        %v2223 = vsel %vm2172, 2147483648, %v2140
        %v2224 = vsel %vm929, %v2222, 2147483648
        %v2225 = vand.u32 %v2224, 65535
        %v2226 = vshra.s32 %v2224, 16
        %v2227 = vcvt.s32.f32 %v2225
        %v2228 = vcvt.s32.f32 %v2226
        %2229 = vmax.xlane.f32.xlu0 %v2228
        %v2230 = vpop.xlane.xlu0 %2229
        %vm2231 = vcmp.eq.f32.partialorder %v2228, %v2230
        %v2232 = vsel %vm2231, %v2227, -inf
        %2233 = vmax.xlane.f32.xlu0 %v2232
        %v2234 = vpop.xlane.xlu0 %2233
        %v2235 = vcvt.f32.s32 %v2234
        %v2236 = vcvt.f32.s32 %v2230
        %v2237 = vshll.u32 %v2236, 16
        %v2238 = vadd.s32 %v2237, %v2235
        %v2239 = vsel %vm929, %v2223, 2147483648
        %v2240 = vand.u32 %v2239, 65535
        %v2241 = vshra.s32 %v2239, 16
        %v2242 = vcvt.s32.f32 %v2240
        %v2243 = vcvt.s32.f32 %v2241
        %2244 = vmax.xlane.f32.xlu0 %v2243
        %v2245 = vpop.xlane.xlu0 %2244
        %vm2246 = vcmp.eq.f32.partialorder %v2243, %v2245
        %v2247 = vsel %vm2246, %v2242, -inf
        %2248 = vmax.xlane.f32.xlu0 %v2247
        %v2249 = vpop.xlane.xlu0 %2248
        %v2250 = vcvt.f32.s32 %v2249
        %v2251 = vcvt.f32.s32 %v2245
        %v2252 = vshll.u32 %v2251, 16
        %v2253 = vadd.s32 %v2252, %v2250
        %vm2254 = vcmp.eq.s32.totalorder %v2222, %v2238
        %vm2255 = vcmp.eq.s32.totalorder %v2223, %v2253
        %v2256 = vsel %vm2254, 1, 0
        %v2257 = vsel %vm2255, 1, 0
        %v2258 = vcvt.s32.f32 %v2256
        %v2259 = vcvt.s32.f32 %v2257
        %v2260 = vpack.c.bf16 %v2259, %v2258
        %v2262 = vsel %vm929, %v2260, 0
        %2264 = vmatprep.subr.bf16.mxu0 0
        %2265 = vmatpush1.bf16.msra.mxu0 %v2128
        %2266 = vmatprep.subr.bf16.mxu0 0
        %2267 = vmatpush1.bf16.msra.mxu0 0
        %2268 = vmatprep.subr.bf16.mxu0 0
        %2269 = vmatpush1.bf16.msra.mxu0 0
        %2270 = vmatprep.subr.bf16.mxu0 0
        %2271 = vmatpush1.bf16.msra.mxu0 0
        %2272 = vmatprep.subr.bf16.mxu0 0
        %2273 = vmatpush1.bf16.msra.mxu0 0
        %2274 = vmatprep.subr.bf16.mxu0 0
        %2275 = vmatpush1.bf16.msra.mxu0 0
        %2276 = vmatprep.subr.bf16.mxu0 0
        %2277 = vmatpush1.bf16.msra.mxu0 0
        %2278 = vmatprep.subr.bf16.mxu0 0
        %2279 = vmatpush1.bf16.msra.mxu0 0
        %2280 = vmatprep.subr.bf16.mxu0 0
        %2281 = vmatpush1.bf16.msra.mxu0 0
        %2282 = vmatprep.subr.bf16.mxu0 0
        %2283 = vmatpush1.bf16.msra.mxu0 0
        %2284 = vmatprep.subr.bf16.mxu0 0
        %2285 = vmatpush1.bf16.msra.mxu0 0
        %2286 = vmatprep.subr.bf16.mxu0 0
        %2287 = vmatpush1.bf16.msra.mxu0 0
        %2288 = vmatprep.subr.bf16.mxu0 0
        %2289 = vmatpush1.bf16.msra.mxu0 0
        %2290 = vmatprep.subr.bf16.mxu0 0
        %2291 = vmatpush1.bf16.msra.mxu0 0
        %2292 = vmatprep.subr.bf16.mxu0 0
        %2293 = vmatpush1.bf16.msra.mxu0 0
        %2294 = vmatprep.subr.bf16.mxu0 0
        %2295 = vmatpush1.bf16.msra.mxu0 0
        %2296 = vmatprep.mubr.bf16.mxu0 0
        %2297 = vmatmul.mubr.bf16.gmra.mrb[0].mxu0 %v2262
        %v2298 = vpop.f32.mrb[0].mxu0
        %v2299 = vadd.f32 0.0, %v2298
        %v2300 = vpop.f32.mrb[0].mxu0
        %v2301 = vpop.f32.mrb[0].mxu0
        %v2302 = vadd.f32 0.0, %v2301
        %v2303 = vpop.f32.mrb[0].mxu0
        %2304 = vdwg.mxu0
        %v2305 = vmax.f32 %v2216, %v2299
        %v2306 = vmax.f32 %v2219, %v2302
        %v2307 = vsel %vm2254, 2147483648, %v2222
        %v2308 = vsel %vm2255, 2147483648, %v2223
        %v2309 = vsel %vm929, %v2307, 2147483648
        %v2310 = vand.u32 %v2309, 65535
        %v2311 = vshra.s32 %v2309, 16
        %v2312 = vcvt.s32.f32 %v2310
        %v2313 = vcvt.s32.f32 %v2311
        %2314 = vmax.xlane.f32.xlu0 %v2313
        %v2315 = vpop.xlane.xlu0 %2314
        %vm2316 = vcmp.eq.f32.partialorder %v2313, %v2315
        %v2317 = vsel %vm2316, %v2312, -inf
        %2318 = vmax.xlane.f32.xlu0 %v2317
        %v2319 = vpop.xlane.xlu0 %2318
        %v2320 = vcvt.f32.s32 %v2319
        %v2321 = vcvt.f32.s32 %v2315
        %v2322 = vshll.u32 %v2321, 16
        %v2323 = vadd.s32 %v2322, %v2320
        %v2324 = vsel %vm929, %v2308, 2147483648
        %v2325 = vand.u32 %v2324, 65535
        %v2326 = vshra.s32 %v2324, 16
        %v2327 = vcvt.s32.f32 %v2325
        %v2328 = vcvt.s32.f32 %v2326
        %2329 = vmax.xlane.f32.xlu0 %v2328
        %v2330 = vpop.xlane.xlu0 %2329
        %vm2331 = vcmp.eq.f32.partialorder %v2328, %v2330
        %v2332 = vsel %vm2331, %v2327, -inf
        %2333 = vmax.xlane.f32.xlu0 %v2332
        %v2334 = vpop.xlane.xlu0 %2333
        %v2335 = vcvt.f32.s32 %v2334
        %v2336 = vcvt.f32.s32 %v2330
        %v2337 = vshll.u32 %v2336, 16
        %v2338 = vadd.s32 %v2337, %v2335
        %vm2339 = vcmp.eq.s32.totalorder %v2307, %v2323
        %vm2340 = vcmp.eq.s32.totalorder %v2308, %v2338
        %v2341 = vsel %vm2339, 1, 0
        %v2342 = vsel %vm2340, 1, 0
        %v2343 = vcvt.s32.f32 %v2341
        %v2344 = vcvt.s32.f32 %v2342
        %v2345 = vpack.c.bf16 %v2344, %v2343
        %v2347 = vsel %vm929, %v2345, 0
        %2349 = vmatprep.subr.bf16.mxu0 0
        %2350 = vmatpush1.bf16.msra.mxu0 %v2128
        %2351 = vmatprep.subr.bf16.mxu0 0
        %2352 = vmatpush1.bf16.msra.mxu0 0
        %2353 = vmatprep.subr.bf16.mxu0 0
        %2354 = vmatpush1.bf16.msra.mxu0 0
        %2355 = vmatprep.subr.bf16.mxu0 0
        %2356 = vmatpush1.bf16.msra.mxu0 0
        %2357 = vmatprep.subr.bf16.mxu0 0
        %2358 = vmatpush1.bf16.msra.mxu0 0
        %2359 = vmatprep.subr.bf16.mxu0 0
        %2360 = vmatpush1.bf16.msra.mxu0 0
        %2361 = vmatprep.subr.bf16.mxu0 0
        %2362 = vmatpush1.bf16.msra.mxu0 0
        %2363 = vmatprep.subr.bf16.mxu0 0
        %2364 = vmatpush1.bf16.msra.mxu0 0
        %2365 = vmatprep.subr.bf16.mxu0 0
        %2366 = vmatpush1.bf16.msra.mxu0 0
        %2367 = vmatprep.subr.bf16.mxu0 0
        %2368 = vmatpush1.bf16.msra.mxu0 0
        %2369 = vmatprep.subr.bf16.mxu0 0
        %2370 = vmatpush1.bf16.msra.mxu0 0
        %2371 = vmatprep.subr.bf16.mxu0 0
        %2372 = vmatpush1.bf16.msra.mxu0 0
        %2373 = vmatprep.subr.bf16.mxu0 0
        %2374 = vmatpush1.bf16.msra.mxu0 0
        %2375 = vmatprep.subr.bf16.mxu0 0
        %2376 = vmatpush1.bf16.msra.mxu0 0
        %2377 = vmatprep.subr.bf16.mxu0 0
        %2378 = vmatpush1.bf16.msra.mxu0 0
        %2379 = vmatprep.subr.bf16.mxu0 0
        %2380 = vmatpush1.bf16.msra.mxu0 0
        %2381 = vmatprep.mubr.bf16.mxu0 0
        %2382 = vmatmul.mubr.bf16.gmra.mrb[0].mxu0 %v2347
        %v2383 = vpop.f32.mrb[0].mxu0
        %v2384 = vadd.f32 0.0, %v2383
        %v2385 = vpop.f32.mrb[0].mxu0
        %v2386 = vpop.f32.mrb[0].mxu0
        %v2387 = vadd.f32 0.0, %v2386
        %v2388 = vpop.f32.mrb[0].mxu0
        %2389 = vdwg.mxu0
        %v2390 = vmax.f32 %v2305, %v2384
        %v2391 = vmax.f32 %v2306, %v2387
        %v2392 = vsel %vm2339, 2147483648, %v2307
        %v2393 = vsel %vm2340, 2147483648, %v2308
        %v2394 = vsel %vm929, %v2392, 2147483648
        %v2395 = vand.u32 %v2394, 65535
        %v2396 = vshra.s32 %v2394, 16
        %v2397 = vcvt.s32.f32 %v2395
        %v2398 = vcvt.s32.f32 %v2396
        %2399 = vmax.xlane.f32.xlu0 %v2398
        %v2400 = vpop.xlane.xlu0 %2399
        %vm2401 = vcmp.eq.f32.partialorder %v2398, %v2400
        %v2402 = vsel %vm2401, %v2397, -inf
        %2403 = vmax.xlane.f32.xlu0 %v2402
        %v2404 = vpop.xlane.xlu0 %2403
        %v2405 = vcvt.f32.s32 %v2404
        %v2406 = vcvt.f32.s32 %v2400
        %v2407 = vshll.u32 %v2406, 16
        %v2408 = vadd.s32 %v2407, %v2405
        %v2409 = vsel %vm929, %v2393, 2147483648
        %v2410 = vand.u32 %v2409, 65535
        %v2411 = vshra.s32 %v2409, 16
        %v2412 = vcvt.s32.f32 %v2410
        %v2413 = vcvt.s32.f32 %v2411
        %2414 = vmax.xlane.f32.xlu0 %v2413
        %v2415 = vpop.xlane.xlu0 %2414
        %vm2416 = vcmp.eq.f32.partialorder %v2413, %v2415
        %v2417 = vsel %vm2416, %v2412, -inf
        %2418 = vmax.xlane.f32.xlu0 %v2417
        %v2419 = vpop.xlane.xlu0 %2418
        %v2420 = vcvt.f32.s32 %v2419
        %v2421 = vcvt.f32.s32 %v2415
        %v2422 = vshll.u32 %v2421, 16
        %v2423 = vadd.s32 %v2422, %v2420
        %vm2424 = vcmp.eq.s32.totalorder %v2392, %v2408
        %vm2425 = vcmp.eq.s32.totalorder %v2393, %v2423
        %v2426 = vsel %vm2424, 1, 0
        %v2427 = vsel %vm2425, 1, 0
        %v2428 = vcvt.s32.f32 %v2426
        %v2429 = vcvt.s32.f32 %v2427
        %v2430 = vpack.c.bf16 %v2429, %v2428
        %v2432 = vsel %vm929, %v2430, 0
        %2434 = vmatprep.subr.bf16.mxu0 0
        %2435 = vmatpush1.bf16.msra.mxu0 %v2128
        %2436 = vmatprep.subr.bf16.mxu0 0
        %2437 = vmatpush1.bf16.msra.mxu0 0
        %2438 = vmatprep.subr.bf16.mxu0 0
        %2439 = vmatpush1.bf16.msra.mxu0 0
        %2440 = vmatprep.subr.bf16.mxu0 0
        %2441 = vmatpush1.bf16.msra.mxu0 0
        %2442 = vmatprep.subr.bf16.mxu0 0
        %2443 = vmatpush1.bf16.msra.mxu0 0
        %2444 = vmatprep.subr.bf16.mxu0 0
        %2445 = vmatpush1.bf16.msra.mxu0 0
        %2446 = vmatprep.subr.bf16.mxu0 0
        %2447 = vmatpush1.bf16.msra.mxu0 0
        %2448 = vmatprep.subr.bf16.mxu0 0
        %2449 = vmatpush1.bf16.msra.mxu0 0
        %2450 = vmatprep.subr.bf16.mxu0 0
        %2451 = vmatpush1.bf16.msra.mxu0 0
        %2452 = vmatprep.subr.bf16.mxu0 0
        %2453 = vmatpush1.bf16.msra.mxu0 0
        %2454 = vmatprep.subr.bf16.mxu0 0
        %2455 = vmatpush1.bf16.msra.mxu0 0
        %2456 = vmatprep.subr.bf16.mxu0 0
        %2457 = vmatpush1.bf16.msra.mxu0 0
        %2458 = vmatprep.subr.bf16.mxu0 0
        %2459 = vmatpush1.bf16.msra.mxu0 0
        %2460 = vmatprep.subr.bf16.mxu0 0
        %2461 = vmatpush1.bf16.msra.mxu0 0
        %2462 = vmatprep.subr.bf16.mxu0 0
        %2463 = vmatpush1.bf16.msra.mxu0 0
        %2464 = vmatprep.subr.bf16.mxu0 0
        %2465 = vmatpush1.bf16.msra.mxu0 0
        %2466 = vmatprep.mubr.bf16.mxu0 0
        %2467 = vmatmul.mubr.bf16.gmra.mrb[0].mxu0 %v2432
        %v2468 = vpop.f32.mrb[0].mxu0
        %v2469 = vadd.f32 0.0, %v2468
        %v2470 = vpop.f32.mrb[0].mxu0
        %v2471 = vpop.f32.mrb[0].mxu0
        %v2472 = vadd.f32 0.0, %v2471
        %v2473 = vpop.f32.mrb[0].mxu0
        %2474 = vdwg.mxu0
        %v2475 = vmax.f32 %v2390, %v2469
        %v2476 = vmax.f32 %v2391, %v2472
        %v2477 = vadd.f32 %v2475, %v2122
        %v2478 = vadd.f32 %v2476, %v2125
        %v2479 = vmul.f32 %v2477, 0.2
        %v2480 = vmul.f32 %v2478, 0.2
        %v2481 = vmax.f32 %v2477, %v2479
        %v2482 = vmax.f32 %v2478, %v2480
        %v2483 = vpack.c.bf16 %v2482, %v2481
        %v2484 = vld [vmem:[%s10] sm:$0xff]
        %v2485 = vld [vmem:[%s10 + $0x8] sm:$0xff]
        %v2486 = vld [vmem:[%s10 + $0x10] sm:$0xff]
        %v2487 = vld [vmem:[%s10 + $0x18] sm:$0xff]
        %v2488 = vld [vmem:[%s10 + $0x20] sm:$0xff]
        %v2489 = vld [vmem:[%s10 + $0x28] sm:$0xff]
        %v2490 = vld [vmem:[%s10 + $0x30] sm:$0xff]
        %v2491 = vld [vmem:[%s10 + $0x38] sm:$0xff]
        %v2492 = vld [vmem:[%s10 + $0x40] sm:$0xff]
        %v2493 = vld [vmem:[%s10 + $0x48] sm:$0xff]
        %v2494 = vld [vmem:[%s10 + $0x50] sm:$0xff]
        %v2495 = vld [vmem:[%s10 + $0x58] sm:$0xff]
        %v2496 = vld [vmem:[%s10 + $0x60] sm:$0xff]
        %v2497 = vld [vmem:[%s10 + $0x68] sm:$0xff]
        %v2498 = vld [vmem:[%s10 + $0x70] sm:$0xff]
        %v2499 = vld [vmem:[%s10 + $0x78] sm:$0xff]
        %v2500 = vld [vmem:[%s11] sm:$0xff]
        %v2501 = vld [vmem:[%s11 + $0x8] sm:$0xff]
        %v2502 = vld [vmem:[%s11 + $0x10] sm:$0xff]
        %v2503 = vld [vmem:[%s11 + $0x18] sm:$0xff]
        %v2504 = vld [vmem:[%s11 + $0x20] sm:$0xff]
        %v2505 = vld [vmem:[%s11 + $0x28] sm:$0xff]
        %v2506 = vld [vmem:[%s11 + $0x30] sm:$0xff]
        %v2507 = vld [vmem:[%s11 + $0x38] sm:$0xff]
        %v2508 = vld [vmem:[%s11 + $0x40] sm:$0xff]
        %v2509 = vld [vmem:[%s11 + $0x48] sm:$0xff]
        %v2510 = vld [vmem:[%s11 + $0x50] sm:$0xff]
        %v2511 = vld [vmem:[%s11 + $0x58] sm:$0xff]
        %v2512 = vld [vmem:[%s11 + $0x60] sm:$0xff]
        %v2513 = vld [vmem:[%s11 + $0x68] sm:$0xff]
        %v2514 = vld [vmem:[%s11 + $0x70] sm:$0xff]
        %v2515 = vld [vmem:[%s11 + $0x78] sm:$0xff]
        %v2516 = vld [vmem:[%s12] sm:$0x3]
        %v2517 = vunpack.c.l.bf16 %v2483
        %v2518 = vunpack.c.h.bf16 %v2483
        %v2519 = vmul.f32 %v2517, %v2517
        %v2520 = vmul.f32 %v2518, %v2518
        %2521 = vadd.xlane.f32.xlu0 %v2519
        %v2522 = vpop.xlane.xlu0 %2521
        %2523 = vadd.xlane.f32.xlu0 %v2520
        %v2524 = vpop.xlane.xlu0 %2523
        %2525 = vmatprep.subr.bf16.mxu0 0
        %2526 = vmatpush1.bf16.xpose.msra.mxu0 %v2483
        %2527 = vmatprep.subr.bf16.mxu0 0
        %2528 = vmatpush1.bf16.xpose.msra.mxu0 0
        %2529 = vmatprep.subr.bf16.mxu0 0
        %2530 = vmatpush1.bf16.xpose.msra.mxu0 0
        %2531 = vmatprep.subr.bf16.mxu0 0
        %2532 = vmatpush1.bf16.xpose.msra.mxu0 0
        %2533 = vmatprep.subr.bf16.mxu0 0
        %2534 = vmatpush1.bf16.xpose.msra.mxu0 0
        %2535 = vmatprep.subr.bf16.mxu0 0
        %2536 = vmatpush1.bf16.xpose.msra.mxu0 0
        %2537 = vmatprep.subr.bf16.mxu0 0
        %2538 = vmatpush1.bf16.xpose.msra.mxu0 0
        %2539 = vmatprep.subr.bf16.mxu0 0
        %2540 = vmatpush1.bf16.xpose.msra.mxu0 0
        %2541 = vmatprep.subr.bf16.mxu0 0
        %2542 = vmatpush1.bf16.xpose.msra.mxu0 0
        %2543 = vmatprep.subr.bf16.mxu0 0
        %2544 = vmatpush1.bf16.xpose.msra.mxu0 0
        %2545 = vmatprep.subr.bf16.mxu0 0
        %2546 = vmatpush1.bf16.xpose.msra.mxu0 0
        %2547 = vmatprep.subr.bf16.mxu0 0
        %2548 = vmatpush1.bf16.xpose.msra.mxu0 0
        %2549 = vmatprep.subr.bf16.mxu0 0
        %2550 = vmatpush1.bf16.xpose.msra.mxu0 0
        %2551 = vmatprep.subr.bf16.mxu0 0
        %2552 = vmatpush1.bf16.xpose.msra.mxu0 0
        %2553 = vmatprep.subr.bf16.mxu0 0
        %2554 = vmatpush1.bf16.xpose.msra.mxu0 0
        %2555 = vmatprep.subr.bf16.mxu0 0
        %2556 = vmatpush1.bf16.xpose.msra.mxu0 0
        %2557 = vmatprep.mubr.bf16.mxu0 0
        %2558 = vmatmul.mubr.bf16.gmra.mrb[0].mxu0 %v2483
        %v2559 = vpop.f32.mrb[0].mxu0
        %v2560 = vadd.f32 0.0, %v2559
        %v2561 = vpop.f32.mrb[0].mxu0
        %v2562 = vpop.f32.mrb[0].mxu0
        %v2563 = vadd.f32 0.0, %v2562
        %v2564 = vpop.f32.mrb[0].mxu0
        %2565 = vdwg.mxu0
        %v2566 = vmul.f32 %v2560, 2.0
        %v2567 = vmul.f32 %v2563, 2.0
        %v2568 = vsub.f32 %v2566, %v2522
        %v2569 = vsub.f32 %v2567, %v2524
        %2570 = vxpose.xlu0.b32.start [1/16] %v2522, 128
        %2571 = vxpose.xlu0.b32.cont [2/16] %v2524, 128
        %2572 = vxpose.xlu0.b32.cont [3/16] 0.0, 128
        %2573 = vxpose.xlu0.b32.cont [4/16] 0.0, 128
        %2574 = vxpose.xlu0.b32.cont [5/16] 0.0, 128
        %2575 = vxpose.xlu0.b32.cont [6/16] 0.0, 128
        %2576 = vxpose.xlu0.b32.cont [7/16] 0.0, 128
        %2577 = vxpose.xlu0.b32.cont [8/16] 0.0, 128
        %2578 = vxpose.xlu0.b32.cont [9/16] 0.0, 128
        %2579 = vxpose.xlu0.b32.cont [10/16] 0.0, 128
        %2580 = vxpose.xlu0.b32.cont [11/16] 0.0, 128
        %2581 = vxpose.xlu0.b32.cont [12/16] 0.0, 128
        %2582 = vxpose.xlu0.b32.cont [13/16] 0.0, 128
        %2583 = vxpose.xlu0.b32.cont [14/16] 0.0, 128
        %2584 = vxpose.xlu0.b32.cont [15/16] 0.0, 128
        %2585 = vxpose.xlu0.b32.end [16/16] 0.0, 128
        %v2586 = vpop.trf.xlu0
        %v2587 = vpop.trf.xlu0
        %v2588 = vpop.trf.xlu0
        %v2589 = vpop.trf.xlu0
        %v2590 = vpop.trf.xlu0
        %v2591 = vpop.trf.xlu0
        %v2592 = vpop.trf.xlu0
        %v2593 = vpop.trf.xlu0
        %v2594 = vpop.trf.xlu0
        %v2595 = vpop.trf.xlu0
        %v2596 = vpop.trf.xlu0
        %v2597 = vpop.trf.xlu0
        %v2598 = vpop.trf.xlu0
        %v2599 = vpop.trf.xlu0
        %v2600 = vpop.trf.xlu0
        %v2601 = vpop.trf.xlu0
        %v2602 = vlaneseq
        %v2603 = vshrl.u32 %v2602, 7
        %v2604 = vsub.s32 0, %v2603
        %v2605 = vrot.slane %v2586, %v2604
        %v2606 = vsub.f32 %v2568, %v2605
        %v2607 = vsub.f32 %v2569, %v2605
        %v2624 = vunpack.c.l.b16 %v2484
        %v2625 = vunpack.c.h.b16 %v2484
        %v2626 = vunpack.c.l.b16 %v2485
        %v2627 = vunpack.c.h.b16 %v2485
        %v2628 = vunpack.c.l.b16 %v2486
        %v2629 = vunpack.c.h.b16 %v2486
        %v2630 = vunpack.c.l.b16 %v2487
        %v2631 = vunpack.c.h.b16 %v2487
        %v2632 = vunpack.c.l.b16 %v2488
        %v2633 = vunpack.c.h.b16 %v2488
        %v2634 = vunpack.c.l.b16 %v2489
        %v2635 = vunpack.c.h.b16 %v2489
        %v2636 = vunpack.c.l.b16 %v2490
        %v2637 = vunpack.c.h.b16 %v2490
        %v2638 = vunpack.c.l.b16 %v2491
        %v2639 = vunpack.c.h.b16 %v2491
        %v2640 = vunpack.c.l.b16 %v2492
        %v2641 = vunpack.c.h.b16 %v2492
        %v2642 = vunpack.c.l.b16 %v2493
        %v2643 = vunpack.c.h.b16 %v2493
        %v2644 = vunpack.c.l.b16 %v2494
        %v2645 = vunpack.c.h.b16 %v2494
        %v2646 = vunpack.c.l.b16 %v2495
        %v2647 = vunpack.c.h.b16 %v2495
        %v2648 = vunpack.c.l.b16 %v2496
        %v2649 = vunpack.c.h.b16 %v2496
        %v2650 = vunpack.c.l.b16 %v2497
        %v2651 = vunpack.c.h.b16 %v2497
        %v2652 = vunpack.c.l.b16 %v2498
        %v2653 = vunpack.c.h.b16 %v2498
        %v2654 = vunpack.c.l.b16 %v2499
        %v2655 = vunpack.c.h.b16 %v2499
        %v2656 = vpack.c.b16 %v2626, %v2624
        %v2657 = vpack.c.b16 %v2627, %v2625
        %v2658 = vpack.c.b16 %v2630, %v2628
        %v2659 = vpack.c.b16 %v2631, %v2629
        %v2660 = vpack.c.b16 %v2634, %v2632
        %v2661 = vpack.c.b16 %v2635, %v2633
        %v2662 = vpack.c.b16 %v2638, %v2636
        %v2663 = vpack.c.b16 %v2639, %v2637
        %v2664 = vpack.c.b16 %v2642, %v2640
        %v2665 = vpack.c.b16 %v2643, %v2641
        %v2666 = vpack.c.b16 %v2646, %v2644
        %v2667 = vpack.c.b16 %v2647, %v2645
        %v2668 = vpack.c.b16 %v2650, %v2648
        %v2669 = vpack.c.b16 %v2651, %v2649
        %v2670 = vpack.c.b16 %v2654, %v2652
        %v2671 = vpack.c.b16 %v2655, %v2653
        %2688 = vmatprep.subr.bf16.mxu0 %v2657
        %2689 = vmatpush1.bf16.msra.mxu0 %v2656
        %2690 = vmatprep.subr.bf16.mxu0 %v2659
        %2691 = vmatpush1.bf16.msra.mxu0 %v2658
        %2692 = vmatprep.subr.bf16.mxu0 %v2661
        %2693 = vmatpush1.bf16.msra.mxu0 %v2660
        %2694 = vmatprep.subr.bf16.mxu0 %v2663
        %2695 = vmatpush1.bf16.msra.mxu0 %v2662
        %2696 = vmatprep.subr.bf16.mxu0 %v2665
        %2697 = vmatpush1.bf16.msra.mxu0 %v2664
        %2698 = vmatprep.subr.bf16.mxu0 %v2667
        %2699 = vmatpush1.bf16.msra.mxu0 %v2666
        %2700 = vmatprep.subr.bf16.mxu0 %v2669
        %2701 = vmatpush1.bf16.msra.mxu0 %v2668
        %2702 = vmatprep.subr.bf16.mxu0 %v2671
        %2703 = vmatpush1.bf16.msra.mxu0 %v2670
        %2704 = vmatprep.subr.bf16.mxu0 0
        %2705 = vmatpush1.bf16.msra.mxu0 0
        %2706 = vmatprep.subr.bf16.mxu0 0
        %2707 = vmatpush1.bf16.msra.mxu0 0
        %2708 = vmatprep.subr.bf16.mxu0 0
        %2709 = vmatpush1.bf16.msra.mxu0 0
        %2710 = vmatprep.subr.bf16.mxu0 0
        %2711 = vmatpush1.bf16.msra.mxu0 0
        %2712 = vmatprep.subr.bf16.mxu0 0
        %2713 = vmatpush1.bf16.msra.mxu0 0
        %2714 = vmatprep.subr.bf16.mxu0 0
        %2715 = vmatpush1.bf16.msra.mxu0 0
        %2716 = vmatprep.subr.bf16.mxu0 0
        %2717 = vmatpush1.bf16.msra.mxu0 0
        %2718 = vmatprep.subr.bf16.mxu0 0
        %2719 = vmatpush1.bf16.msra.mxu0 0
        %2720 = vmatprep.mubr.bf16.mxu0 0
        %2721 = vmatmul.mubr.bf16.gmra.mrb[0].mxu0 %v2483
        %v2722 = vpop.f32.mrb[0].mxu0
        %v2723 = vadd.f32 0.0, %v2722
        %v2724 = vpop.f32.mrb[0].mxu0
        %v2725 = vadd.f32 0.0, %v2724
        %v2726 = vpop.f32.mrb[0].mxu0
        %v2727 = vadd.f32 0.0, %v2726
        %v2728 = vpop.f32.mrb[0].mxu0
        %v2729 = vadd.f32 0.0, %v2728
        %2730 = vdwg.mxu0
        %v2732 = vlaneseq
        %v2733 = vshrl.u32 %v2732, 7
        %v2734 = vsub.s32 0, %v2733
        %v2735 = vrot.slane %v2516, %v2734
        %v2736 = vlaneseq
        %v2737 = vshrl.u32 %v2736, 7
        %v2738 = vsub.s32 1, %v2737
        %v2739 = vrot.slane %v2516, %v2738
        %v2758 = vunpack.c.l.b16 %v2500
        %v2759 = vunpack.c.h.b16 %v2500
        %v2760 = vunpack.c.l.b16 %v2501
        %v2761 = vunpack.c.h.b16 %v2501
        %v2762 = vunpack.c.l.b16 %v2502
        %v2763 = vunpack.c.h.b16 %v2502
        %v2764 = vunpack.c.l.b16 %v2503
        %v2765 = vunpack.c.h.b16 %v2503
        %v2766 = vunpack.c.l.b16 %v2504
        %v2767 = vunpack.c.h.b16 %v2504
        %v2768 = vunpack.c.l.b16 %v2505
        %v2769 = vunpack.c.h.b16 %v2505
        %v2770 = vunpack.c.l.b16 %v2506
        %v2771 = vunpack.c.h.b16 %v2506
        %v2772 = vunpack.c.l.b16 %v2507
        %v2773 = vunpack.c.h.b16 %v2507
        %v2774 = vunpack.c.l.b16 %v2508
        %v2775 = vunpack.c.h.b16 %v2508
        %v2776 = vunpack.c.l.b16 %v2509
        %v2777 = vunpack.c.h.b16 %v2509
        %v2778 = vunpack.c.l.b16 %v2510
        %v2779 = vunpack.c.h.b16 %v2510
        %v2780 = vunpack.c.l.b16 %v2511
        %v2781 = vunpack.c.h.b16 %v2511
        %v2782 = vunpack.c.l.b16 %v2512
        %v2783 = vunpack.c.h.b16 %v2512
        %v2784 = vunpack.c.l.b16 %v2513
        %v2785 = vunpack.c.h.b16 %v2513
        %v2786 = vunpack.c.l.b16 %v2514
        %v2787 = vunpack.c.h.b16 %v2514
        %v2788 = vunpack.c.l.b16 %v2515
        %v2789 = vunpack.c.h.b16 %v2515
        %v2790 = vpack.c.b16 %v2760, %v2758
        %v2791 = vpack.c.b16 %v2761, %v2759
        %v2792 = vpack.c.b16 %v2764, %v2762
        %v2793 = vpack.c.b16 %v2765, %v2763
        %v2794 = vpack.c.b16 %v2768, %v2766
        %v2795 = vpack.c.b16 %v2769, %v2767
        %v2796 = vpack.c.b16 %v2772, %v2770
        %v2797 = vpack.c.b16 %v2773, %v2771
        %v2798 = vpack.c.b16 %v2776, %v2774
        %v2799 = vpack.c.b16 %v2777, %v2775
        %v2800 = vpack.c.b16 %v2780, %v2778
        %v2801 = vpack.c.b16 %v2781, %v2779
        %v2802 = vpack.c.b16 %v2784, %v2782
        %v2803 = vpack.c.b16 %v2785, %v2783
        %v2804 = vpack.c.b16 %v2788, %v2786
        %v2805 = vpack.c.b16 %v2789, %v2787
        %2822 = vmatprep.subr.bf16.mxu0 %v2791
        %2823 = vmatpush1.bf16.msra.mxu0 %v2790
        %2824 = vmatprep.subr.bf16.mxu0 %v2793
        %2825 = vmatpush1.bf16.msra.mxu0 %v2792
        %2826 = vmatprep.subr.bf16.mxu0 %v2795
        %2827 = vmatpush1.bf16.msra.mxu0 %v2794
        %2828 = vmatprep.subr.bf16.mxu0 %v2797
        %2829 = vmatpush1.bf16.msra.mxu0 %v2796
        %2830 = vmatprep.subr.bf16.mxu0 %v2799
        %2831 = vmatpush1.bf16.msra.mxu0 %v2798
        %2832 = vmatprep.subr.bf16.mxu0 %v2801
        %2833 = vmatpush1.bf16.msra.mxu0 %v2800
        %2834 = vmatprep.subr.bf16.mxu0 %v2803
        %2835 = vmatpush1.bf16.msra.mxu0 %v2802
        %2836 = vmatprep.subr.bf16.mxu0 %v2805
        %2837 = vmatpush1.bf16.msra.mxu0 %v2804
        %2838 = vmatprep.subr.bf16.mxu0 0
        %2839 = vmatpush1.bf16.msra.mxu0 0
        %2840 = vmatprep.subr.bf16.mxu0 0
        %2841 = vmatpush1.bf16.msra.mxu0 0
        %2842 = vmatprep.subr.bf16.mxu0 0
        %2843 = vmatpush1.bf16.msra.mxu0 0
        %2844 = vmatprep.subr.bf16.mxu0 0
        %2845 = vmatpush1.bf16.msra.mxu0 0
        %2846 = vmatprep.subr.bf16.mxu0 0
        %2847 = vmatpush1.bf16.msra.mxu0 0
        %2848 = vmatprep.subr.bf16.mxu0 0
        %2849 = vmatpush1.bf16.msra.mxu0 0
        %2850 = vmatprep.subr.bf16.mxu0 0
        %2851 = vmatpush1.bf16.msra.mxu0 0
        %2852 = vmatprep.subr.bf16.mxu0 0
        %2853 = vmatpush1.bf16.msra.mxu0 0
        %2854 = vmatprep.mubr.bf16.mxu0 0
        %2855 = vmatmul.mubr.bf16.gmra.mrb[0].mxu0 %v2483
        %v2856 = vpop.f32.mrb[0].mxu0
        %v2857 = vadd.f32 %v2735, %v2856
        %v2858 = vpop.f32.mrb[0].mxu0
        %v2859 = vadd.f32 %v2739, %v2858
        %v2860 = vpop.f32.mrb[0].mxu0
        %v2861 = vadd.f32 %v2735, %v2860
        %v2862 = vpop.f32.mrb[0].mxu0
        %v2863 = vadd.f32 %v2739, %v2862
        %2864 = vdwg.mxu0
        %v2865 = vpack.c.bf16 %v2727, %v2723
        %v2866 = vpack.c.bf16 %v2729, %v2725
        %vm2869 = vcmp.lt.s32.totalorder %v2606, 0
        %vm2870 = vcmp.lt.s32.totalorder %v2607, 0
        %v2871 = vxor.u32 %v2606, 2147483647
        %v2872 = vxor.u32 %v2607, 2147483647
        %v2873 = vsel %vm2869, %v2871, %v2606
        %v2874 = vsel %vm2870, %v2872, %v2607
        %v2875 = vand.u32 %v2873, 4294967280
        %v2876 = vand.u32 %v2874, 4294967280
        %v2877 = vor.u32 %v2875, %v926
        %v2878 = vor.u32 %v2876, %v926
        %v2879 = vsel %vm929, %v2877, 2147483648
        %v2880 = vand.u32 %v2879, 65535
        %v2881 = vshra.s32 %v2879, 16
        %v2882 = vcvt.s32.f32 %v2880
        %v2883 = vcvt.s32.f32 %v2881
        %2884 = vmax.xlane.f32.xlu0 %v2883
        %v2885 = vpop.xlane.xlu0 %2884
        %vm2886 = vcmp.eq.f32.partialorder %v2883, %v2885
        %v2887 = vsel %vm2886, %v2882, -inf
        %2888 = vmax.xlane.f32.xlu0 %v2887
        %v2889 = vpop.xlane.xlu0 %2888
        %v2890 = vcvt.f32.s32 %v2889
        %v2891 = vcvt.f32.s32 %v2885
        %v2892 = vshll.u32 %v2891, 16
        %v2893 = vadd.s32 %v2892, %v2890
        %v2894 = vsel %vm929, %v2878, 2147483648
        %v2895 = vand.u32 %v2894, 65535
        %v2896 = vshra.s32 %v2894, 16
        %v2897 = vcvt.s32.f32 %v2895
        %v2898 = vcvt.s32.f32 %v2896
        %2899 = vmax.xlane.f32.xlu0 %v2898
        %v2900 = vpop.xlane.xlu0 %2899
        %vm2901 = vcmp.eq.f32.partialorder %v2898, %v2900
        %v2902 = vsel %vm2901, %v2897, -inf
        %2903 = vmax.xlane.f32.xlu0 %v2902
        %v2904 = vpop.xlane.xlu0 %2903
        %v2905 = vcvt.f32.s32 %v2904
        %v2906 = vcvt.f32.s32 %v2900
        %v2907 = vshll.u32 %v2906, 16
        %v2908 = vadd.s32 %v2907, %v2905
        %vm2909 = vcmp.eq.s32.totalorder %v2877, %v2893
        %vm2910 = vcmp.eq.s32.totalorder %v2878, %v2908
        %v2911 = vsel %vm2909, 1, 0
        %v2912 = vsel %vm2910, 1, 0
        %v2913 = vcvt.s32.f32 %v2911
        %v2914 = vcvt.s32.f32 %v2912
        %v2915 = vpack.c.bf16 %v2914, %v2913
        %v2917 = vsel %vm929, %v2915, 0
        %2919 = vmatprep.subr.bf16.mxu0 %v2866
        %2920 = vmatpush1.bf16.msra.mxu0 %v2865
        %2921 = vmatprep.subr.bf16.mxu0 0
        %2922 = vmatpush1.bf16.msra.mxu0 0
        %2923 = vmatprep.subr.bf16.mxu0 0
        %2924 = vmatpush1.bf16.msra.mxu0 0
        %2925 = vmatprep.subr.bf16.mxu0 0
        %2926 = vmatpush1.bf16.msra.mxu0 0
        %2927 = vmatprep.subr.bf16.mxu0 0
        %2928 = vmatpush1.bf16.msra.mxu0 0
        %2929 = vmatprep.subr.bf16.mxu0 0
        %2930 = vmatpush1.bf16.msra.mxu0 0
        %2931 = vmatprep.subr.bf16.mxu0 0
        %2932 = vmatpush1.bf16.msra.mxu0 0
        %2933 = vmatprep.subr.bf16.mxu0 0
        %2934 = vmatpush1.bf16.msra.mxu0 0
        %2935 = vmatprep.subr.bf16.mxu0 0
        %2936 = vmatpush1.bf16.msra.mxu0 0
        %2937 = vmatprep.subr.bf16.mxu0 0
        %2938 = vmatpush1.bf16.msra.mxu0 0
        %2939 = vmatprep.subr.bf16.mxu0 0
        %2940 = vmatpush1.bf16.msra.mxu0 0
        %2941 = vmatprep.subr.bf16.mxu0 0
        %2942 = vmatpush1.bf16.msra.mxu0 0
        %2943 = vmatprep.subr.bf16.mxu0 0
        %2944 = vmatpush1.bf16.msra.mxu0 0
        %2945 = vmatprep.subr.bf16.mxu0 0
        %2946 = vmatpush1.bf16.msra.mxu0 0
        %2947 = vmatprep.subr.bf16.mxu0 0
        %2948 = vmatpush1.bf16.msra.mxu0 0
        %2949 = vmatprep.subr.bf16.mxu0 0
        %2950 = vmatpush1.bf16.msra.mxu0 0
        %2951 = vmatprep.mubr.bf16.mxu0 0
        %2952 = vmatmul.mubr.bf16.gmra.mrb[0].mxu0 %v2917
        %v2953 = vpop.f32.mrb[0].mxu0
        %v2954 = vadd.f32 0.0, %v2953
        %v2955 = vpop.f32.mrb[0].mxu0
        %v2956 = vadd.f32 0.0, %v2955
        %v2957 = vpop.f32.mrb[0].mxu0
        %v2958 = vadd.f32 0.0, %v2957
        %v2959 = vpop.f32.mrb[0].mxu0
        %v2960 = vadd.f32 0.0, %v2959
        %2961 = vdwg.mxu0
        %v2962 = vsel %vm2909, 2147483648, %v2877
        %v2963 = vsel %vm2910, 2147483648, %v2878
        %v2964 = vsel %vm929, %v2962, 2147483648
        %v2965 = vand.u32 %v2964, 65535
        %v2966 = vshra.s32 %v2964, 16
        %v2967 = vcvt.s32.f32 %v2965
        %v2968 = vcvt.s32.f32 %v2966
        %2969 = vmax.xlane.f32.xlu0 %v2968
        %v2970 = vpop.xlane.xlu0 %2969
        %vm2971 = vcmp.eq.f32.partialorder %v2968, %v2970
        %v2972 = vsel %vm2971, %v2967, -inf
        %2973 = vmax.xlane.f32.xlu0 %v2972
        %v2974 = vpop.xlane.xlu0 %2973
        %v2975 = vcvt.f32.s32 %v2974
        %v2976 = vcvt.f32.s32 %v2970
        %v2977 = vshll.u32 %v2976, 16
        %v2978 = vadd.s32 %v2977, %v2975
        %v2979 = vsel %vm929, %v2963, 2147483648
        %v2980 = vand.u32 %v2979, 65535
        %v2981 = vshra.s32 %v2979, 16
        %v2982 = vcvt.s32.f32 %v2980
        %v2983 = vcvt.s32.f32 %v2981
        %2984 = vmax.xlane.f32.xlu0 %v2983
        %v2985 = vpop.xlane.xlu0 %2984
        %vm2986 = vcmp.eq.f32.partialorder %v2983, %v2985
        %v2987 = vsel %vm2986, %v2982, -inf
        %2988 = vmax.xlane.f32.xlu0 %v2987
        %v2989 = vpop.xlane.xlu0 %2988
        %v2990 = vcvt.f32.s32 %v2989
        %v2991 = vcvt.f32.s32 %v2985
        %v2992 = vshll.u32 %v2991, 16
        %v2993 = vadd.s32 %v2992, %v2990
        %vm2994 = vcmp.eq.s32.totalorder %v2962, %v2978
        %vm2995 = vcmp.eq.s32.totalorder %v2963, %v2993
        %v2996 = vsel %vm2994, 1, 0
        %v2997 = vsel %vm2995, 1, 0
        %v2998 = vcvt.s32.f32 %v2996
        %v2999 = vcvt.s32.f32 %v2997
        %v3000 = vpack.c.bf16 %v2999, %v2998
        %v3002 = vsel %vm929, %v3000, 0
        %3004 = vmatprep.subr.bf16.mxu0 %v2866
        %3005 = vmatpush1.bf16.msra.mxu0 %v2865
        %3006 = vmatprep.subr.bf16.mxu0 0
        %3007 = vmatpush1.bf16.msra.mxu0 0
        %3008 = vmatprep.subr.bf16.mxu0 0
        %3009 = vmatpush1.bf16.msra.mxu0 0
        %3010 = vmatprep.subr.bf16.mxu0 0
        %3011 = vmatpush1.bf16.msra.mxu0 0
        %3012 = vmatprep.subr.bf16.mxu0 0
        %3013 = vmatpush1.bf16.msra.mxu0 0
        %3014 = vmatprep.subr.bf16.mxu0 0
        %3015 = vmatpush1.bf16.msra.mxu0 0
        %3016 = vmatprep.subr.bf16.mxu0 0
        %3017 = vmatpush1.bf16.msra.mxu0 0
        %3018 = vmatprep.subr.bf16.mxu0 0
        %3019 = vmatpush1.bf16.msra.mxu0 0
        %3020 = vmatprep.subr.bf16.mxu0 0
        %3021 = vmatpush1.bf16.msra.mxu0 0
        %3022 = vmatprep.subr.bf16.mxu0 0
        %3023 = vmatpush1.bf16.msra.mxu0 0
        %3024 = vmatprep.subr.bf16.mxu0 0
        %3025 = vmatpush1.bf16.msra.mxu0 0
        %3026 = vmatprep.subr.bf16.mxu0 0
        %3027 = vmatpush1.bf16.msra.mxu0 0
        %3028 = vmatprep.subr.bf16.mxu0 0
        %3029 = vmatpush1.bf16.msra.mxu0 0
        %3030 = vmatprep.subr.bf16.mxu0 0
        %3031 = vmatpush1.bf16.msra.mxu0 0
        %3032 = vmatprep.subr.bf16.mxu0 0
        %3033 = vmatpush1.bf16.msra.mxu0 0
        %3034 = vmatprep.subr.bf16.mxu0 0
        %3035 = vmatpush1.bf16.msra.mxu0 0
        %3036 = vmatprep.mubr.bf16.mxu0 0
        %3037 = vmatmul.mubr.bf16.gmra.mrb[0].mxu0 %v3002
        %v3038 = vpop.f32.mrb[0].mxu0
        %v3039 = vadd.f32 0.0, %v3038
        %v3040 = vpop.f32.mrb[0].mxu0
        %v3041 = vadd.f32 0.0, %v3040
        %v3042 = vpop.f32.mrb[0].mxu0
        %v3043 = vadd.f32 0.0, %v3042
        %v3044 = vpop.f32.mrb[0].mxu0
        %v3045 = vadd.f32 0.0, %v3044
        %3046 = vdwg.mxu0
        %v3047 = vmax.f32 %v2954, %v3039
        %v3048 = vmax.f32 %v2956, %v3041
        %v3049 = vmax.f32 %v2958, %v3043
        %v3050 = vmax.f32 %v2960, %v3045
        %v3051 = vsel %vm2994, 2147483648, %v2962
        %v3052 = vsel %vm2995, 2147483648, %v2963
        %v3053 = vsel %vm929, %v3051, 2147483648
        %v3054 = vand.u32 %v3053, 65535
        %v3055 = vshra.s32 %v3053, 16
        %v3056 = vcvt.s32.f32 %v3054
        %v3057 = vcvt.s32.f32 %v3055
        %3058 = vmax.xlane.f32.xlu0 %v3057
        %v3059 = vpop.xlane.xlu0 %3058
        %vm3060 = vcmp.eq.f32.partialorder %v3057, %v3059
        %v3061 = vsel %vm3060, %v3056, -inf
        %3062 = vmax.xlane.f32.xlu0 %v3061
        %v3063 = vpop.xlane.xlu0 %3062
        %v3064 = vcvt.f32.s32 %v3063
        %v3065 = vcvt.f32.s32 %v3059
        %v3066 = vshll.u32 %v3065, 16
        %v3067 = vadd.s32 %v3066, %v3064
        %v3068 = vsel %vm929, %v3052, 2147483648
        %v3069 = vand.u32 %v3068, 65535
        %v3070 = vshra.s32 %v3068, 16
        %v3071 = vcvt.s32.f32 %v3069
        %v3072 = vcvt.s32.f32 %v3070
        %3073 = vmax.xlane.f32.xlu0 %v3072
        %v3074 = vpop.xlane.xlu0 %3073
        %vm3075 = vcmp.eq.f32.partialorder %v3072, %v3074
        %v3076 = vsel %vm3075, %v3071, -inf
        %3077 = vmax.xlane.f32.xlu0 %v3076
        %v3078 = vpop.xlane.xlu0 %3077
        %v3079 = vcvt.f32.s32 %v3078
        %v3080 = vcvt.f32.s32 %v3074
        %v3081 = vshll.u32 %v3080, 16
        %v3082 = vadd.s32 %v3081, %v3079
        %vm3083 = vcmp.eq.s32.totalorder %v3051, %v3067
        %vm3084 = vcmp.eq.s32.totalorder %v3052, %v3082
        %v3085 = vsel %vm3083, 1, 0
        %v3086 = vsel %vm3084, 1, 0
        %v3087 = vcvt.s32.f32 %v3085
        %v3088 = vcvt.s32.f32 %v3086
        %v3089 = vpack.c.bf16 %v3088, %v3087
        %v3091 = vsel %vm929, %v3089, 0
        %3093 = vmatprep.subr.bf16.mxu0 %v2866
        %3094 = vmatpush1.bf16.msra.mxu0 %v2865
        %3095 = vmatprep.subr.bf16.mxu0 0
        %3096 = vmatpush1.bf16.msra.mxu0 0
        %3097 = vmatprep.subr.bf16.mxu0 0
        %3098 = vmatpush1.bf16.msra.mxu0 0
        %3099 = vmatprep.subr.bf16.mxu0 0
        %3100 = vmatpush1.bf16.msra.mxu0 0
        %3101 = vmatprep.subr.bf16.mxu0 0
        %3102 = vmatpush1.bf16.msra.mxu0 0
        %3103 = vmatprep.subr.bf16.mxu0 0
        %3104 = vmatpush1.bf16.msra.mxu0 0
        %3105 = vmatprep.subr.bf16.mxu0 0
        %3106 = vmatpush1.bf16.msra.mxu0 0
        %3107 = vmatprep.subr.bf16.mxu0 0
        %3108 = vmatpush1.bf16.msra.mxu0 0
        %3109 = vmatprep.subr.bf16.mxu0 0
        %3110 = vmatpush1.bf16.msra.mxu0 0
        %3111 = vmatprep.subr.bf16.mxu0 0
        %3112 = vmatpush1.bf16.msra.mxu0 0
        %3113 = vmatprep.subr.bf16.mxu0 0
        %3114 = vmatpush1.bf16.msra.mxu0 0
        %3115 = vmatprep.subr.bf16.mxu0 0
        %3116 = vmatpush1.bf16.msra.mxu0 0
        %3117 = vmatprep.subr.bf16.mxu0 0
        %3118 = vmatpush1.bf16.msra.mxu0 0
        %3119 = vmatprep.subr.bf16.mxu0 0
        %3120 = vmatpush1.bf16.msra.mxu0 0
        %3121 = vmatprep.subr.bf16.mxu0 0
        %3122 = vmatpush1.bf16.msra.mxu0 0
        %3123 = vmatprep.subr.bf16.mxu0 0
        %3124 = vmatpush1.bf16.msra.mxu0 0
        %3125 = vmatprep.mubr.bf16.mxu0 0
        %3126 = vmatmul.mubr.bf16.gmra.mrb[0].mxu0 %v3091
        %v3127 = vpop.f32.mrb[0].mxu0
        %v3128 = vadd.f32 0.0, %v3127
        %v3129 = vpop.f32.mrb[0].mxu0
        %v3130 = vadd.f32 0.0, %v3129
        %v3131 = vpop.f32.mrb[0].mxu0
        %v3132 = vadd.f32 0.0, %v3131
        %v3133 = vpop.f32.mrb[0].mxu0
        %v3134 = vadd.f32 0.0, %v3133
        %3135 = vdwg.mxu0
        %v3136 = vmax.f32 %v3047, %v3128
        %v3137 = vmax.f32 %v3048, %v3130
        %v3138 = vmax.f32 %v3049, %v3132
        %v3139 = vmax.f32 %v3050, %v3134
        %v3140 = vsel %vm3083, 2147483648, %v3051
        %v3141 = vsel %vm3084, 2147483648, %v3052
        %v3142 = vsel %vm929, %v3140, 2147483648
        %v3143 = vand.u32 %v3142, 65535
        %v3144 = vshra.s32 %v3142, 16
        %v3145 = vcvt.s32.f32 %v3143
        %v3146 = vcvt.s32.f32 %v3144
        %3147 = vmax.xlane.f32.xlu0 %v3146
        %v3148 = vpop.xlane.xlu0 %3147
        %vm3149 = vcmp.eq.f32.partialorder %v3146, %v3148
        %v3150 = vsel %vm3149, %v3145, -inf
        %3151 = vmax.xlane.f32.xlu0 %v3150
        %v3152 = vpop.xlane.xlu0 %3151
        %v3153 = vcvt.f32.s32 %v3152
        %v3154 = vcvt.f32.s32 %v3148
        %v3155 = vshll.u32 %v3154, 16
        %v3156 = vadd.s32 %v3155, %v3153
        %v3157 = vsel %vm929, %v3141, 2147483648
        %v3158 = vand.u32 %v3157, 65535
        %v3159 = vshra.s32 %v3157, 16
        %v3160 = vcvt.s32.f32 %v3158
        %v3161 = vcvt.s32.f32 %v3159
        %3162 = vmax.xlane.f32.xlu0 %v3161
        %v3163 = vpop.xlane.xlu0 %3162
        %vm3164 = vcmp.eq.f32.partialorder %v3161, %v3163
        %v3165 = vsel %vm3164, %v3160, -inf
        %3166 = vmax.xlane.f32.xlu0 %v3165
        %v3167 = vpop.xlane.xlu0 %3166
        %v3168 = vcvt.f32.s32 %v3167
        %v3169 = vcvt.f32.s32 %v3163
        %v3170 = vshll.u32 %v3169, 16
        %v3171 = vadd.s32 %v3170, %v3168
        %vm3172 = vcmp.eq.s32.totalorder %v3140, %v3156
        %vm3173 = vcmp.eq.s32.totalorder %v3141, %v3171
        %v3174 = vsel %vm3172, 1, 0
        %v3175 = vsel %vm3173, 1, 0
        %v3176 = vcvt.s32.f32 %v3174
        %v3177 = vcvt.s32.f32 %v3175
        %v3178 = vpack.c.bf16 %v3177, %v3176
        %v3180 = vsel %vm929, %v3178, 0
        %3182 = vmatprep.subr.bf16.mxu0 %v2866
        %3183 = vmatpush1.bf16.msra.mxu0 %v2865
        %3184 = vmatprep.subr.bf16.mxu0 0
        %3185 = vmatpush1.bf16.msra.mxu0 0
        %3186 = vmatprep.subr.bf16.mxu0 0
        %3187 = vmatpush1.bf16.msra.mxu0 0
        %3188 = vmatprep.subr.bf16.mxu0 0
        %3189 = vmatpush1.bf16.msra.mxu0 0
        %3190 = vmatprep.subr.bf16.mxu0 0
        %3191 = vmatpush1.bf16.msra.mxu0 0
        %3192 = vmatprep.subr.bf16.mxu0 0
        %3193 = vmatpush1.bf16.msra.mxu0 0
        %3194 = vmatprep.subr.bf16.mxu0 0
        %3195 = vmatpush1.bf16.msra.mxu0 0
        %3196 = vmatprep.subr.bf16.mxu0 0
        %3197 = vmatpush1.bf16.msra.mxu0 0
        %3198 = vmatprep.subr.bf16.mxu0 0
        %3199 = vmatpush1.bf16.msra.mxu0 0
        %3200 = vmatprep.subr.bf16.mxu0 0
        %3201 = vmatpush1.bf16.msra.mxu0 0
        %3202 = vmatprep.subr.bf16.mxu0 0
        %3203 = vmatpush1.bf16.msra.mxu0 0
        %3204 = vmatprep.subr.bf16.mxu0 0
        %3205 = vmatpush1.bf16.msra.mxu0 0
        %3206 = vmatprep.subr.bf16.mxu0 0
        %3207 = vmatpush1.bf16.msra.mxu0 0
        %3208 = vmatprep.subr.bf16.mxu0 0
        %3209 = vmatpush1.bf16.msra.mxu0 0
        %3210 = vmatprep.subr.bf16.mxu0 0
        %3211 = vmatpush1.bf16.msra.mxu0 0
        %3212 = vmatprep.subr.bf16.mxu0 0
        %3213 = vmatpush1.bf16.msra.mxu0 0
        %3214 = vmatprep.mubr.bf16.mxu0 0
        %3215 = vmatmul.mubr.bf16.gmra.mrb[0].mxu0 %v3180
        %v3216 = vpop.f32.mrb[0].mxu0
        %v3217 = vadd.f32 0.0, %v3216
        %v3218 = vpop.f32.mrb[0].mxu0
        %v3219 = vadd.f32 0.0, %v3218
        %v3220 = vpop.f32.mrb[0].mxu0
        %v3221 = vadd.f32 0.0, %v3220
        %v3222 = vpop.f32.mrb[0].mxu0
        %v3223 = vadd.f32 0.0, %v3222
        %3224 = vdwg.mxu0
        %v3225 = vmax.f32 %v3136, %v3217
        %v3226 = vmax.f32 %v3137, %v3219
        %v3227 = vmax.f32 %v3138, %v3221
        %v3228 = vmax.f32 %v3139, %v3223
        %v3229 = vadd.f32 %v3225, %v2857
        %v3230 = vadd.f32 %v3226, %v2859
        %v3231 = vadd.f32 %v3227, %v2861
        %v3232 = vadd.f32 %v3228, %v2863
        %v3233 = vmul.f32 %v3229, 0.2
        %v3234 = vmul.f32 %v3230, 0.2
        %v3235 = vmul.f32 %v3231, 0.2
        %v3236 = vmul.f32 %v3232, 0.2
        %v3237 = vmax.f32 %v3229, %v3233
        %v3238 = vmax.f32 %v3230, %v3234
        %v3239 = vmax.f32 %v3231, %v3235
        %v3240 = vmax.f32 %v3232, %v3236
        %v3241 = vpack.c.bf16 %v3239, %v3237
        %v3242 = vpack.c.bf16 %v3240, %v3238
        %v3243 = vld [vmem:[#allocation16] sm:$0xf]
        %v3244 = vld [vmem:[#allocation16 + $0x4] sm:$0xf]
        %v3245 = vld [vmem:[#allocation16 + $0x8] sm:$0xf]
        %v3246 = vld [vmem:[#allocation16 + $0xc] sm:$0xf]
        %v3247 = vld [vmem:[#allocation16 + $0x10] sm:$0xf]
        %v3248 = vld [vmem:[#allocation16 + $0x14] sm:$0xf]
        %v3249 = vld [vmem:[#allocation16 + $0x18] sm:$0xf]
        %v3250 = vld [vmem:[#allocation16 + $0x1c] sm:$0xf]
        %v3251 = vld [vmem:[#allocation17] sm:$0xf]
        %v3252 = vld [vmem:[#allocation17 + $0x4] sm:$0xf]
        %v3253 = vld [vmem:[#allocation17 + $0x8] sm:$0xf]
        %v3254 = vld [vmem:[#allocation17 + $0xc] sm:$0xf]
        %v3255 = vld [vmem:[#allocation17 + $0x10] sm:$0xf]
        %v3256 = vld [vmem:[#allocation17 + $0x14] sm:$0xf]
        %v3257 = vld [vmem:[#allocation17 + $0x18] sm:$0xf]
        %v3258 = vld [vmem:[#allocation17 + $0x1c] sm:$0xf]
        %v3267 = vunpack.c.l.b16 %v3251
        %v3268 = vunpack.c.l.b16 %v3252
        %v3269 = vunpack.c.l.b16 %v3253
        %v3270 = vunpack.c.l.b16 %v3254
        %v3271 = vunpack.c.l.b16 %v3255
        %v3272 = vunpack.c.l.b16 %v3256
        %v3273 = vunpack.c.l.b16 %v3257
        %v3274 = vunpack.c.l.b16 %v3258
        %v3275 = vpack.c.b16 %v3268, %v3267
        %v3276 = vpack.c.b16 %v3270, %v3269
        %v3277 = vpack.c.b16 %v3272, %v3271
        %v3278 = vpack.c.b16 %v3274, %v3273
        %3283 = vmatprep.subr.bf16.mxu0 0
        %3284 = vmatpush1.bf16.msra.mxu0 %v3275
        %3285 = vmatprep.subr.bf16.mxu0 0
        %3286 = vmatpush1.bf16.msra.mxu0 %v3276
        %3287 = vmatprep.subr.bf16.mxu0 0
        %3288 = vmatpush1.bf16.msra.mxu0 %v3277
        %3289 = vmatprep.subr.bf16.mxu0 0
        %3290 = vmatpush1.bf16.msra.mxu0 %v3278
        %3291 = vmatprep.subr.bf16.mxu0 0
        %3292 = vmatpush1.bf16.msra.mxu0 0
        %3293 = vmatprep.subr.bf16.mxu0 0
        %3294 = vmatpush1.bf16.msra.mxu0 0
        %3295 = vmatprep.subr.bf16.mxu0 0
        %3296 = vmatpush1.bf16.msra.mxu0 0
        %3297 = vmatprep.subr.bf16.mxu0 0
        %3298 = vmatpush1.bf16.msra.mxu0 0
        %3299 = vmatprep.subr.bf16.mxu0 0
        %3300 = vmatpush1.bf16.msra.mxu0 0
        %3301 = vmatprep.subr.bf16.mxu0 0
        %3302 = vmatpush1.bf16.msra.mxu0 0
        %3303 = vmatprep.subr.bf16.mxu0 0
        %3304 = vmatpush1.bf16.msra.mxu0 0
        %3305 = vmatprep.subr.bf16.mxu0 0
        %3306 = vmatpush1.bf16.msra.mxu0 0
        %3307 = vmatprep.subr.bf16.mxu0 0
        %3308 = vmatpush1.bf16.msra.mxu0 0
        %3309 = vmatprep.subr.bf16.mxu0 0
        %3310 = vmatpush1.bf16.msra.mxu0 0
        %3311 = vmatprep.subr.bf16.mxu0 0
        %3312 = vmatpush1.bf16.msra.mxu0 0
        %3313 = vmatprep.subr.bf16.mxu0 0
        %3314 = vmatpush1.bf16.msra.mxu0 0
        %3315 = vmatprep.mubr.bf16.mxu0 0
        %3316 = vmatmul.mubr.bf16.gmra.mrb[0].mxu0 %v1907
        %v3317 = vpop.f32.mrb[0].mxu0
        %v3318 = vadd.f32 0.0, %v3317
        %v3319 = vpop.f32.mrb[0].mxu0
        %v3320 = vpop.f32.mrb[0].mxu0
        %v3321 = vadd.f32 0.0, %v3320
        %v3322 = vpop.f32.mrb[0].mxu0
        %3323 = vdwg.mxu0
        %v3332 = vunpack.c.l.b16 %v3243
        %v3333 = vunpack.c.l.b16 %v3244
        %v3334 = vunpack.c.l.b16 %v3245
        %v3335 = vunpack.c.l.b16 %v3246
        %v3336 = vunpack.c.l.b16 %v3247
        %v3337 = vunpack.c.l.b16 %v3248
        %v3338 = vunpack.c.l.b16 %v3249
        %v3339 = vunpack.c.l.b16 %v3250
        %v3340 = vpack.c.b16 %v3333, %v3332
        %v3341 = vpack.c.b16 %v3335, %v3334
        %v3342 = vpack.c.b16 %v3337, %v3336
        %v3343 = vpack.c.b16 %v3339, %v3338
        %3348 = vmatprep.subr.bf16.mxu0 0
        %3349 = vmatpush1.bf16.msra.mxu0 %v3340
        %3350 = vmatprep.subr.bf16.mxu0 0
        %3351 = vmatpush1.bf16.msra.mxu0 %v3341
        %3352 = vmatprep.subr.bf16.mxu0 0
        %3353 = vmatpush1.bf16.msra.mxu0 %v3342
        %3354 = vmatprep.subr.bf16.mxu0 0
        %3355 = vmatpush1.bf16.msra.mxu0 %v3343
        %3356 = vmatprep.subr.bf16.mxu0 0
        %3357 = vmatpush1.bf16.msra.mxu0 0
        %3358 = vmatprep.subr.bf16.mxu0 0
        %3359 = vmatpush1.bf16.msra.mxu0 0
        %3360 = vmatprep.subr.bf16.mxu0 0
        %3361 = vmatpush1.bf16.msra.mxu0 0
        %3362 = vmatprep.subr.bf16.mxu0 0
        %3363 = vmatpush1.bf16.msra.mxu0 0
        %3364 = vmatprep.subr.bf16.mxu0 0
        %3365 = vmatpush1.bf16.msra.mxu0 0
        %3366 = vmatprep.subr.bf16.mxu0 0
        %3367 = vmatpush1.bf16.msra.mxu0 0
        %3368 = vmatprep.subr.bf16.mxu0 0
        %3369 = vmatpush1.bf16.msra.mxu0 0
        %3370 = vmatprep.subr.bf16.mxu0 0
        %3371 = vmatpush1.bf16.msra.mxu0 0
        %3372 = vmatprep.subr.bf16.mxu0 0
        %3373 = vmatpush1.bf16.msra.mxu0 0
        %3374 = vmatprep.subr.bf16.mxu0 0
        %3375 = vmatpush1.bf16.msra.mxu0 0
        %3376 = vmatprep.subr.bf16.mxu0 0
        %3377 = vmatpush1.bf16.msra.mxu0 0
        %3378 = vmatprep.subr.bf16.mxu0 0
        %3379 = vmatpush1.bf16.msra.mxu0 0
        %3380 = vmatprep.mubr.bf16.mxu0 0
        %3381 = vmatmul.mubr.bf16.gmra.mrb[0].mxu0 %v1302
        %v3382 = vpop.f32.mrb[0].mxu0
        %v3383 = vadd.f32 %v3318, %v3382
        %v3384 = vpop.f32.mrb[0].mxu0
        %v3385 = vpop.f32.mrb[0].mxu0
        %v3386 = vadd.f32 %v3321, %v3385
        %v3387 = vpop.f32.mrb[0].mxu0
        %3388 = vdwg.mxu0
        %v3389 = vld [vmem:[%s15] sm:$0xf]
        %v3390 = vld [vmem:[%s15 + $0x4] sm:$0xf]
        %v3391 = vld [vmem:[%s15 + $0x8] sm:$0xf]
        %v3392 = vld [vmem:[%s15 + $0xc] sm:$0xf]
        %v3393 = vld [vmem:[%s15 + $0x10] sm:$0xf]
        %v3394 = vld [vmem:[%s15 + $0x14] sm:$0xf]
        %v3395 = vld [vmem:[%s15 + $0x18] sm:$0xf]
        %v3396 = vld [vmem:[%s15 + $0x1c] sm:$0xf]
        %v3397 = vld [vmem:[%s15 + $0x20] sm:$0xf]
        %v3398 = vld [vmem:[%s15 + $0x24] sm:$0xf]
        %v3399 = vld [vmem:[%s15 + $0x28] sm:$0xf]
        %v3400 = vld [vmem:[%s15 + $0x2c] sm:$0xf]
        %v3401 = vld [vmem:[%s15 + $0x30] sm:$0xf]
        %v3402 = vld [vmem:[%s15 + $0x34] sm:$0xf]
        %v3403 = vld [vmem:[%s15 + $0x38] sm:$0xf]
        %v3404 = vld [vmem:[%s15 + $0x3c] sm:$0xf]
        %v3421 = vunpack.c.l.b16 %v3389
        %v3422 = vunpack.c.l.b16 %v3390
        %v3423 = vunpack.c.l.b16 %v3391
        %v3424 = vunpack.c.l.b16 %v3392
        %v3425 = vunpack.c.l.b16 %v3393
        %v3426 = vunpack.c.l.b16 %v3394
        %v3427 = vunpack.c.l.b16 %v3395
        %v3428 = vunpack.c.l.b16 %v3396
        %v3429 = vunpack.c.l.b16 %v3397
        %v3430 = vunpack.c.l.b16 %v3398
        %v3431 = vunpack.c.l.b16 %v3399
        %v3432 = vunpack.c.l.b16 %v3400
        %v3433 = vunpack.c.l.b16 %v3401
        %v3434 = vunpack.c.l.b16 %v3402
        %v3435 = vunpack.c.l.b16 %v3403
        %v3436 = vunpack.c.l.b16 %v3404
        %v3437 = vpack.c.b16 %v3422, %v3421
        %v3438 = vpack.c.b16 %v3424, %v3423
        %v3439 = vpack.c.b16 %v3426, %v3425
        %v3440 = vpack.c.b16 %v3428, %v3427
        %v3441 = vpack.c.b16 %v3430, %v3429
        %v3442 = vpack.c.b16 %v3432, %v3431
        %v3443 = vpack.c.b16 %v3434, %v3433
        %v3444 = vpack.c.b16 %v3436, %v3435
        %3453 = vmatprep.subr.bf16.mxu0 0
        %3454 = vmatpush1.bf16.msra.mxu0 %v3437
        %3455 = vmatprep.subr.bf16.mxu0 0
        %3456 = vmatpush1.bf16.msra.mxu0 %v3438
        %3457 = vmatprep.subr.bf16.mxu0 0
        %3458 = vmatpush1.bf16.msra.mxu0 %v3439
        %3459 = vmatprep.subr.bf16.mxu0 0
        %3460 = vmatpush1.bf16.msra.mxu0 %v3440
        %3461 = vmatprep.subr.bf16.mxu0 0
        %3462 = vmatpush1.bf16.msra.mxu0 %v3441
        %3463 = vmatprep.subr.bf16.mxu0 0
        %3464 = vmatpush1.bf16.msra.mxu0 %v3442
        %3465 = vmatprep.subr.bf16.mxu0 0
        %3466 = vmatpush1.bf16.msra.mxu0 %v3443
        %3467 = vmatprep.subr.bf16.mxu0 0
        %3468 = vmatpush1.bf16.msra.mxu0 %v3444
        %3469 = vmatprep.subr.bf16.mxu0 0
        %3470 = vmatpush1.bf16.msra.mxu0 0
        %3471 = vmatprep.subr.bf16.mxu0 0
        %3472 = vmatpush1.bf16.msra.mxu0 0
        %3473 = vmatprep.subr.bf16.mxu0 0
        %3474 = vmatpush1.bf16.msra.mxu0 0
        %3475 = vmatprep.subr.bf16.mxu0 0
        %3476 = vmatpush1.bf16.msra.mxu0 0
        %3477 = vmatprep.subr.bf16.mxu0 0
        %3478 = vmatpush1.bf16.msra.mxu0 0
        %3479 = vmatprep.subr.bf16.mxu0 0
        %3480 = vmatpush1.bf16.msra.mxu0 0
        %3481 = vmatprep.subr.bf16.mxu0 0
        %3482 = vmatpush1.bf16.msra.mxu0 0
        %3483 = vmatprep.subr.bf16.mxu0 0
        %3484 = vmatpush1.bf16.msra.mxu0 0
        %3485 = vmatprep.mubr.bf16.mxu0 0
        %3486 = vmatmul.mubr.bf16.gmra.mrb[0].mxu0 %v2483
        %v3487 = vpop.f32.mrb[0].mxu0
        %v3488 = vadd.f32 0.0, %v3487
        %v3489 = vpop.f32.mrb[0].mxu0
        %v3490 = vpop.f32.mrb[0].mxu0
        %v3491 = vadd.f32 0.0, %v3490
        %v3492 = vpop.f32.mrb[0].mxu0
        %3493 = vdwg.mxu0
        %v3494 = vadd.f32 %v3383, %v3488
        %v3495 = vadd.f32 %v3386, %v3491
        %v3496 = vld [vmem:[%s16] sm:$0xf]
        %v3497 = vld [vmem:[%s16 + $0x4] sm:$0xf]
        %v3498 = vld [vmem:[%s16 + $0x8] sm:$0xf]
        %v3499 = vld [vmem:[%s16 + $0xc] sm:$0xf]
        %v3500 = vld [vmem:[%s16 + $0x10] sm:$0xf]
        %v3501 = vld [vmem:[%s16 + $0x14] sm:$0xf]
        %v3502 = vld [vmem:[%s16 + $0x18] sm:$0xf]
        %v3503 = vld [vmem:[%s16 + $0x1c] sm:$0xf]
        %v3504 = vld [vmem:[%s16 + $0x20] sm:$0xf]
        %v3505 = vld [vmem:[%s16 + $0x24] sm:$0xf]
        %v3506 = vld [vmem:[%s16 + $0x28] sm:$0xf]
        %v3507 = vld [vmem:[%s16 + $0x2c] sm:$0xf]
        %v3508 = vld [vmem:[%s16 + $0x30] sm:$0xf]
        %v3509 = vld [vmem:[%s16 + $0x34] sm:$0xf]
        %v3510 = vld [vmem:[%s16 + $0x38] sm:$0xf]
        %v3511 = vld [vmem:[%s16 + $0x3c] sm:$0xf]
        %v3512 = vld [vmem:[%s16 + $0x40] sm:$0xf]
        %v3513 = vld [vmem:[%s16 + $0x44] sm:$0xf]
        %v3514 = vld [vmem:[%s16 + $0x48] sm:$0xf]
        %v3515 = vld [vmem:[%s16 + $0x4c] sm:$0xf]
        %v3516 = vld [vmem:[%s16 + $0x50] sm:$0xf]
        %v3517 = vld [vmem:[%s16 + $0x54] sm:$0xf]
        %v3518 = vld [vmem:[%s16 + $0x58] sm:$0xf]
        %v3519 = vld [vmem:[%s16 + $0x5c] sm:$0xf]
        %v3520 = vld [vmem:[%s16 + $0x60] sm:$0xf]
        %v3521 = vld [vmem:[%s16 + $0x64] sm:$0xf]
        %v3522 = vld [vmem:[%s16 + $0x68] sm:$0xf]
        %v3523 = vld [vmem:[%s16 + $0x6c] sm:$0xf]
        %v3524 = vld [vmem:[%s16 + $0x70] sm:$0xf]
        %v3525 = vld [vmem:[%s16 + $0x74] sm:$0xf]
        %v3526 = vld [vmem:[%s16 + $0x78] sm:$0xf]
        %v3527 = vld [vmem:[%s16 + $0x7c] sm:$0xf]
        %v3560 = vunpack.c.l.b16 %v3496
        %v3561 = vunpack.c.l.b16 %v3497
        %v3562 = vunpack.c.l.b16 %v3498
        %v3563 = vunpack.c.l.b16 %v3499
        %v3564 = vunpack.c.l.b16 %v3500
        %v3565 = vunpack.c.l.b16 %v3501
        %v3566 = vunpack.c.l.b16 %v3502
        %v3567 = vunpack.c.l.b16 %v3503
        %v3568 = vunpack.c.l.b16 %v3504
        %v3569 = vunpack.c.l.b16 %v3505
        %v3570 = vunpack.c.l.b16 %v3506
        %v3571 = vunpack.c.l.b16 %v3507
        %v3572 = vunpack.c.l.b16 %v3508
        %v3573 = vunpack.c.l.b16 %v3509
        %v3574 = vunpack.c.l.b16 %v3510
        %v3575 = vunpack.c.l.b16 %v3511
        %v3576 = vunpack.c.l.b16 %v3512
        %v3577 = vunpack.c.l.b16 %v3513
        %v3578 = vunpack.c.l.b16 %v3514
        %v3579 = vunpack.c.l.b16 %v3515
        %v3580 = vunpack.c.l.b16 %v3516
        %v3581 = vunpack.c.l.b16 %v3517
        %v3582 = vunpack.c.l.b16 %v3518
        %v3583 = vunpack.c.l.b16 %v3519
        %v3584 = vunpack.c.l.b16 %v3520
        %v3585 = vunpack.c.l.b16 %v3521
        %v3586 = vunpack.c.l.b16 %v3522
        %v3587 = vunpack.c.l.b16 %v3523
        %v3588 = vunpack.c.l.b16 %v3524
        %v3589 = vunpack.c.l.b16 %v3525
        %v3590 = vunpack.c.l.b16 %v3526
        %v3591 = vunpack.c.l.b16 %v3527
        %v3592 = vpack.c.b16 %v3561, %v3560
        %v3593 = vpack.c.b16 %v3563, %v3562
        %v3594 = vpack.c.b16 %v3565, %v3564
        %v3595 = vpack.c.b16 %v3567, %v3566
        %v3596 = vpack.c.b16 %v3569, %v3568
        %v3597 = vpack.c.b16 %v3571, %v3570
        %v3598 = vpack.c.b16 %v3573, %v3572
        %v3599 = vpack.c.b16 %v3575, %v3574
        %v3600 = vpack.c.b16 %v3577, %v3576
        %v3601 = vpack.c.b16 %v3579, %v3578
        %v3602 = vpack.c.b16 %v3581, %v3580
        %v3603 = vpack.c.b16 %v3583, %v3582
        %v3604 = vpack.c.b16 %v3585, %v3584
        %v3605 = vpack.c.b16 %v3587, %v3586
        %v3606 = vpack.c.b16 %v3589, %v3588
        %v3607 = vpack.c.b16 %v3591, %v3590
        %3624 = vmatprep.subr.bf16.mxu0 0
        %3625 = vmatpush1.bf16.msra.mxu0 %v3592
        %3626 = vmatprep.subr.bf16.mxu0 0
        %3627 = vmatpush1.bf16.msra.mxu0 %v3593
        %3628 = vmatprep.subr.bf16.mxu0 0
        %3629 = vmatpush1.bf16.msra.mxu0 %v3594
        %3630 = vmatprep.subr.bf16.mxu0 0
        %3631 = vmatpush1.bf16.msra.mxu0 %v3595
        %3632 = vmatprep.subr.bf16.mxu0 0
        %3633 = vmatpush1.bf16.msra.mxu0 %v3596
        %3634 = vmatprep.subr.bf16.mxu0 0
        %3635 = vmatpush1.bf16.msra.mxu0 %v3597
        %3636 = vmatprep.subr.bf16.mxu0 0
        %3637 = vmatpush1.bf16.msra.mxu0 %v3598
        %3638 = vmatprep.subr.bf16.mxu0 0
        %3639 = vmatpush1.bf16.msra.mxu0 %v3599
        %3640 = vmatprep.subr.bf16.mxu0 0
        %3641 = vmatpush1.bf16.msra.mxu0 %v3600
        %3642 = vmatprep.subr.bf16.mxu0 0
        %3643 = vmatpush1.bf16.msra.mxu0 %v3601
        %3644 = vmatprep.subr.bf16.mxu0 0
        %3645 = vmatpush1.bf16.msra.mxu0 %v3602
        %3646 = vmatprep.subr.bf16.mxu0 0
        %3647 = vmatpush1.bf16.msra.mxu0 %v3603
        %3648 = vmatprep.subr.bf16.mxu0 0
        %3649 = vmatpush1.bf16.msra.mxu0 %v3604
        %3650 = vmatprep.subr.bf16.mxu0 0
        %3651 = vmatpush1.bf16.msra.mxu0 %v3605
        %3652 = vmatprep.subr.bf16.mxu0 0
        %3653 = vmatpush1.bf16.msra.mxu0 %v3606
        %3654 = vmatprep.subr.bf16.mxu0 0
        %3655 = vmatpush1.bf16.msra.mxu0 %v3607
        %3656 = vmatprep.mubr.bf16.mxu0 %v3242
        %3657 = vmatmul.mubr.bf16.gmra.mrb[0].mxu0 %v3241
        %v3658 = vpop.f32.mrb[0].mxu0
        %v3659 = vadd.f32 0.0, %v3658
        %v3660 = vpop.f32.mrb[0].mxu0
        %v3661 = vpop.f32.mrb[0].mxu0
        %v3662 = vadd.f32 0.0, %v3661
        %v3663 = vpop.f32.mrb[0].mxu0
        %3664 = vdwg.mxu0
        %v3665 = vadd.f32 %v3494, %v3659
        %v3666 = vadd.f32 %v3495, %v3662
        %v3667 = vld [vmem:[%s17] sm:$0x1]
        %v3669 = vlaneseq
        %v3670 = vshrl.u32 %v3669, 7
        %v3671 = vsub.s32 0, %v3670
        %v3672 = vrot.slane %v3667, %v3671
        %v3674 = vadd.f32 %v3665, %v3672
        %v3675 = vadd.f32 %v3666, %v3672
        %v3676 = vmul.f32 %v3674, 0.2
        %v3677 = vmul.f32 %v3675, 0.2
        %v3678 = vmax.f32 %v3674, %v3676
        %v3679 = vmax.f32 %v3675, %v3677
        %v3680 = vsel %vm1294, %v3678, -inf
        %v3681 = vsel %vm1294, %v3679, -inf
        %v3682 = vmax.f32 %v3680, %v3681
        %v3683 = vrot.slane %v3682, 4
        %v3684 = vmax.f32 %v3682, %v3683
        %v3685 = vrot.slane %v3684, 2
        %v3686 = vmax.f32 %v3684, %v3685
        %v3687 = vrot.slane %v3686, 1
        %v3688 = vmax.f32 %v3686, %v3687
        %v3689 = vsel %vm1294, %v3678, 0.0
        %v3690 = vsel %vm1294, %v3679, 0.0
        %v3691 = vadd.f32 %v3689, %v3690
        %v3692 = vrot.slane %v3691, 4
        %v3693 = vadd.f32 %v3691, %v3692
        %v3694 = vrot.slane %v3693, 2
        %v3695 = vadd.f32 %v3693, %v3694
        %v3696 = vrot.slane %v3695, 1
        %v3697 = vadd.f32 %v3695, %v3696
        %v3698 = vrcp.pop 16.0
        %v3699 = vmul.f32 %v3697, %v3698
        %3701 = vrot.lane.b32.xlu0 %v3699, 64
        %v3702 = vpop.permute.xlu0 %3701
        %v3704 = vsel %vm1294, %v3688, %v3702
        %3705 = vst [vmem:[%s705] sm:$0x1] %v3704
        %s3706 = sand.u32 %s429, 1
        %s3707 = scalar_lea.sflag [#allocation4], %s3706
        %s3708 = sand.u32 %s429, 1
        %s3709 = scalar_lea.vmem [#allocation19], %s3708
        // Predicated region
        $region133: #{tpu_custom_call.1} parent=91 // pred_check
          %p3710 = pneg %p439
        $region134: #{tpu_custom_call.1} parent=91 // pred_check_branch
          %3712 = sbr.rel (%p3710) target = $region136
        $region135: #{tpu_custom_call.1} parent=91 // pred_region
          %s3714 = ssub.s32 16, 16
          %3715 = vsyncadd %s3707, %s3714
          %s3716 = smul.addr %s38, 16
          %s3717 = scalar_lea.hbm %s18, %s3716
          %s3719 = sshll.u32 %s3709, 4
          %s3720 = int_to_ptr.vmem [resolvable:$true] %s3719
          %3722 = dma.vmem_to_hbm [thread:$0]  %s3720, 16, %s3717, %s3707
        $region136: #{tpu_custom_call.1} parent=91 // pred_fallthru
          _
      $region92: #{tpu_custom_call.1} parent=5 // pred_fallthru
        _
      %p3723 = scmp.le.s32.totalorder 2, %s33
      // Predicated region
      $region137: #{tpu_custom_call.1} parent=5 // pred_check
        %p3724 = pneg %p3723
      $region138: #{tpu_custom_call.1} parent=5 // pred_check_branch
        %3726 = sbr.rel (%p3724) target = $region140
      $region139: #{tpu_custom_call.1} parent=5 // pred_region
        %s3727 = ssub.s32 %s33, 2
        // Predicated region
        $region141: #{tpu_custom_call.1} parent=139 // pred_check
          %p3728 = pneg %p445
        $region142: #{tpu_custom_call.1} parent=139 // pred_check_branch
          %3730 = sbr.rel (%p3728) target = $region144
        $region143: #{tpu_custom_call.1} parent=139 // pred_region
          %s3731 = sand.u32 %s430, 1
          %s3732 = scalar_lea.sflag [#allocation4], %s3731
          %s3733 = sand.u32 %s430, 1
          %s3734 = scalar_lea.vmem [#allocation19], %s3733
          %3735 = dma.done %s3732, 16
        $region144: #{tpu_custom_call.1} parent=139 // pred_fallthru
          _
      $region140: #{tpu_custom_call.1} parent=5 // pred_fallthru
        _
    $region6: #{tpu_custom_call.1} parent=1 // loop_footer
      %s37 = sadd.s32 1, %s33
    $region7: #{tpu_custom_call.1} parent=1 // loop_footer_branch
      %32 = sbr.rel target = $region3
    $region8: #{tpu_custom_call.1} parent=1 // loop_exit
      _
    %3736 = vsyncpa [#allocation3], 1
    %s3737 = scalar_lea.sflag [#allocation3], 1
    %3738 = vsyncpa %s3737, 1
    %3739 = vsyncpa [#allocation6], 1
    %3740 = vsyncpa [#allocation9], 1
    %3741 = vsyncpa [#allocation12], 1
    %3742 = vsyncpa [#allocation15], 1
    %3743 = vsyncpa [#allocation18], 1
    %3744 = vsyncpa [#allocation4], 1
    %s3745 = scalar_lea.sflag [#allocation4], 1
    %3746 = vsyncpa %s3745, 1

</llo_original>
